<compile_context>
chip_gen: v6e
topology: v6e:2x2x1
jax: 0.10.0
libtpu: 0.0.40
codegen_flags: <defaults>
</compile_context>

<pallas_src>
import functools

import jax
import jax.numpy as jnp
from jax.experimental import pallas as pl
from jax.experimental.pallas import tpu as pltpu

EPS = 1e-5     # nn.BatchNorm2d default eps
LANE = 128


def _round_up(v, m):
    return ((v + m - 1) // m) * m


def spectral_encoder_kernel(
    w3_ref, b3_ref, w5_ref, b5_ref,     # SMEM: (3,), (1,), (5,), (1,)
    x_ref,                              # VMEM (4, TM, CPI) window-major tile
    gb12_ref,                           # VMEM (4, CPI)  [g1, b1, g2, b2]
    gbo_ref,                            # VMEM (2, CPO)  [gamma_out, beta_out]
    wcat_ref,                           # VMEM (2*CPI, CPO) bf16 stacked 1x1 weights
    y_ref,                              # out  (TM, CPO) f32  un-normalized y tile
    oss_ref,                            # out  (2, CPO)  f32  output-BN [scale, shift]
    acc1_ref, acc2_ref,                 # scratch (2, CPI) sum / sumsq per branch
    sshift_ref,                         # scratch (4, CPI) [sc1, sh1, sc2, sh2]
    yacc_ref,                           # scratch (2, CPO) y sum / sumsq
    *, m_total, tm):
    phase = pl.program_id(0)
    i = pl.program_id(1)
    n_tiles = pl.num_programs(1)
    cpi = x_ref.shape[-1]

    # conv taps / biases (SMEM scalars)
    w3_0 = w3_ref[0]; w3_1 = w3_ref[1]; w3_2 = w3_ref[2]; b3 = b3_ref[0]
    w5_0 = w5_ref[0]; w5_1 = w5_ref[1]; w5_2 = w5_ref[2]
    w5_3 = w5_ref[3]; w5_4 = w5_ref[4]; b5 = b5_ref[0]

    # rows beyond the true M (tile padding) are masked out of all statistics
    row_id = jax.lax.broadcasted_iota(jnp.int32, (tm, 1), 0)
    mask = (row_id < (m_total - i * tm)).astype(jnp.float32)          # (tm, 1)

    def taps(slab):
        # Spectral 3-/5-tap convs along the channel (lane) axis.  Padded lanes
        # are zero and C <= CPI-2, so circular rolls reproduce the zero halo
        # exactly (wrapped-in garbage only ever lands in padded lanes, which
        # are killed by the zero rows of wcat downstream).
        sp1 = pltpu.roll(slab, shift=1, axis=1)          # channel c-1
        sm1 = pltpu.roll(slab, shift=cpi - 1, axis=1)    # channel c+1
        sp2 = pltpu.roll(slab, shift=2, axis=1)          # channel c-2
        sm2 = pltpu.roll(slab, shift=cpi - 2, axis=1)    # channel c+2
        o1 = jnp.maximum(w3_0 * sp1 + w3_1 * slab + w3_2 * sm1 + b3, 0.0)
        o2 = jnp.maximum(w5_0 * sp2 + w5_1 * sp1 + w5_2 * slab
                         + w5_3 * sm1 + w5_4 * sm2 + b5, 0.0)
        return o1, o2

    # ----------------- phase 0: bn1 / bn2 batch statistics ------------------
    @pl.when(phase == 0)
    def _stats():
        @pl.when(i == 0)
        def _():
            acc1_ref[...] = jnp.zeros_like(acc1_ref)
            acc2_ref[...] = jnp.zeros_like(acc2_ref)

        def body(w, _):
            o1, o2 = taps(x_ref[w])
            o1m = o1 * mask
            o2m = o2 * mask
            acc1_ref[0:1, :] += jnp.sum(o1m, axis=0, keepdims=True)
            acc1_ref[1:2, :] += jnp.sum(o1 * o1m, axis=0, keepdims=True)
            acc2_ref[0:1, :] += jnp.sum(o2m, axis=0, keepdims=True)
            acc2_ref[1:2, :] += jnp.sum(o2 * o2m, axis=0, keepdims=True)
            return 0

        jax.lax.fori_loop(0, 4, body, 0, unroll=True)

        @pl.when(i == n_tiles - 1)
        def _fold():
            inv = 1.0 / float(4 * m_total)
            for acc, row in ((acc1_ref, 0), (acc2_ref, 2)):
                mean = acc[0:1, :] * inv
                var = jnp.maximum(acc[1:2, :] * inv - mean * mean, 0.0)
                sc = gb12_ref[row:row + 1, :] * jax.lax.rsqrt(var + EPS)
                sshift_ref[row:row + 1, :] = sc
                sshift_ref[row + 1:row + 2, :] = (
                    gb12_ref[row + 1:row + 2, :] - mean * sc)

    # -------- phase 1: BN apply + 2x2 max-pool + 1x1 conv + y stats ---------
    @pl.when(phase == 1)
    def _apply():
        @pl.when(i == 0)
        def _():
            yacc_ref[...] = jnp.zeros_like(yacc_ref)

        o1, o2 = taps(x_ref[0])

        def body(w, carry):
            mx1, mn1, mx2, mn2 = carry
            a1, a2 = taps(x_ref[w])
            return (jnp.maximum(mx1, a1), jnp.minimum(mn1, a1),
                    jnp.maximum(mx2, a2), jnp.minimum(mn2, a2))

        mx1, mn1, mx2, mn2 = jax.lax.fori_loop(
            1, 4, body, (o1, o1, o2, o2), unroll=True)

        # pool(BN(x)) for the per-channel affine map:
        #   max(s*a + t) = s*max(a)+t  if s >= 0  else  s*min(a)+t
        sc1 = sshift_ref[0:1, :]; sh1 = sshift_ref[1:2, :]
        sc2 = sshift_ref[2:3, :]; sh2 = sshift_ref[3:4, :]
        p1 = jnp.where(sc1 >= 0.0, mx1, mn1) * sc1 + sh1          # (tm, CPI)
        p2 = jnp.where(sc2 >= 0.0, mx2, mn2) * sc2 + sh2

        # fused K = 2*CPI bf16 MXU matmul (branch halves concatenated on lanes)
        pcat = jnp.concatenate([p1, p2], axis=-1).astype(jnp.bfloat16)
        y = jnp.dot(pcat, wcat_ref[...], preferred_element_type=jnp.float32)
        y_ref[...] = y

        ym = y * mask
        yacc_ref[0:1, :] += jnp.sum(ym, axis=0, keepdims=True)
        yacc_ref[1:2, :] += jnp.sum(y * ym, axis=0, keepdims=True)

        @pl.when(i == n_tiles - 1)
        def _fold():
            inv = 1.0 / float(m_total)
            mean = yacc_ref[0:1, :] * inv
            var = jnp.maximum(yacc_ref[1:2, :] * inv - mean * mean, 0.0)
            sc = gbo_ref[0:1, :] * jax.lax.rsqrt(var + EPS)
            oss_ref[0:1, :] = sc
            oss_ref[1:2, :] = gbo_ref[1:2, :] - mean * sc


def out_bn_relu_kernel(oss_ref, y_ref, o_ref):
    o_ref[...] = jnp.maximum(
        y_ref[...] * oss_ref[0:1, :] + oss_ref[1:2, :], 0.0)


def init_params(key, ch_in, ch_out):
    # Deterministic synthetic parameters (shapes from the module __init__).
    ks = jax.random.split(key, 11)
    return {
        "w3": 0.5 * jax.random.normal(ks[0], (3,), jnp.float32),
        "b3": 0.1 * jax.random.normal(ks[1], (1,), jnp.float32),
        "w5": 0.5 * jax.random.normal(ks[2], (5,), jnp.float32),
        "b5": 0.1 * jax.random.normal(ks[3], (1,), jnp.float32),
        "bn1_gamma": 1.0 + 0.1 * jax.random.normal(ks[4], (ch_in,), jnp.float32),
        "bn1_beta": 0.1 * jax.random.normal(ks[5], (ch_in,), jnp.float32),
        "bn2_gamma": 1.0 + 0.1 * jax.random.normal(ks[6], (ch_in,), jnp.float32),
        "bn2_beta": 0.1 * jax.random.normal(ks[7], (ch_in,), jnp.float32),
        # nn.Conv2d(2*ch_in, ch_out, 1, bias=False): weight (C_out, 2*C_in)
        "wp": (1.0 / jnp.sqrt(2.0 * ch_in))
              * jax.random.normal(ks[8], (ch_out, 2 * ch_in), jnp.float32),
        "bno_gamma": 1.0 + 0.1 * jax.random.normal(ks[9], (ch_out,), jnp.float32),
        "bno_beta": 0.1 * jax.random.normal(ks[10], (ch_out,), jnp.float32),
    }


def spectral_encoder_forward(x_nchw, p, tm=512):
    n, c, h, w = x_nchw.shape
    assert h % 2 == 0 and w % 2 == 0, "MaxPool2d(2,2) layout assumes even H, W"
    hh, wh = h // 2, w // 2
    m = n * hh * wh
    c_out = p["wp"].shape[0]
    cpi = _round_up(c, LANE)
    cpo = _round_up(c_out, LANE)

    # tile size: multiple of 8 sublanes; default 512 keeps the double-buffered
    # x tiles (~2 * 4*tm*128*4B = 2 MiB) well under v7x's 32 MiB scoped VMEM.
    tm = max(8, (int(tm) // 8) * 8)
    tm = min(tm, _round_up(m, 8))
    n_tiles = -(-m // tm)
    m_pad = n_tiles * tm

    # NCHW -> window-major (4, M, C): axis 0 = 2*dh + dw of the 2x2 pool
    # window, M = n*hh*wh pooled pixels, channels on the lane axis (pad to 128).
    xf = x_nchw.astype(jnp.float32)
    xr = xf.reshape(n, c, hh, 2, wh, 2)
    xr = jnp.transpose(xr, (3, 5, 0, 2, 4, 1)).reshape(4, m, c)
    xr = jnp.pad(xr, ((0, 0), (0, m_pad - m), (0, cpi - c)))

    # stacked 1x1-conv weight (bf16): rows [0:C] = branch-1, [CPI:CPI+C] = branch-2
    wp = p["wp"].astype(jnp.float32)                          # (C_out, 2C)
    wcat = jnp.zeros((2 * cpi, cpo), jnp.float32)
    wcat = wcat.at[:c, :c_out].set(wp[:, :c].T)
    wcat = wcat.at[cpi:cpi + c, :c_out].set(wp[:, c:].T)
    wcat = wcat.astype(jnp.bfloat16)

    def pad_gb(gamma, beta, width):
        g = jnp.ones((width,), jnp.float32).at[:gamma.shape[0]].set(gamma)
        b = jnp.zeros((width,), jnp.float32).at[:beta.shape[0]].set(beta)
        return g, b

    g1, be1 = pad_gb(p["bn1_gamma"], p["bn1_beta"], cpi)
    g2, be2 = pad_gb(p["bn2_gamma"], p["bn2_beta"], cpi)
    go, bo = pad_gb(p["bno_gamma"], p["bno_beta"], cpo)
    gb12 = jnp.stack([g1, be1, g2, be2], axis=0)              # (4, CPI)
    gbo = jnp.stack([go, bo], axis=0)                         # (2, CPO)

    smem = pl.BlockSpec(memory_space=pltpu.MemorySpace.SMEM)
    cost = pl.CostEstimate(
        flops=2 * m_pad * (2 * cpi) * cpo + 200 * m_pad * cpi,
        transcendentals=4 * cpi + 2 * cpo,
        bytes_accessed=(2 * 4 * m_pad * cpi + m_pad * cpo) * 4
                       + 2 * cpi * cpo * 2)

    kernel = functools.partial(spectral_encoder_kernel, m_total=m, tm=tm)
    y_raw, oss = pl.pallas_call(
        kernel,
        out_shape=(jax.ShapeDtypeStruct((m_pad, cpo), jnp.float32),
                   jax.ShapeDtypeStruct((2, cpo), jnp.float32)),
        grid=(2, n_tiles),              # (phase, M-tile); phase 0=stats, 1=apply
        in_specs=[smem, smem, smem, smem,                      # w3 b3 w5 b5
                  pl.BlockSpec((4, tm, cpi), lambda ph, i: (0, i, 0)),   # x
                  pl.BlockSpec((4, cpi), lambda ph, i: (0, 0)),          # gb12
                  pl.BlockSpec((2, cpo), lambda ph, i: (0, 0)),          # gbo
                  pl.BlockSpec((2 * cpi, cpo), lambda ph, i: (0, 0))],   # wcat
        out_specs=(  # ph*i keeps y resident (no garbage writebacks) in phase 0
                   pl.BlockSpec((tm, cpo), lambda ph, i: (ph * i, 0)),
                   pl.BlockSpec((2, cpo), lambda ph, i: (0, 0))),
        scratch_shapes=[pltpu.VMEM((2, cpi), jnp.float32),     # acc1
                        pltpu.VMEM((2, cpi), jnp.float32),     # acc2
                        pltpu.VMEM((4, cpi), jnp.float32),     # sc/sh 1,2
                        pltpu.VMEM((2, cpo), jnp.float32)],    # y acc
        compiler_params=pltpu.CompilerParams(
            dimension_semantics=("arbitrary", "arbitrary")),
        cost_estimate=cost,
    )(p["w3"], p["b3"], p["w5"], p["b5"], xr, gb12, gbo, wcat)

    # cheap third pass: output BatchNorm (precomputed scale/shift) + ReLU
    out2d = pl.pallas_call(
        out_bn_relu_kernel,
        out_shape=jax.ShapeDtypeStruct((m_pad, cpo), jnp.float32),
        grid=(n_tiles,),
        in_specs=[pl.BlockSpec((2, cpo), lambda i: (0, 0)),
                  pl.BlockSpec((tm, cpo), lambda i: (i, 0))],
        out_specs=pl.BlockSpec((tm, cpo), lambda i: (i, 0)),
        compiler_params=pltpu.CompilerParams(dimension_semantics=("parallel",)),
    )(oss, y_raw)

    # back to PyTorch NCHW: (N, C_out, H/2, W/2)
    out = out2d[:m, :c_out].reshape(n, hh, wh, c_out)
    return jnp.transpose(out, (0, 3, 1, 2))


def reference_forward(x, p):
    """Pure-JAX (XLA) reference of the PyTorch forward, NCHW."""
    n, c, h, w = x.shape
    xp3 = jnp.pad(x, ((0, 0), (1, 1), (0, 0), (0, 0)))
    out1 = p["b3"][0] + sum(p["w3"][k] * xp3[:, k:k + c] for k in range(3))
    out1 = jnp.maximum(out1, 0.0)
    xp5 = jnp.pad(x, ((0, 0), (2, 2), (0, 0), (0, 0)))
    out2 = p["b5"][0] + sum(p["w5"][k] * xp5[:, k:k + c] for k in range(5))
    out2 = jnp.maximum(out2, 0.0)

    def bn(a, g, b):
        m_ = jnp.mean(a, axis=(0, 2, 3), keepdims=True)
        v = jnp.mean((a - m_) ** 2, axis=(0, 2, 3), keepdims=True)
        return (g.reshape(1, -1, 1, 1) * (a - m_) / jnp.sqrt(v + EPS)
                + b.reshape(1, -1, 1, 1))

    out1 = bn(out1, p["bn1_gamma"], p["bn1_beta"])
    out2 = bn(out2, p["bn2_gamma"], p["bn2_beta"])

    def pool(a):
        nn_, cc, hh_, ww = a.shape
        return jnp.max(a.reshape(nn_, cc, hh_ // 2, 2, ww // 2, 2), axis=(3, 5))

    cat = jnp.concatenate([pool(out1), pool(out2)], axis=1)   # (N, 2C, H/2, W/2)
    y = jnp.einsum("oc,nchw->nohw", p["wp"], cat)
    y = bn(y, p["bno_gamma"], p["bno_beta"])
    return jnp.maximum(y, 0.0)


if __name__ == "__main__":
    key = jax.random.PRNGKey(0)
    kx, kp = jax.random.split(key)
    N, C_IN, H, W = 2, 4, 16, 16
    C_OUT = 8

    x = jax.random.normal(kx, (N, C_IN, H, W), jnp.float32)
    params = init_params(kp, C_IN, C_OUT)

    fwd = jax.jit(spectral_encoder_forward, static_argnames=("tm",))
    # tm=48 -> 3 M-tiles with a partial last tile: exercises the phased grid,
    # the persistent-scratch BN statistics and the row masking.
    out = jax.block_until_ready(fwd(x, params, tm=48))
    assert out.shape == (N, C_OUT, H // 2, W // 2)

    ref = jax.block_until_ready(reference_forward(x, params))
    assert jnp.allclose(out, ref, atol=3e-2, rtol=3e-2), float(
        jnp.max(jnp.abs(out - ref)))

    print("KERNEL_OK")
</pallas_src>

<mosaic_0001>
module attributes {stable_mosaic.version = 11 : i64} {
  func.func @out_bn_relu_kernel(%arg0: i32, %arg1: memref<2x128xf32, #tpu.memory_space<vmem>>, %arg2: memref<48x128xf32, #tpu.memory_space<vmem>>, %arg3: memref<48x128xf32, #tpu.memory_space<vmem>>) attributes {dimension_semantics = [#tpu.dimension_semantics<parallel>], iteration_bounds = array<i64: 3>, scalar_prefetch = 0 : i64, scratch_operands = 0 : i64, tpu.core_type = #tpu.core_type<tc>, window_params = [{pipeline_mode = #tpu.pipeline_mode<synchronous>, transform_indices = @transform_0, window_bounds = array<i64: 2, 128>}, {transform_indices = @transform_1, window_bounds = array<i64: 48, 128>}, {transform_indices = @transform_2, window_bounds = array<i64: 48, 128>}]} {
    %c0 = arith.constant 0 : index
    %c0_0 = arith.constant 0 : index
    %0 = vector.load %arg2[%c0, %c0_0] : memref<48x128xf32, #tpu.memory_space<vmem>>, vector<48x128xf32>
    %c0_1 = arith.constant 0 : index
    %c0_2 = arith.constant 0 : index
    %1 = vector.load %arg1[%c0_1, %c0_2] : memref<2x128xf32, #tpu.memory_space<vmem>>, vector<1x128xf32>
    %2 = vector.broadcast %1 : vector<1x128xf32> to vector<48x128xf32>
    %3 = arith.mulf %0, %2 : vector<48x128xf32>
    %c1 = arith.constant 1 : index
    %c0_3 = arith.constant 0 : index
    %4 = vector.load %arg1[%c1, %c0_3] : memref<2x128xf32, #tpu.memory_space<vmem>>, vector<1x128xf32>
    %5 = vector.broadcast %4 : vector<1x128xf32> to vector<48x128xf32>
    %6 = arith.addf %3, %5 : vector<48x128xf32>
    %cst = arith.constant 0.000000e+00 : f32
    %7 = vector.broadcast %cst : f32 to vector<48x128xf32>
    %8 = arith.maximumf %6, %7 : vector<48x128xf32>
    %c0_4 = arith.constant 0 : index
    %c0_5 = arith.constant 0 : index
    %9 = vector.load %arg3[%c0_4, %c0_5] : memref<48x128xf32, #tpu.memory_space<vmem>>, vector<48x128xf32>
    tpu.vector_store %arg3[%c0_4, %c0_5], %8 {strides = array<i32>} : memref<48x128xf32, #tpu.memory_space<vmem>>, vector<48x128xf32>,
    return
  }
  func.func @transform_0(%arg0: i32) -> (i32, i32) {
    %c0_i32 = arith.constant 0 : i32
    %c0_i32_0 = arith.constant 0 : i32
    %c0_i32_1 = arith.constant 0 : i32
    return %c0_i32, %c0_i32_0 : i32, i32
  }
  func.func @transform_1(%arg0: i32) -> (i32, i32) {
    %c0_i32 = arith.constant 0 : i32
    %c0_i32_0 = arith.constant 0 : i32
    return %arg0, %c0_i32 : i32, i32
  }
  func.func @transform_2(%arg0: i32) -> (i32, i32) {
    %c0_i32 = arith.constant 0 : i32
    %c0_i32_0 = arith.constant 0 : i32
    return %arg0, %c0_i32 : i32, i32
  }
}

module attributes {stable_mosaic.version = 11 : i64} {
  func.func @spectral_encoder_kernel(%arg0: i32, %arg1: i32, %arg2: memref<3xf32, #tpu.memory_space<smem>>, %arg3: memref<1xf32, #tpu.memory_space<smem>>, %arg4: memref<5xf32, #tpu.memory_space<smem>>, %arg5: memref<1xf32, #tpu.memory_space<smem>>, %arg6: memref<4x48x128xf32, #tpu.memory_space<vmem>>, %arg7: memref<4x128xf32, #tpu.memory_space<vmem>>, %arg8: memref<2x128xf32, #tpu.memory_space<vmem>>, %arg9: memref<256x128xbf16, #tpu.memory_space<vmem>>, %arg10: memref<48x128xf32, #tpu.memory_space<vmem>>, %arg11: memref<2x128xf32, #tpu.memory_space<vmem>>, %arg12: memref<2x128xf32, #tpu.memory_space<vmem>>, %arg13: memref<2x128xf32, #tpu.memory_space<vmem>>, %arg14: memref<4x128xf32, #tpu.memory_space<vmem>>, %arg15: memref<2x128xf32, #tpu.memory_space<vmem>>) attributes {dimension_semantics = [#tpu.dimension_semantics<arbitrary>, #tpu.dimension_semantics<arbitrary>], iteration_bounds = array<i64: 2, 3>, scalar_prefetch = 0 : i64, scratch_operands = 4 : i64, tpu.core_type = #tpu.core_type<tc>, window_params = [{transform_indices = @transform_0, window_bounds = array<i64: 3>}, {transform_indices = @transform_1, window_bounds = array<i64: 1>}, {transform_indices = @transform_2, window_bounds = array<i64: 5>}, {transform_indices = @transform_3, window_bounds = array<i64: 1>}, {transform_indices = @transform_4, window_bounds = array<i64: 4, 48, 128>}, {pipeline_mode = #tpu.pipeline_mode<synchronous>, transform_indices = @transform_5, window_bounds = array<i64: 4, 128>}, {pipeline_mode = #tpu.pipeline_mode<synchronous>, transform_indices = @transform_6, window_bounds = array<i64: 2, 128>}, {pipeline_mode = #tpu.pipeline_mode<synchronous>, transform_indices = @transform_7, window_bounds = array<i64: 256, 128>}, {transform_indices = @transform_8, window_bounds = array<i64: 48, 128>}, {pipeline_mode = #tpu.pipeline_mode<synchronous>, transform_indices = @transform_9, window_bounds = array<i64: 2, 128>}]} {
    %c0 = arith.constant 0 : index
    %0 = memref.load %arg2[%c0] : memref<3xf32, #tpu.memory_space<smem>>
    %c1 = arith.constant 1 : index
    %1 = memref.load %arg2[%c1] : memref<3xf32, #tpu.memory_space<smem>>
    %c2 = arith.constant 2 : index
    %2 = memref.load %arg2[%c2] : memref<3xf32, #tpu.memory_space<smem>>
    %c0_0 = arith.constant 0 : index
    %3 = memref.load %arg3[%c0_0] : memref<1xf32, #tpu.memory_space<smem>>
    %c0_1 = arith.constant 0 : index
    %4 = memref.load %arg4[%c0_1] : memref<5xf32, #tpu.memory_space<smem>>
    %c1_2 = arith.constant 1 : index
    %5 = memref.load %arg4[%c1_2] : memref<5xf32, #tpu.memory_space<smem>>
    %c2_3 = arith.constant 2 : index
    %6 = memref.load %arg4[%c2_3] : memref<5xf32, #tpu.memory_space<smem>>
    %c3 = arith.constant 3 : index
    %7 = memref.load %arg4[%c3] : memref<5xf32, #tpu.memory_space<smem>>
    %c4 = arith.constant 4 : index
    %8 = memref.load %arg4[%c4] : memref<5xf32, #tpu.memory_space<smem>>
    %c0_4 = arith.constant 0 : index
    %9 = memref.load %arg5[%c0_4] : memref<1xf32, #tpu.memory_space<smem>>
    %10 = tpu.iota {dimensions = array<i32: 0>} : vector<48x1xi32>
    %c48_i32 = arith.constant 48 : i32
    %11 = arith.muli %arg1, %c48_i32 : i32
    %c128_i32 = arith.constant 128 : i32
    %12 = arith.subi %c128_i32, %11 : i32
    %13 = vector.broadcast %12 : i32 to vector<48x1xi32>
    %14 = arith.cmpi slt, %10, %13 : vector<48x1xi32>
    %15 = arith.extui %14 : vector<48x1xi1> to vector<48x1xi32>
    %16 = arith.sitofp %15 : vector<48x1xi32> to vector<48x1xf32>
    %c0_i32 = arith.constant 0 : i32
    %17 = arith.cmpi eq, %arg0, %c0_i32 : i32
    %18 = arith.extui %17 : i1 to i32
    %c0_i32_5 = arith.constant 0 : i32
    %19 = arith.cmpi ne, %18, %c0_i32_5 : i32
    scf.if %19 {
      %c0_i32_7 = arith.constant 0 : i32
      %23 = arith.cmpi eq, %arg1, %c0_i32_7 : i32
      %24 = arith.extui %23 : i1 to i32
      %c0_i32_8 = arith.constant 0 : i32
      %25 = arith.cmpi ne, %24, %c0_i32_8 : i32
      scf.if %25 {
        %cst_122 = arith.constant 0.000000e+00 : f32
        %281 = vector.broadcast %cst_122 : f32 to vector<2x128xf32>
        %c0_123 = arith.constant 0 : index
        %c0_124 = arith.constant 0 : index
        %282 = vector.load %arg12[%c0_123, %c0_124] : memref<2x128xf32, #tpu.memory_space<vmem>>, vector<2x128xf32>
        tpu.vector_store %arg12[%c0_123, %c0_124], %281 {strides = array<i32>} : memref<2x128xf32, #tpu.memory_space<vmem>>, vector<2x128xf32>,
        %cst_125 = arith.constant 0.000000e+00 : f32
        %283 = vector.broadcast %cst_125 : f32 to vector<2x128xf32>
        %c0_126 = arith.constant 0 : index
        %c0_127 = arith.constant 0 : index
        %284 = vector.load %arg13[%c0_126, %c0_127] : memref<2x128xf32, #tpu.memory_space<vmem>>, vector<2x128xf32>
        tpu.vector_store %arg13[%c0_126, %c0_127], %283 {strides = array<i32>} : memref<2x128xf32, #tpu.memory_space<vmem>>, vector<2x128xf32>,
      } else {
      }
      %c0_i32_9 = arith.constant 0 : i32
      %26 = arith.index_cast %c0_i32_9 : i32 to index
      %c0_10 = arith.constant 0 : index
      %c0_11 = arith.constant 0 : index
      %27 = vector.load %arg6[%26, %c0_10, %c0_11] : memref<4x48x128xf32, #tpu.memory_space<vmem>>, vector<1x48x128xf32>
      %28 = vector.shape_cast %27 : vector<1x48x128xf32> to vector<48x128xf32>
      %c1_i32_12 = arith.constant 1 : i32
      %29 = tpu.dynamic_rotate %28 by %c1_i32_12 dim 1 : vector<48x128xf32>, i32 -> vector<48x128xf32>
      %c127_i32 = arith.constant 127 : i32
      %30 = tpu.dynamic_rotate %28 by %c127_i32 dim 1 : vector<48x128xf32>, i32 -> vector<48x128xf32>
      %c2_i32 = arith.constant 2 : i32
      %31 = tpu.dynamic_rotate %28 by %c2_i32 dim 1 : vector<48x128xf32>, i32 -> vector<48x128xf32>
      %c126_i32 = arith.constant 126 : i32
      %32 = tpu.dynamic_rotate %28 by %c126_i32 dim 1 : vector<48x128xf32>, i32 -> vector<48x128xf32>
      %33 = vector.broadcast %0 : f32 to vector<48x128xf32>
      %34 = arith.mulf %33, %29 : vector<48x128xf32>
      %35 = vector.broadcast %1 : f32 to vector<48x128xf32>
      %36 = arith.mulf %35, %28 : vector<48x128xf32>
      %37 = arith.addf %34, %36 : vector<48x128xf32>
      %38 = vector.broadcast %2 : f32 to vector<48x128xf32>
      %39 = arith.mulf %38, %30 : vector<48x128xf32>
      %40 = arith.addf %37, %39 : vector<48x128xf32>
      %41 = vector.broadcast %3 : f32 to vector<48x128xf32>
      %42 = arith.addf %40, %41 : vector<48x128xf32>
      %cst = arith.constant 0.000000e+00 : f32
      %43 = vector.broadcast %cst : f32 to vector<48x128xf32>
      %44 = arith.maximumf %42, %43 : vector<48x128xf32>
      %45 = vector.broadcast %4 : f32 to vector<48x128xf32>
      %46 = arith.mulf %45, %31 : vector<48x128xf32>
      %47 = vector.broadcast %5 : f32 to vector<48x128xf32>
      %48 = arith.mulf %47, %29 : vector<48x128xf32>
      %49 = arith.addf %46, %48 : vector<48x128xf32>
      %50 = vector.broadcast %6 : f32 to vector<48x128xf32>
      %51 = arith.mulf %50, %28 : vector<48x128xf32>
      %52 = arith.addf %49, %51 : vector<48x128xf32>
      %53 = vector.broadcast %7 : f32 to vector<48x128xf32>
      %54 = arith.mulf %53, %30 : vector<48x128xf32>
      %55 = arith.addf %52, %54 : vector<48x128xf32>
      %56 = vector.broadcast %8 : f32 to vector<48x128xf32>
      %57 = arith.mulf %56, %32 : vector<48x128xf32>
      %58 = arith.addf %55, %57 : vector<48x128xf32>
      %59 = vector.broadcast %9 : f32 to vector<48x128xf32>
      %60 = arith.addf %58, %59 : vector<48x128xf32>
      %cst_13 = arith.constant 0.000000e+00 : f32
      %61 = vector.broadcast %cst_13 : f32 to vector<48x128xf32>
      %62 = arith.maximumf %60, %61 : vector<48x128xf32>
      %63 = vector.broadcast %16 : vector<48x1xf32> to vector<48x128xf32>
      %64 = arith.mulf %44, %63 : vector<48x128xf32>
      %65 = vector.broadcast %16 : vector<48x1xf32> to vector<48x128xf32>
      %66 = arith.mulf %62, %65 : vector<48x128xf32>
      %c0_14 = arith.constant 0 : index
      %c0_15 = arith.constant 0 : index
      %67 = vector.load %arg12[%c0_14, %c0_15] : memref<2x128xf32, #tpu.memory_space<vmem>>, vector<1x128xf32>
      %cst_16 = arith.constant dense<0.000000e+00> : vector<128xf32>
      %68 = vector.multi_reduction <add>, %64, %cst_16 [0] : vector<48x128xf32> to vector<128xf32>
      %69 = vector.shape_cast %68 : vector<128xf32> to vector<1x128xf32>
      %70 = arith.addf %67, %69 : vector<1x128xf32>
      %c0_17 = arith.constant 0 : index
      %c0_18 = arith.constant 0 : index
      %71 = vector.load %arg12[%c0_17, %c0_18] : memref<2x128xf32, #tpu.memory_space<vmem>>, vector<1x128xf32>
      tpu.vector_store %arg12[%c0_17, %c0_18], %70 {strides = array<i32>} : memref<2x128xf32, #tpu.memory_space<vmem>>, vector<1x128xf32>,
      %c1_19 = arith.constant 1 : index
      %c0_20 = arith.constant 0 : index
      %72 = vector.load %arg12[%c1_19, %c0_20] : memref<2x128xf32, #tpu.memory_space<vmem>>, vector<1x128xf32>
      %73 = arith.mulf %44, %64 : vector<48x128xf32>
      %cst_21 = arith.constant dense<0.000000e+00> : vector<128xf32>
      %74 = vector.multi_reduction <add>, %73, %cst_21 [0] : vector<48x128xf32> to vector<128xf32>
      %75 = vector.shape_cast %74 : vector<128xf32> to vector<1x128xf32>
      %76 = arith.addf %72, %75 : vector<1x128xf32>
      %c1_22 = arith.constant 1 : index
      %c0_23 = arith.constant 0 : index
      %77 = vector.load %arg12[%c1_22, %c0_23] : memref<2x128xf32, #tpu.memory_space<vmem>>, vector<1x128xf32>
      tpu.vector_store %arg12[%c1_22, %c0_23], %76 {strides = array<i32>} : memref<2x128xf32, #tpu.memory_space<vmem>>, vector<1x128xf32>,
      %c0_24 = arith.constant 0 : index
      %c0_25 = arith.constant 0 : index
      %78 = vector.load %arg13[%c0_24, %c0_25] : memref<2x128xf32, #tpu.memory_space<vmem>>, vector<1x128xf32>
      %cst_26 = arith.constant dense<0.000000e+00> : vector<128xf32>
      %79 = vector.multi_reduction <add>, %66, %cst_26 [0] : vector<48x128xf32> to vector<128xf32>
      %80 = vector.shape_cast %79 : vector<128xf32> to vector<1x128xf32>
      %81 = arith.addf %78, %80 : vector<1x128xf32>
      %c0_27 = arith.constant 0 : index
      %c0_28 = arith.constant 0 : index
      %82 = vector.load %arg13[%c0_27, %c0_28] : memref<2x128xf32, #tpu.memory_space<vmem>>, vector<1x128xf32>
      tpu.vector_store %arg13[%c0_27, %c0_28], %81 {strides = array<i32>} : memref<2x128xf32, #tpu.memory_space<vmem>>, vector<1x128xf32>,
      %c1_29 = arith.constant 1 : index
      %c0_30 = arith.constant 0 : index
      %83 = vector.load %arg13[%c1_29, %c0_30] : memref<2x128xf32, #tpu.memory_space<vmem>>, vector<1x128xf32>
      %84 = arith.mulf %62, %66 : vector<48x128xf32>
      %cst_31 = arith.constant dense<0.000000e+00> : vector<128xf32>
      %85 = vector.multi_reduction <add>, %84, %cst_31 [0] : vector<48x128xf32> to vector<128xf32>
      %86 = vector.shape_cast %85 : vector<128xf32> to vector<1x128xf32>
      %87 = arith.addf %83, %86 : vector<1x128xf32>
      %c1_32 = arith.constant 1 : index
      %c0_33 = arith.constant 0 : index
      %88 = vector.load %arg13[%c1_32, %c0_33] : memref<2x128xf32, #tpu.memory_space<vmem>>, vector<1x128xf32>
      tpu.vector_store %arg13[%c1_32, %c0_33], %87 {strides = array<i32>} : memref<2x128xf32, #tpu.memory_space<vmem>>, vector<1x128xf32>,
      %c1_i32_34 = arith.constant 1 : i32
      %89 = arith.index_cast %c1_i32_34 : i32 to index
      %c0_35 = arith.constant 0 : index
      %c0_36 = arith.constant 0 : index
      %90 = vector.load %arg6[%89, %c0_35, %c0_36] : memref<4x48x128xf32, #tpu.memory_space<vmem>>, vector<1x48x128xf32>
      %91 = vector.shape_cast %90 : vector<1x48x128xf32> to vector<48x128xf32>
      %c1_i32_37 = arith.constant 1 : i32
      %92 = tpu.dynamic_rotate %91 by %c1_i32_37 dim 1 : vector<48x128xf32>, i32 -> vector<48x128xf32>
      %c127_i32_38 = arith.constant 127 : i32
      %93 = tpu.dynamic_rotate %91 by %c127_i32_38 dim 1 : vector<48x128xf32>, i32 -> vector<48x128xf32>
      %c2_i32_39 = arith.constant 2 : i32
      %94 = tpu.dynamic_rotate %91 by %c2_i32_39 dim 1 : vector<48x128xf32>, i32 -> vector<48x128xf32>
      %c126_i32_40 = arith.constant 126 : i32
      %95 = tpu.dynamic_rotate %91 by %c126_i32_40 dim 1 : vector<48x128xf32>, i32 -> vector<48x128xf32>
      %96 = vector.broadcast %0 : f32 to vector<48x128xf32>
      %97 = arith.mulf %96, %92 : vector<48x128xf32>
      %98 = vector.broadcast %1 : f32 to vector<48x128xf32>
      %99 = arith.mulf %98, %91 : vector<48x128xf32>
      %100 = arith.addf %97, %99 : vector<48x128xf32>
      %101 = vector.broadcast %2 : f32 to vector<48x128xf32>
      %102 = arith.mulf %101, %93 : vector<48x128xf32>
      %103 = arith.addf %100, %102 : vector<48x128xf32>
      %104 = vector.broadcast %3 : f32 to vector<48x128xf32>
      %105 = arith.addf %103, %104 : vector<48x128xf32>
      %cst_41 = arith.constant 0.000000e+00 : f32
      %106 = vector.broadcast %cst_41 : f32 to vector<48x128xf32>
      %107 = arith.maximumf %105, %106 : vector<48x128xf32>
      %108 = vector.broadcast %4 : f32 to vector<48x128xf32>
      %109 = arith.mulf %108, %94 : vector<48x128xf32>
      %110 = vector.broadcast %5 : f32 to vector<48x128xf32>
      %111 = arith.mulf %110, %92 : vector<48x128xf32>
      %112 = arith.addf %109, %111 : vector<48x128xf32>
      %113 = vector.broadcast %6 : f32 to vector<48x128xf32>
      %114 = arith.mulf %113, %91 : vector<48x128xf32>
      %115 = arith.addf %112, %114 : vector<48x128xf32>
      %116 = vector.broadcast %7 : f32 to vector<48x128xf32>
      %117 = arith.mulf %116, %93 : vector<48x128xf32>
      %118 = arith.addf %115, %117 : vector<48x128xf32>
      %119 = vector.broadcast %8 : f32 to vector<48x128xf32>
      %120 = arith.mulf %119, %95 : vector<48x128xf32>
      %121 = arith.addf %118, %120 : vector<48x128xf32>
      %122 = vector.broadcast %9 : f32 to vector<48x128xf32>
      %123 = arith.addf %121, %122 : vector<48x128xf32>
      %cst_42 = arith.constant 0.000000e+00 : f32
      %124 = vector.broadcast %cst_42 : f32 to vector<48x128xf32>
      %125 = arith.maximumf %123, %124 : vector<48x128xf32>
      %126 = vector.broadcast %16 : vector<48x1xf32> to vector<48x128xf32>
      %127 = arith.mulf %107, %126 : vector<48x128xf32>
      %128 = vector.broadcast %16 : vector<48x1xf32> to vector<48x128xf32>
      %129 = arith.mulf %125, %128 : vector<48x128xf32>
      %c0_43 = arith.constant 0 : index
      %c0_44 = arith.constant 0 : index
      %130 = vector.load %arg12[%c0_43, %c0_44] : memref<2x128xf32, #tpu.memory_space<vmem>>, vector<1x128xf32>
      %cst_45 = arith.constant dense<0.000000e+00> : vector<128xf32>
      %131 = vector.multi_reduction <add>, %127, %cst_45 [0] : vector<48x128xf32> to vector<128xf32>
      %132 = vector.shape_cast %131 : vector<128xf32> to vector<1x128xf32>
      %133 = arith.addf %130, %132 : vector<1x128xf32>
      %c0_46 = arith.constant 0 : index
      %c0_47 = arith.constant 0 : index
      %134 = vector.load %arg12[%c0_46, %c0_47] : memref<2x128xf32, #tpu.memory_space<vmem>>, vector<1x128xf32>
      tpu.vector_store %arg12[%c0_46, %c0_47], %133 {strides = array<i32>} : memref<2x128xf32, #tpu.memory_space<vmem>>, vector<1x128xf32>,
      %c1_48 = arith.constant 1 : index
      %c0_49 = arith.constant 0 : index
      %135 = vector.load %arg12[%c1_48, %c0_49] : memref<2x128xf32, #tpu.memory_space<vmem>>, vector<1x128xf32>
      %136 = arith.mulf %107, %127 : vector<48x128xf32>
      %cst_50 = arith.constant dense<0.000000e+00> : vector<128xf32>
      %137 = vector.multi_reduction <add>, %136, %cst_50 [0] : vector<48x128xf32> to vector<128xf32>
      %138 = vector.shape_cast %137 : vector<128xf32> to vector<1x128xf32>
      %139 = arith.addf %135, %138 : vector<1x128xf32>
      %c1_51 = arith.constant 1 : index
      %c0_52 = arith.constant 0 : index
      %140 = vector.load %arg12[%c1_51, %c0_52] : memref<2x128xf32, #tpu.memory_space<vmem>>, vector<1x128xf32>
      tpu.vector_store %arg12[%c1_51, %c0_52], %139 {strides = array<i32>} : memref<2x128xf32, #tpu.memory_space<vmem>>, vector<1x128xf32>,
      %c0_53 = arith.constant 0 : index
      %c0_54 = arith.constant 0 : index
      %141 = vector.load %arg13[%c0_53, %c0_54] : memref<2x128xf32, #tpu.memory_space<vmem>>, vector<1x128xf32>
      %cst_55 = arith.constant dense<0.000000e+00> : vector<128xf32>
      %142 = vector.multi_reduction <add>, %129, %cst_55 [0] : vector<48x128xf32> to vector<128xf32>
      %143 = vector.shape_cast %142 : vector<128xf32> to vector<1x128xf32>
      %144 = arith.addf %141, %143 : vector<1x128xf32>
      %c0_56 = arith.constant 0 : index
      %c0_57 = arith.constant 0 : index
      %145 = vector.load %arg13[%c0_56, %c0_57] : memref<2x128xf32, #tpu.memory_space<vmem>>, vector<1x128xf32>
      tpu.vector_store %arg13[%c0_56, %c0_57], %144 {strides = array<i32>} : memref<2x128xf32, #tpu.memory_space<vmem>>, vector<1x128xf32>,
      %c1_58 = arith.constant 1 : index
      %c0_59 = arith.constant 0 : index
      %146 = vector.load %arg13[%c1_58, %c0_59] : memref<2x128xf32, #tpu.memory_space<vmem>>, vector<1x128xf32>
      %147 = arith.mulf %125, %129 : vector<48x128xf32>
      %cst_60 = arith.constant dense<0.000000e+00> : vector<128xf32>
      %148 = vector.multi_reduction <add>, %147, %cst_60 [0] : vector<48x128xf32> to vector<128xf32>
      %149 = vector.shape_cast %148 : vector<128xf32> to vector<1x128xf32>
      %150 = arith.addf %146, %149 : vector<1x128xf32>
      %c1_61 = arith.constant 1 : index
      %c0_62 = arith.constant 0 : index
      %151 = vector.load %arg13[%c1_61, %c0_62] : memref<2x128xf32, #tpu.memory_space<vmem>>, vector<1x128xf32>
      tpu.vector_store %arg13[%c1_61, %c0_62], %150 {strides = array<i32>} : memref<2x128xf32, #tpu.memory_space<vmem>>, vector<1x128xf32>,
      %c2_i32_63 = arith.constant 2 : i32
      %152 = arith.index_cast %c2_i32_63 : i32 to index
      %c0_64 = arith.constant 0 : index
      %c0_65 = arith.constant 0 : index
      %153 = vector.load %arg6[%152, %c0_64, %c0_65] : memref<4x48x128xf32, #tpu.memory_space<vmem>>, vector<1x48x128xf32>
      %154 = vector.shape_cast %153 : vector<1x48x128xf32> to vector<48x128xf32>
      %c1_i32_66 = arith.constant 1 : i32
      %155 = tpu.dynamic_rotate %154 by %c1_i32_66 dim 1 : vector<48x128xf32>, i32 -> vector<48x128xf32>
      %c127_i32_67 = arith.constant 127 : i32
      %156 = tpu.dynamic_rotate %154 by %c127_i32_67 dim 1 : vector<48x128xf32>, i32 -> vector<48x128xf32>
      %c2_i32_68 = arith.constant 2 : i32
      %157 = tpu.dynamic_rotate %154 by %c2_i32_68 dim 1 : vector<48x128xf32>, i32 -> vector<48x128xf32>
      %c126_i32_69 = arith.constant 126 : i32
      %158 = tpu.dynamic_rotate %154 by %c126_i32_69 dim 1 : vector<48x128xf32>, i32 -> vector<48x128xf32>
      %159 = vector.broadcast %0 : f32 to vector<48x128xf32>
      %160 = arith.mulf %159, %155 : vector<48x128xf32>
      %161 = vector.broadcast %1 : f32 to vector<48x128xf32>
      %162 = arith.mulf %161, %154 : vector<48x128xf32>
      %163 = arith.addf %160, %162 : vector<48x128xf32>
      %164 = vector.broadcast %2 : f32 to vector<48x128xf32>
      %165 = arith.mulf %164, %156 : vector<48x128xf32>
      %166 = arith.addf %163, %165 : vector<48x128xf32>
      %167 = vector.broadcast %3 : f32 to vector<48x128xf32>
      %168 = arith.addf %166, %167 : vector<48x128xf32>
      %cst_70 = arith.constant 0.000000e+00 : f32
      %169 = vector.broadcast %cst_70 : f32 to vector<48x128xf32>
      %170 = arith.maximumf %168, %169 : vector<48x128xf32>
      %171 = vector.broadcast %4 : f32 to vector<48x128xf32>
      %172 = arith.mulf %171, %157 : vector<48x128xf32>
      %173 = vector.broadcast %5 : f32 to vector<48x128xf32>
      %174 = arith.mulf %173, %155 : vector<48x128xf32>
      %175 = arith.addf %172, %174 : vector<48x128xf32>
      %176 = vector.broadcast %6 : f32 to vector<48x128xf32>
      %177 = arith.mulf %176, %154 : vector<48x128xf32>
      %178 = arith.addf %175, %177 : vector<48x128xf32>
      %179 = vector.broadcast %7 : f32 to vector<48x128xf32>
      %180 = arith.mulf %179, %156 : vector<48x128xf32>
      %181 = arith.addf %178, %180 : vector<48x128xf32>
      %182 = vector.broadcast %8 : f32 to vector<48x128xf32>
      %183 = arith.mulf %182, %158 : vector<48x128xf32>
      %184 = arith.addf %181, %183 : vector<48x128xf32>
      %185 = vector.broadcast %9 : f32 to vector<48x128xf32>
      %186 = arith.addf %184, %185 : vector<48x128xf32>
      %cst_71 = arith.constant 0.000000e+00 : f32
      %187 = vector.broadcast %cst_71 : f32 to vector<48x128xf32>
      %188 = arith.maximumf %186, %187 : vector<48x128xf32>
      %189 = vector.broadcast %16 : vector<48x1xf32> to vector<48x128xf32>
      %190 = arith.mulf %170, %189 : vector<48x128xf32>
      %191 = vector.broadcast %16 : vector<48x1xf32> to vector<48x128xf32>
      %192 = arith.mulf %188, %191 : vector<48x128xf32>
      %c0_72 = arith.constant 0 : index
      %c0_73 = arith.constant 0 : index
      %193 = vector.load %arg12[%c0_72, %c0_73] : memref<2x128xf32, #tpu.memory_space<vmem>>, vector<1x128xf32>
      %cst_74 = arith.constant dense<0.000000e+00> : vector<128xf32>
      %194 = vector.multi_reduction <add>, %190, %cst_74 [0] : vector<48x128xf32> to vector<128xf32>
      %195 = vector.shape_cast %194 : vector<128xf32> to vector<1x128xf32>
      %196 = arith.addf %193, %195 : vector<1x128xf32>
      %c0_75 = arith.constant 0 : index
      %c0_76 = arith.constant 0 : index
      %197 = vector.load %arg12[%c0_75, %c0_76] : memref<2x128xf32, #tpu.memory_space<vmem>>, vector<1x128xf32>
      tpu.vector_store %arg12[%c0_75, %c0_76], %196 {strides = array<i32>} : memref<2x128xf32, #tpu.memory_space<vmem>>, vector<1x128xf32>,
      %c1_77 = arith.constant 1 : index
      %c0_78 = arith.constant 0 : index
      %198 = vector.load %arg12[%c1_77, %c0_78] : memref<2x128xf32, #tpu.memory_space<vmem>>, vector<1x128xf32>
      %199 = arith.mulf %170, %190 : vector<48x128xf32>
      %cst_79 = arith.constant dense<0.000000e+00> : vector<128xf32>
      %200 = vector.multi_reduction <add>, %199, %cst_79 [0] : vector<48x128xf32> to vector<128xf32>
      %201 = vector.shape_cast %200 : vector<128xf32> to vector<1x128xf32>
      %202 = arith.addf %198, %201 : vector<1x128xf32>
      %c1_80 = arith.constant 1 : index
      %c0_81 = arith.constant 0 : index
      %203 = vector.load %arg12[%c1_80, %c0_81] : memref<2x128xf32, #tpu.memory_space<vmem>>, vector<1x128xf32>
      tpu.vector_store %arg12[%c1_80, %c0_81], %202 {strides = array<i32>} : memref<2x128xf32, #tpu.memory_space<vmem>>, vector<1x128xf32>,
      %c0_82 = arith.constant 0 : index
      %c0_83 = arith.constant 0 : index
      %204 = vector.load %arg13[%c0_82, %c0_83] : memref<2x128xf32, #tpu.memory_space<vmem>>, vector<1x128xf32>
      %cst_84 = arith.constant dense<0.000000e+00> : vector<128xf32>
      %205 = vector.multi_reduction <add>, %192, %cst_84 [0] : vector<48x128xf32> to vector<128xf32>
      %206 = vector.shape_cast %205 : vector<128xf32> to vector<1x128xf32>
      %207 = arith.addf %204, %206 : vector<1x128xf32>
      %c0_85 = arith.constant 0 : index
      %c0_86 = arith.constant 0 : index
      %208 = vector.load %arg13[%c0_85, %c0_86] : memref<2x128xf32, #tpu.memory_space<vmem>>, vector<1x128xf32>
      tpu.vector_store %arg13[%c0_85, %c0_86], %207 {strides = array<i32>} : memref<2x128xf32, #tpu.memory_space<vmem>>, vector<1x128xf32>,
      %c1_87 = arith.constant 1 : index
      %c0_88 = arith.constant 0 : index
      %209 = vector.load %arg13[%c1_87, %c0_88] : memref<2x128xf32, #tpu.memory_space<vmem>>, vector<1x128xf32>
      %210 = arith.mulf %188, %192 : vector<48x128xf32>
      %cst_89 = arith.constant dense<0.000000e+00> : vector<128xf32>
      %211 = vector.multi_reduction <add>, %210, %cst_89 [0] : vector<48x128xf32> to vector<128xf32>
      %212 = vector.shape_cast %211 : vector<128xf32> to vector<1x128xf32>
      %213 = arith.addf %209, %212 : vector<1x128xf32>
      %c1_90 = arith.constant 1 : index
      %c0_91 = arith.constant 0 : index
      %214 = vector.load %arg13[%c1_90, %c0_91] : memref<2x128xf32, #tpu.memory_space<vmem>>, vector<1x128xf32>
      tpu.vector_store %arg13[%c1_90, %c0_91], %213 {strides = array<i32>} : memref<2x128xf32, #tpu.memory_space<vmem>>, vector<1x128xf32>,
      %c3_i32 = arith.constant 3 : i32
      %215 = arith.index_cast %c3_i32 : i32 to index
      %c0_92 = arith.constant 0 : index
      %c0_93 = arith.constant 0 : index
      %216 = vector.load %arg6[%215, %c0_92, %c0_93] : memref<4x48x128xf32, #tpu.memory_space<vmem>>, vector<1x48x128xf32>
      %217 = vector.shape_cast %216 : vector<1x48x128xf32> to vector<48x128xf32>
      %c1_i32_94 = arith.constant 1 : i32
      %218 = tpu.dynamic_rotate %217 by %c1_i32_94 dim 1 : vector<48x128xf32>, i32 -> vector<48x128xf32>
      %c127_i32_95 = arith.constant 127 : i32
      %219 = tpu.dynamic_rotate %217 by %c127_i32_95 dim 1 : vector<48x128xf32>, i32 -> vector<48x128xf32>
      %c2_i32_96 = arith.constant 2 : i32
      %220 = tpu.dynamic_rotate %217 by %c2_i32_96 dim 1 : vector<48x128xf32>, i32 -> vector<48x128xf32>
      %c126_i32_97 = arith.constant 126 : i32
      %221 = tpu.dynamic_rotate %217 by %c126_i32_97 dim 1 : vector<48x128xf32>, i32 -> vector<48x128xf32>
      %222 = vector.broadcast %0 : f32 to vector<48x128xf32>
      %223 = arith.mulf %222, %218 : vector<48x128xf32>
      %224 = vector.broadcast %1 : f32 to vector<48x128xf32>
      %225 = arith.mulf %224, %217 : vector<48x128xf32>
      %226 = arith.addf %223, %225 : vector<48x128xf32>
      %227 = vector.broadcast %2 : f32 to vector<48x128xf32>
      %228 = arith.mulf %227, %219 : vector<48x128xf32>
      %229 = arith.addf %226, %228 : vector<48x128xf32>
      %230 = vector.broadcast %3 : f32 to vector<48x128xf32>
      %231 = arith.addf %229, %230 : vector<48x128xf32>
      %cst_98 = arith.constant 0.000000e+00 : f32
      %232 = vector.broadcast %cst_98 : f32 to vector<48x128xf32>
      %233 = arith.maximumf %231, %232 : vector<48x128xf32>
      %234 = vector.broadcast %4 : f32 to vector<48x128xf32>
      %235 = arith.mulf %234, %220 : vector<48x128xf32>
      %236 = vector.broadcast %5 : f32 to vector<48x128xf32>
      %237 = arith.mulf %236, %218 : vector<48x128xf32>
      %238 = arith.addf %235, %237 : vector<48x128xf32>
      %239 = vector.broadcast %6 : f32 to vector<48x128xf32>
      %240 = arith.mulf %239, %217 : vector<48x128xf32>
      %241 = arith.addf %238, %240 : vector<48x128xf32>
      %242 = vector.broadcast %7 : f32 to vector<48x128xf32>
      %243 = arith.mulf %242, %219 : vector<48x128xf32>
      %244 = arith.addf %241, %243 : vector<48x128xf32>
      %245 = vector.broadcast %8 : f32 to vector<48x128xf32>
      %246 = arith.mulf %245, %221 : vector<48x128xf32>
      %247 = arith.addf %244, %246 : vector<48x128xf32>
      %248 = vector.broadcast %9 : f32 to vector<48x128xf32>
      %249 = arith.addf %247, %248 : vector<48x128xf32>
      %cst_99 = arith.constant 0.000000e+00 : f32
      %250 = vector.broadcast %cst_99 : f32 to vector<48x128xf32>
      %251 = arith.maximumf %249, %250 : vector<48x128xf32>
      %252 = vector.broadcast %16 : vector<48x1xf32> to vector<48x128xf32>
      %253 = arith.mulf %233, %252 : vector<48x128xf32>
      %254 = vector.broadcast %16 : vector<48x1xf32> to vector<48x128xf32>
      %255 = arith.mulf %251, %254 : vector<48x128xf32>
      %c0_100 = arith.constant 0 : index
      %c0_101 = arith.constant 0 : index
      %256 = vector.load %arg12[%c0_100, %c0_101] : memref<2x128xf32, #tpu.memory_space<vmem>>, vector<1x128xf32>
      %cst_102 = arith.constant dense<0.000000e+00> : vector<128xf32>
      %257 = vector.multi_reduction <add>, %253, %cst_102 [0] : vector<48x128xf32> to vector<128xf32>
      %258 = vector.shape_cast %257 : vector<128xf32> to vector<1x128xf32>
      %259 = arith.addf %256, %258 : vector<1x128xf32>
      %c0_103 = arith.constant 0 : index
      %c0_104 = arith.constant 0 : index
      %260 = vector.load %arg12[%c0_103, %c0_104] : memref<2x128xf32, #tpu.memory_space<vmem>>, vector<1x128xf32>
      tpu.vector_store %arg12[%c0_103, %c0_104], %259 {strides = array<i32>} : memref<2x128xf32, #tpu.memory_space<vmem>>, vector<1x128xf32>,
      %c1_105 = arith.constant 1 : index
      %c0_106 = arith.constant 0 : index
      %261 = vector.load %arg12[%c1_105, %c0_106] : memref<2x128xf32, #tpu.memory_space<vmem>>, vector<1x128xf32>
      %262 = arith.mulf %233, %253 : vector<48x128xf32>
      %cst_107 = arith.constant dense<0.000000e+00> : vector<128xf32>
      %263 = vector.multi_reduction <add>, %262, %cst_107 [0] : vector<48x128xf32> to vector<128xf32>
      %264 = vector.shape_cast %263 : vector<128xf32> to vector<1x128xf32>
      %265 = arith.addf %261, %264 : vector<1x128xf32>
      %c1_108 = arith.constant 1 : index
      %c0_109 = arith.constant 0 : index
      %266 = vector.load %arg12[%c1_108, %c0_109] : memref<2x128xf32, #tpu.memory_space<vmem>>, vector<1x128xf32>
      tpu.vector_store %arg12[%c1_108, %c0_109], %265 {strides = array<i32>} : memref<2x128xf32, #tpu.memory_space<vmem>>, vector<1x128xf32>,
      %c0_110 = arith.constant 0 : index
      %c0_111 = arith.constant 0 : index
      %267 = vector.load %arg13[%c0_110, %c0_111] : memref<2x128xf32, #tpu.memory_space<vmem>>, vector<1x128xf32>
      %cst_112 = arith.constant dense<0.000000e+00> : vector<128xf32>
      %268 = vector.multi_reduction <add>, %255, %cst_112 [0] : vector<48x128xf32> to vector<128xf32>
      %269 = vector.shape_cast %268 : vector<128xf32> to vector<1x128xf32>
      %270 = arith.addf %267, %269 : vector<1x128xf32>
      %c0_113 = arith.constant 0 : index
      %c0_114 = arith.constant 0 : index
      %271 = vector.load %arg13[%c0_113, %c0_114] : memref<2x128xf32, #tpu.memory_space<vmem>>, vector<1x128xf32>
      tpu.vector_store %arg13[%c0_113, %c0_114], %270 {strides = array<i32>} : memref<2x128xf32, #tpu.memory_space<vmem>>, vector<1x128xf32>,
      %c1_115 = arith.constant 1 : index
      %c0_116 = arith.constant 0 : index
      %272 = vector.load %arg13[%c1_115, %c0_116] : memref<2x128xf32, #tpu.memory_space<vmem>>, vector<1x128xf32>
      %273 = arith.mulf %251, %255 : vector<48x128xf32>
      %cst_117 = arith.constant dense<0.000000e+00> : vector<128xf32>
      %274 = vector.multi_reduction <add>, %273, %cst_117 [0] : vector<48x128xf32> to vector<128xf32>
      %275 = vector.shape_cast %274 : vector<128xf32> to vector<1x128xf32>
      %276 = arith.addf %272, %275 : vector<1x128xf32>
      %c1_118 = arith.constant 1 : index
      %c0_119 = arith.constant 0 : index
      %277 = vector.load %arg13[%c1_118, %c0_119] : memref<2x128xf32, #tpu.memory_space<vmem>>, vector<1x128xf32>
      tpu.vector_store %arg13[%c1_118, %c0_119], %276 {strides = array<i32>} : memref<2x128xf32, #tpu.memory_space<vmem>>, vector<1x128xf32>,
      %c4_i32 = arith.constant 4 : i32
      %c2_i32_120 = arith.constant 2 : i32
      %278 = arith.cmpi eq, %arg1, %c2_i32_120 : i32
      %279 = arith.extui %278 : i1 to i32
      %c0_i32_121 = arith.constant 0 : i32
      %280 = arith.cmpi ne, %279, %c0_i32_121 : i32
      scf.if %280 {
        %c0_122 = arith.constant 0 : index
        %c0_123 = arith.constant 0 : index
        %281 = vector.load %arg12[%c0_122, %c0_123] : memref<2x128xf32, #tpu.memory_space<vmem>>, vector<1x128xf32>
        %cst_124 = arith.constant 0.001953125 : f32
        %282 = vector.broadcast %cst_124 : f32 to vector<1x128xf32>
        %283 = arith.mulf %281, %282 : vector<1x128xf32>
        %c1_125 = arith.constant 1 : index
        %c0_126 = arith.constant 0 : index
        %284 = vector.load %arg12[%c1_125, %c0_126] : memref<2x128xf32, #tpu.memory_space<vmem>>, vector<1x128xf32>
        %cst_127 = arith.constant 0.001953125 : f32
        %285 = vector.broadcast %cst_127 : f32 to vector<1x128xf32>
        %286 = arith.mulf %284, %285 : vector<1x128xf32>
        %287 = arith.mulf %283, %283 : vector<1x128xf32>
        %288 = arith.subf %286, %287 : vector<1x128xf32>
        %cst_128 = arith.constant 0.000000e+00 : f32
        %289 = vector.broadcast %cst_128 : f32 to vector<1x128xf32>
        %290 = arith.maximumf %288, %289 : vector<1x128xf32>
        %c0_129 = arith.constant 0 : index
        %c0_130 = arith.constant 0 : index
        %291 = vector.load %arg7[%c0_129, %c0_130] : memref<4x128xf32, #tpu.memory_space<vmem>>, vector<1x128xf32>
        %cst_131 = arith.constant 9.99999974E-6 : f32
        %292 = vector.broadcast %cst_131 : f32 to vector<1x128xf32>
        %293 = arith.addf %290, %292 : vector<1x128xf32>
        %294 = math.rsqrt %293 : vector<1x128xf32>
        %295 = arith.mulf %291, %294 : vector<1x128xf32>
        %c0_132 = arith.constant 0 : index
        %c0_133 = arith.constant 0 : index
        %296 = vector.load %arg14[%c0_132, %c0_133] : memref<4x128xf32, #tpu.memory_space<vmem>>, vector<1x128xf32>
        tpu.vector_store %arg14[%c0_132, %c0_133], %295 {strides = array<i32>} : memref<4x128xf32, #tpu.memory_space<vmem>>, vector<1x128xf32>,
        %c1_134 = arith.constant 1 : index
        %c0_135 = arith.constant 0 : index
        %297 = vector.load %arg7[%c1_134, %c0_135] : memref<4x128xf32, #tpu.memory_space<vmem>>, vector<1x128xf32>
        %298 = arith.mulf %283, %295 : vector<1x128xf32>
        %299 = arith.subf %297, %298 : vector<1x128xf32>
        %c1_136 = arith.constant 1 : index
        %c0_137 = arith.constant 0 : index
        %300 = vector.load %arg14[%c1_136, %c0_137] : memref<4x128xf32, #tpu.memory_space<vmem>>, vector<1x128xf32>
        tpu.vector_store %arg14[%c1_136, %c0_137], %299 {strides = array<i32>} : memref<4x128xf32, #tpu.memory_space<vmem>>, vector<1x128xf32>,
        %c0_138 = arith.constant 0 : index
        %c0_139 = arith.constant 0 : index
        %301 = vector.load %arg13[%c0_138, %c0_139] : memref<2x128xf32, #tpu.memory_space<vmem>>, vector<1x128xf32>
        %cst_140 = arith.constant 0.001953125 : f32
        %302 = vector.broadcast %cst_140 : f32 to vector<1x128xf32>
        %303 = arith.mulf %301, %302 : vector<1x128xf32>
        %c1_141 = arith.constant 1 : index
        %c0_142 = arith.constant 0 : index
        %304 = vector.load %arg13[%c1_141, %c0_142] : memref<2x128xf32, #tpu.memory_space<vmem>>, vector<1x128xf32>
        %cst_143 = arith.constant 0.001953125 : f32
        %305 = vector.broadcast %cst_143 : f32 to vector<1x128xf32>
        %306 = arith.mulf %304, %305 : vector<1x128xf32>
        %307 = arith.mulf %303, %303 : vector<1x128xf32>
        %308 = arith.subf %306, %307 : vector<1x128xf32>
        %cst_144 = arith.constant 0.000000e+00 : f32
        %309 = vector.broadcast %cst_144 : f32 to vector<1x128xf32>
        %310 = arith.maximumf %308, %309 : vector<1x128xf32>
        %c2_145 = arith.constant 2 : index
        %c0_146 = arith.constant 0 : index
        %311 = vector.load %arg7[%c2_145, %c0_146] : memref<4x128xf32, #tpu.memory_space<vmem>>, vector<1x128xf32>
        %cst_147 = arith.constant 9.99999974E-6 : f32
        %312 = vector.broadcast %cst_147 : f32 to vector<1x128xf32>
        %313 = arith.addf %310, %312 : vector<1x128xf32>
        %314 = math.rsqrt %313 : vector<1x128xf32>
        %315 = arith.mulf %311, %314 : vector<1x128xf32>
        %c2_148 = arith.constant 2 : index
        %c0_149 = arith.constant 0 : index
        %316 = vector.load %arg14[%c2_148, %c0_149] : memref<4x128xf32, #tpu.memory_space<vmem>>, vector<1x128xf32>
        tpu.vector_store %arg14[%c2_148, %c0_149], %315 {strides = array<i32>} : memref<4x128xf32, #tpu.memory_space<vmem>>, vector<1x128xf32>,
        %c3_150 = arith.constant 3 : index
        %c0_151 = arith.constant 0 : index
        %317 = vector.load %arg7[%c3_150, %c0_151] : memref<4x128xf32, #tpu.memory_space<vmem>>, vector<1x128xf32>
        %318 = arith.mulf %303, %315 : vector<1x128xf32>
        %319 = arith.subf %317, %318 : vector<1x128xf32>
        %c3_152 = arith.constant 3 : index
        %c0_153 = arith.constant 0 : index
        %320 = vector.load %arg14[%c3_152, %c0_153] : memref<4x128xf32, #tpu.memory_space<vmem>>, vector<1x128xf32>
        tpu.vector_store %arg14[%c3_152, %c0_153], %319 {strides = array<i32>} : memref<4x128xf32, #tpu.memory_space<vmem>>, vector<1x128xf32>,
      } else {
      }
    } else {
    }
    %c1_i32 = arith.constant 1 : i32
    %20 = arith.cmpi eq, %arg0, %c1_i32 : i32
    %21 = arith.extui %20 : i1 to i32
    %c0_i32_6 = arith.constant 0 : i32
    %22 = arith.cmpi ne, %21, %c0_i32_6 : i32
    scf.if %22 {
      %c0_i32_7 = arith.constant 0 : i32
      %23 = arith.cmpi eq, %arg1, %c0_i32_7 : i32
      %24 = arith.extui %23 : i1 to i32
      %c0_i32_8 = arith.constant 0 : i32
      %25 = arith.cmpi ne, %24, %c0_i32_8 : i32
      scf.if %25 {
        %cst_68 = arith.constant 0.000000e+00 : f32
        %228 = vector.broadcast %cst_68 : f32 to vector<2x128xf32>
        %c0_69 = arith.constant 0 : index
        %c0_70 = arith.constant 0 : index
        %229 = vector.load %arg15[%c0_69, %c0_70] : memref<2x128xf32, #tpu.memory_space<vmem>>, vector<2x128xf32>
        tpu.vector_store %arg15[%c0_69, %c0_70], %228 {strides = array<i32>} : memref<2x128xf32, #tpu.memory_space<vmem>>, vector<2x128xf32>,
      } else {
      }
      %c0_9 = arith.constant 0 : index
      %c0_10 = arith.constant 0 : index
      %c0_11 = arith.constant 0 : index
      %26 = vector.load %arg6[%c0_9, %c0_10, %c0_11] : memref<4x48x128xf32, #tpu.memory_space<vmem>>, vector<1x48x128xf32>
      %27 = vector.shape_cast %26 : vector<1x48x128xf32> to vector<48x128xf32>
      %c1_i32_12 = arith.constant 1 : i32
      %28 = tpu.dynamic_rotate %27 by %c1_i32_12 dim 1 : vector<48x128xf32>, i32 -> vector<48x128xf32>
      %c127_i32 = arith.constant 127 : i32
      %29 = tpu.dynamic_rotate %27 by %c127_i32 dim 1 : vector<48x128xf32>, i32 -> vector<48x128xf32>
      %c2_i32 = arith.constant 2 : i32
      %30 = tpu.dynamic_rotate %27 by %c2_i32 dim 1 : vector<48x128xf32>, i32 -> vector<48x128xf32>
      %c126_i32 = arith.constant 126 : i32
      %31 = tpu.dynamic_rotate %27 by %c126_i32 dim 1 : vector<48x128xf32>, i32 -> vector<48x128xf32>
      %32 = vector.broadcast %0 : f32 to vector<48x128xf32>
      %33 = arith.mulf %32, %28 : vector<48x128xf32>
      %34 = vector.broadcast %1 : f32 to vector<48x128xf32>
      %35 = arith.mulf %34, %27 : vector<48x128xf32>
      %36 = arith.addf %33, %35 : vector<48x128xf32>
      %37 = vector.broadcast %2 : f32 to vector<48x128xf32>
      %38 = arith.mulf %37, %29 : vector<48x128xf32>
      %39 = arith.addf %36, %38 : vector<48x128xf32>
      %40 = vector.broadcast %3 : f32 to vector<48x128xf32>
      %41 = arith.addf %39, %40 : vector<48x128xf32>
      %cst = arith.constant 0.000000e+00 : f32
      %42 = vector.broadcast %cst : f32 to vector<48x128xf32>
      %43 = arith.maximumf %41, %42 : vector<48x128xf32>
      %44 = vector.broadcast %4 : f32 to vector<48x128xf32>
      %45 = arith.mulf %44, %30 : vector<48x128xf32>
      %46 = vector.broadcast %5 : f32 to vector<48x128xf32>
      %47 = arith.mulf %46, %28 : vector<48x128xf32>
      %48 = arith.addf %45, %47 : vector<48x128xf32>
      %49 = vector.broadcast %6 : f32 to vector<48x128xf32>
      %50 = arith.mulf %49, %27 : vector<48x128xf32>
      %51 = arith.addf %48, %50 : vector<48x128xf32>
      %52 = vector.broadcast %7 : f32 to vector<48x128xf32>
      %53 = arith.mulf %52, %29 : vector<48x128xf32>
      %54 = arith.addf %51, %53 : vector<48x128xf32>
      %55 = vector.broadcast %8 : f32 to vector<48x128xf32>
      %56 = arith.mulf %55, %31 : vector<48x128xf32>
      %57 = arith.addf %54, %56 : vector<48x128xf32>
      %58 = vector.broadcast %9 : f32 to vector<48x128xf32>
      %59 = arith.addf %57, %58 : vector<48x128xf32>
      %cst_13 = arith.constant 0.000000e+00 : f32
      %60 = vector.broadcast %cst_13 : f32 to vector<48x128xf32>
      %61 = arith.maximumf %59, %60 : vector<48x128xf32>
      %c1_i32_14 = arith.constant 1 : i32
      %62 = arith.index_cast %c1_i32_14 : i32 to index
      %c0_15 = arith.constant 0 : index
      %c0_16 = arith.constant 0 : index
      %63 = vector.load %arg6[%62, %c0_15, %c0_16] : memref<4x48x128xf32, #tpu.memory_space<vmem>>, vector<1x48x128xf32>
      %64 = vector.shape_cast %63 : vector<1x48x128xf32> to vector<48x128xf32>
      %c1_i32_17 = arith.constant 1 : i32
      %65 = tpu.dynamic_rotate %64 by %c1_i32_17 dim 1 : vector<48x128xf32>, i32 -> vector<48x128xf32>
      %c127_i32_18 = arith.constant 127 : i32
      %66 = tpu.dynamic_rotate %64 by %c127_i32_18 dim 1 : vector<48x128xf32>, i32 -> vector<48x128xf32>
      %c2_i32_19 = arith.constant 2 : i32
      %67 = tpu.dynamic_rotate %64 by %c2_i32_19 dim 1 : vector<48x128xf32>, i32 -> vector<48x128xf32>
      %c126_i32_20 = arith.constant 126 : i32
      %68 = tpu.dynamic_rotate %64 by %c126_i32_20 dim 1 : vector<48x128xf32>, i32 -> vector<48x128xf32>
      %69 = vector.broadcast %0 : f32 to vector<48x128xf32>
      %70 = arith.mulf %69, %65 : vector<48x128xf32>
      %71 = vector.broadcast %1 : f32 to vector<48x128xf32>
      %72 = arith.mulf %71, %64 : vector<48x128xf32>
      %73 = arith.addf %70, %72 : vector<48x128xf32>
      %74 = vector.broadcast %2 : f32 to vector<48x128xf32>
      %75 = arith.mulf %74, %66 : vector<48x128xf32>
      %76 = arith.addf %73, %75 : vector<48x128xf32>
      %77 = vector.broadcast %3 : f32 to vector<48x128xf32>
      %78 = arith.addf %76, %77 : vector<48x128xf32>
      %cst_21 = arith.constant 0.000000e+00 : f32
      %79 = vector.broadcast %cst_21 : f32 to vector<48x128xf32>
      %80 = arith.maximumf %78, %79 : vector<48x128xf32>
      %81 = vector.broadcast %4 : f32 to vector<48x128xf32>
      %82 = arith.mulf %81, %67 : vector<48x128xf32>
      %83 = vector.broadcast %5 : f32 to vector<48x128xf32>
      %84 = arith.mulf %83, %65 : vector<48x128xf32>
      %85 = arith.addf %82, %84 : vector<48x128xf32>
      %86 = vector.broadcast %6 : f32 to vector<48x128xf32>
      %87 = arith.mulf %86, %64 : vector<48x128xf32>
      %88 = arith.addf %85, %87 : vector<48x128xf32>
      %89 = vector.broadcast %7 : f32 to vector<48x128xf32>
      %90 = arith.mulf %89, %66 : vector<48x128xf32>
      %91 = arith.addf %88, %90 : vector<48x128xf32>
      %92 = vector.broadcast %8 : f32 to vector<48x128xf32>
      %93 = arith.mulf %92, %68 : vector<48x128xf32>
      %94 = arith.addf %91, %93 : vector<48x128xf32>
      %95 = vector.broadcast %9 : f32 to vector<48x128xf32>
      %96 = arith.addf %94, %95 : vector<48x128xf32>
      %cst_22 = arith.constant 0.000000e+00 : f32
      %97 = vector.broadcast %cst_22 : f32 to vector<48x128xf32>
      %98 = arith.maximumf %96, %97 : vector<48x128xf32>
      %99 = arith.maximumf %43, %80 : vector<48x128xf32>
      %100 = arith.minimumf %43, %80 : vector<48x128xf32>
      %101 = arith.maximumf %61, %98 : vector<48x128xf32>
      %102 = arith.minimumf %61, %98 : vector<48x128xf32>
      %c2_i32_23 = arith.constant 2 : i32
      %103 = arith.index_cast %c2_i32_23 : i32 to index
      %c0_24 = arith.constant 0 : index
      %c0_25 = arith.constant 0 : index
      %104 = vector.load %arg6[%103, %c0_24, %c0_25] : memref<4x48x128xf32, #tpu.memory_space<vmem>>, vector<1x48x128xf32>
      %105 = vector.shape_cast %104 : vector<1x48x128xf32> to vector<48x128xf32>
      %c1_i32_26 = arith.constant 1 : i32
      %106 = tpu.dynamic_rotate %105 by %c1_i32_26 dim 1 : vector<48x128xf32>, i32 -> vector<48x128xf32>
      %c127_i32_27 = arith.constant 127 : i32
      %107 = tpu.dynamic_rotate %105 by %c127_i32_27 dim 1 : vector<48x128xf32>, i32 -> vector<48x128xf32>
      %c2_i32_28 = arith.constant 2 : i32
      %108 = tpu.dynamic_rotate %105 by %c2_i32_28 dim 1 : vector<48x128xf32>, i32 -> vector<48x128xf32>
      %c126_i32_29 = arith.constant 126 : i32
      %109 = tpu.dynamic_rotate %105 by %c126_i32_29 dim 1 : vector<48x128xf32>, i32 -> vector<48x128xf32>
      %110 = vector.broadcast %0 : f32 to vector<48x128xf32>
      %111 = arith.mulf %110, %106 : vector<48x128xf32>
      %112 = vector.broadcast %1 : f32 to vector<48x128xf32>
      %113 = arith.mulf %112, %105 : vector<48x128xf32>
      %114 = arith.addf %111, %113 : vector<48x128xf32>
      %115 = vector.broadcast %2 : f32 to vector<48x128xf32>
      %116 = arith.mulf %115, %107 : vector<48x128xf32>
      %117 = arith.addf %114, %116 : vector<48x128xf32>
      %118 = vector.broadcast %3 : f32 to vector<48x128xf32>
      %119 = arith.addf %117, %118 : vector<48x128xf32>
      %cst_30 = arith.constant 0.000000e+00 : f32
      %120 = vector.broadcast %cst_30 : f32 to vector<48x128xf32>
      %121 = arith.maximumf %119, %120 : vector<48x128xf32>
      %122 = vector.broadcast %4 : f32 to vector<48x128xf32>
      %123 = arith.mulf %122, %108 : vector<48x128xf32>
      %124 = vector.broadcast %5 : f32 to vector<48x128xf32>
      %125 = arith.mulf %124, %106 : vector<48x128xf32>
      %126 = arith.addf %123, %125 : vector<48x128xf32>
      %127 = vector.broadcast %6 : f32 to vector<48x128xf32>
      %128 = arith.mulf %127, %105 : vector<48x128xf32>
      %129 = arith.addf %126, %128 : vector<48x128xf32>
      %130 = vector.broadcast %7 : f32 to vector<48x128xf32>
      %131 = arith.mulf %130, %107 : vector<48x128xf32>
      %132 = arith.addf %129, %131 : vector<48x128xf32>
      %133 = vector.broadcast %8 : f32 to vector<48x128xf32>
      %134 = arith.mulf %133, %109 : vector<48x128xf32>
      %135 = arith.addf %132, %134 : vector<48x128xf32>
      %136 = vector.broadcast %9 : f32 to vector<48x128xf32>
      %137 = arith.addf %135, %136 : vector<48x128xf32>
      %cst_31 = arith.constant 0.000000e+00 : f32
      %138 = vector.broadcast %cst_31 : f32 to vector<48x128xf32>
      %139 = arith.maximumf %137, %138 : vector<48x128xf32>
      %140 = arith.maximumf %99, %121 : vector<48x128xf32>
      %141 = arith.minimumf %100, %121 : vector<48x128xf32>
      %142 = arith.maximumf %101, %139 : vector<48x128xf32>
      %143 = arith.minimumf %102, %139 : vector<48x128xf32>
      %c3_i32 = arith.constant 3 : i32
      %144 = arith.index_cast %c3_i32 : i32 to index
      %c0_32 = arith.constant 0 : index
      %c0_33 = arith.constant 0 : index
      %145 = vector.load %arg6[%144, %c0_32, %c0_33] : memref<4x48x128xf32, #tpu.memory_space<vmem>>, vector<1x48x128xf32>
      %146 = vector.shape_cast %145 : vector<1x48x128xf32> to vector<48x128xf32>
      %c1_i32_34 = arith.constant 1 : i32
      %147 = tpu.dynamic_rotate %146 by %c1_i32_34 dim 1 : vector<48x128xf32>, i32 -> vector<48x128xf32>
      %c127_i32_35 = arith.constant 127 : i32
      %148 = tpu.dynamic_rotate %146 by %c127_i32_35 dim 1 : vector<48x128xf32>, i32 -> vector<48x128xf32>
      %c2_i32_36 = arith.constant 2 : i32
      %149 = tpu.dynamic_rotate %146 by %c2_i32_36 dim 1 : vector<48x128xf32>, i32 -> vector<48x128xf32>
      %c126_i32_37 = arith.constant 126 : i32
      %150 = tpu.dynamic_rotate %146 by %c126_i32_37 dim 1 : vector<48x128xf32>, i32 -> vector<48x128xf32>
      %151 = vector.broadcast %0 : f32 to vector<48x128xf32>
      %152 = arith.mulf %151, %147 : vector<48x128xf32>
      %153 = vector.broadcast %1 : f32 to vector<48x128xf32>
      %154 = arith.mulf %153, %146 : vector<48x128xf32>
      %155 = arith.addf %152, %154 : vector<48x128xf32>
      %156 = vector.broadcast %2 : f32 to vector<48x128xf32>
      %157 = arith.mulf %156, %148 : vector<48x128xf32>
      %158 = arith.addf %155, %157 : vector<48x128xf32>
      %159 = vector.broadcast %3 : f32 to vector<48x128xf32>
      %160 = arith.addf %158, %159 : vector<48x128xf32>
      %cst_38 = arith.constant 0.000000e+00 : f32
      %161 = vector.broadcast %cst_38 : f32 to vector<48x128xf32>
      %162 = arith.maximumf %160, %161 : vector<48x128xf32>
      %163 = vector.broadcast %4 : f32 to vector<48x128xf32>
      %164 = arith.mulf %163, %149 : vector<48x128xf32>
      %165 = vector.broadcast %5 : f32 to vector<48x128xf32>
      %166 = arith.mulf %165, %147 : vector<48x128xf32>
      %167 = arith.addf %164, %166 : vector<48x128xf32>
      %168 = vector.broadcast %6 : f32 to vector<48x128xf32>
      %169 = arith.mulf %168, %146 : vector<48x128xf32>
      %170 = arith.addf %167, %169 : vector<48x128xf32>
      %171 = vector.broadcast %7 : f32 to vector<48x128xf32>
      %172 = arith.mulf %171, %148 : vector<48x128xf32>
      %173 = arith.addf %170, %172 : vector<48x128xf32>
      %174 = vector.broadcast %8 : f32 to vector<48x128xf32>
      %175 = arith.mulf %174, %150 : vector<48x128xf32>
      %176 = arith.addf %173, %175 : vector<48x128xf32>
      %177 = vector.broadcast %9 : f32 to vector<48x128xf32>
      %178 = arith.addf %176, %177 : vector<48x128xf32>
      %cst_39 = arith.constant 0.000000e+00 : f32
      %179 = vector.broadcast %cst_39 : f32 to vector<48x128xf32>
      %180 = arith.maximumf %178, %179 : vector<48x128xf32>
      %181 = arith.maximumf %140, %162 : vector<48x128xf32>
      %182 = arith.minimumf %141, %162 : vector<48x128xf32>
      %183 = arith.maximumf %142, %180 : vector<48x128xf32>
      %184 = arith.minimumf %143, %180 : vector<48x128xf32>
      %c3_i32_40 = arith.constant 3 : i32
      %c0_41 = arith.constant 0 : index
      %c0_42 = arith.constant 0 : index
      %185 = vector.load %arg14[%c0_41, %c0_42] : memref<4x128xf32, #tpu.memory_space<vmem>>, vector<1x128xf32>
      %c1_43 = arith.constant 1 : index
      %c0_44 = arith.constant 0 : index
      %186 = vector.load %arg14[%c1_43, %c0_44] : memref<4x128xf32, #tpu.memory_space<vmem>>, vector<1x128xf32>
      %c2_45 = arith.constant 2 : index
      %c0_46 = arith.constant 0 : index
      %187 = vector.load %arg14[%c2_45, %c0_46] : memref<4x128xf32, #tpu.memory_space<vmem>>, vector<1x128xf32>
      %c3_47 = arith.constant 3 : index
      %c0_48 = arith.constant 0 : index
      %188 = vector.load %arg14[%c3_47, %c0_48] : memref<4x128xf32, #tpu.memory_space<vmem>>, vector<1x128xf32>
      %cst_49 = arith.constant 0.000000e+00 : f32
      %189 = vector.broadcast %cst_49 : f32 to vector<1x128xf32>
      %190 = arith.cmpf oge, %185, %189 : vector<1x128xf32>
      %191 = vector.shape_cast %190 : vector<1x128xi1> to vector<1x128xi1>
      %192 = vector.broadcast %191 : vector<1x128xi1> to vector<48x128xi1>
      %193 = arith.select %192, %181, %182 : vector<48x128xi1>, vector<48x128xf32>
      %194 = vector.broadcast %185 : vector<1x128xf32> to vector<48x128xf32>
      %195 = arith.mulf %193, %194 : vector<48x128xf32>
      %196 = vector.broadcast %186 : vector<1x128xf32> to vector<48x128xf32>
      %197 = arith.addf %195, %196 : vector<48x128xf32>
      %cst_50 = arith.constant 0.000000e+00 : f32
      %198 = vector.broadcast %cst_50 : f32 to vector<1x128xf32>
      %199 = arith.cmpf oge, %187, %198 : vector<1x128xf32>
      %200 = vector.shape_cast %199 : vector<1x128xi1> to vector<1x128xi1>
      %201 = vector.broadcast %200 : vector<1x128xi1> to vector<48x128xi1>
      %202 = arith.select %201, %183, %184 : vector<48x128xi1>, vector<48x128xf32>
      %203 = vector.broadcast %187 : vector<1x128xf32> to vector<48x128xf32>
      %204 = arith.mulf %202, %203 : vector<48x128xf32>
      %205 = vector.broadcast %188 : vector<1x128xf32> to vector<48x128xf32>
      %206 = arith.addf %204, %205 : vector<48x128xf32>
      %207 = tpu.concatenate %197, %206 in 1 : vector<48x128xf32>, vector<48x128xf32> -> vector<48x256xf32>
      %208 = arith.truncf %207 : vector<48x256xf32> to vector<48x256xbf16>
      %c0_51 = arith.constant 0 : index
      %c0_52 = arith.constant 0 : index
      %209 = vector.load %arg9[%c0_51, %c0_52] : memref<256x128xbf16, #tpu.memory_space<vmem>>, vector<256x128xbf16>
      %cst_53 = arith.constant dense<0.000000e+00> : vector<48x128xf32>
      %210 = tpu.matmul %208, %209, %cst_53 {dimension_numbers = #tpu.dot_dimension_numbers<[1], [0], [0], [1], [0, 0, 1, 1], [], []>} : vector<48x256xbf16>, vector<256x128xbf16>, vector<48x128xf32> -> vector<48x128xf32>
      %c0_54 = arith.constant 0 : index
      %c0_55 = arith.constant 0 : index
      %211 = vector.load %arg10[%c0_54, %c0_55] : memref<48x128xf32, #tpu.memory_space<vmem>>, vector<48x128xf32>
      tpu.vector_store %arg10[%c0_54, %c0_55], %210 {strides = array<i32>} : memref<48x128xf32, #tpu.memory_space<vmem>>, vector<48x128xf32>,
      %212 = vector.broadcast %16 : vector<48x1xf32> to vector<48x128xf32>
      %213 = arith.mulf %210, %212 : vector<48x128xf32>
      %c0_56 = arith.constant 0 : index
      %c0_57 = arith.constant 0 : index
      %214 = vector.load %arg15[%c0_56, %c0_57] : memref<2x128xf32, #tpu.memory_space<vmem>>, vector<1x128xf32>
      %cst_58 = arith.constant dense<0.000000e+00> : vector<128xf32>
      %215 = vector.multi_reduction <add>, %213, %cst_58 [0] : vector<48x128xf32> to vector<128xf32>
      %216 = vector.shape_cast %215 : vector<128xf32> to vector<1x128xf32>
      %217 = arith.addf %214, %216 : vector<1x128xf32>
      %c0_59 = arith.constant 0 : index
      %c0_60 = arith.constant 0 : index
      %218 = vector.load %arg15[%c0_59, %c0_60] : memref<2x128xf32, #tpu.memory_space<vmem>>, vector<1x128xf32>
      tpu.vector_store %arg15[%c0_59, %c0_60], %217 {strides = array<i32>} : memref<2x128xf32, #tpu.memory_space<vmem>>, vector<1x128xf32>,
      %c1_61 = arith.constant 1 : index
      %c0_62 = arith.constant 0 : index
      %219 = vector.load %arg15[%c1_61, %c0_62] : memref<2x128xf32, #tpu.memory_space<vmem>>, vector<1x128xf32>
      %220 = arith.mulf %210, %213 : vector<48x128xf32>
      %cst_63 = arith.constant dense<0.000000e+00> : vector<128xf32>
      %221 = vector.multi_reduction <add>, %220, %cst_63 [0] : vector<48x128xf32> to vector<128xf32>
      %222 = vector.shape_cast %221 : vector<128xf32> to vector<1x128xf32>
      %223 = arith.addf %219, %222 : vector<1x128xf32>
      %c1_64 = arith.constant 1 : index
      %c0_65 = arith.constant 0 : index
      %224 = vector.load %arg15[%c1_64, %c0_65] : memref<2x128xf32, #tpu.memory_space<vmem>>, vector<1x128xf32>
      tpu.vector_store %arg15[%c1_64, %c0_65], %223 {strides = array<i32>} : memref<2x128xf32, #tpu.memory_space<vmem>>, vector<1x128xf32>,
      %c2_i32_66 = arith.constant 2 : i32
      %225 = arith.cmpi eq, %arg1, %c2_i32_66 : i32
      %226 = arith.extui %225 : i1 to i32
      %c0_i32_67 = arith.constant 0 : i32
      %227 = arith.cmpi ne, %226, %c0_i32_67 : i32
      scf.if %227 {
        %c0_68 = arith.constant 0 : index
        %c0_69 = arith.constant 0 : index
        %228 = vector.load %arg15[%c0_68, %c0_69] : memref<2x128xf32, #tpu.memory_space<vmem>>, vector<1x128xf32>
        %cst_70 = arith.constant 7.812500e-03 : f32
        %229 = vector.broadcast %cst_70 : f32 to vector<1x128xf32>
        %230 = arith.mulf %228, %229 : vector<1x128xf32>
        %c1_71 = arith.constant 1 : index
        %c0_72 = arith.constant 0 : index
        %231 = vector.load %arg15[%c1_71, %c0_72] : memref<2x128xf32, #tpu.memory_space<vmem>>, vector<1x128xf32>
        %cst_73 = arith.constant 7.812500e-03 : f32
        %232 = vector.broadcast %cst_73 : f32 to vector<1x128xf32>
        %233 = arith.mulf %231, %232 : vector<1x128xf32>
        %234 = arith.mulf %230, %230 : vector<1x128xf32>
        %235 = arith.subf %233, %234 : vector<1x128xf32>
        %cst_74 = arith.constant 0.000000e+00 : f32
        %236 = vector.broadcast %cst_74 : f32 to vector<1x128xf32>
        %237 = arith.maximumf %235, %236 : vector<1x128xf32>
        %c0_75 = arith.constant 0 : index
        %c0_76 = arith.constant 0 : index
        %238 = vector.load %arg8[%c0_75, %c0_76] : memref<2x128xf32, #tpu.memory_space<vmem>>, vector<1x128xf32>
        %cst_77 = arith.constant 9.99999974E-6 : f32
        %239 = vector.broadcast %cst_77 : f32 to vector<1x128xf32>
        %240 = arith.addf %237, %239 : vector<1x128xf32>
        %241 = math.rsqrt %240 : vector<1x128xf32>
        %242 = arith.mulf %238, %241 : vector<1x128xf32>
        %c0_78 = arith.constant 0 : index
        %c0_79 = arith.constant 0 : index
        %243 = vector.load %arg11[%c0_78, %c0_79] : memref<2x128xf32, #tpu.memory_space<vmem>>, vector<1x128xf32>
        tpu.vector_store %arg11[%c0_78, %c0_79], %242 {strides = array<i32>} : memref<2x128xf32, #tpu.memory_space<vmem>>, vector<1x128xf32>,
        %c1_80 = arith.constant 1 : index
        %c0_81 = arith.constant 0 : index
        %244 = vector.load %arg8[%c1_80, %c0_81] : memref<2x128xf32, #tpu.memory_space<vmem>>, vector<1x128xf32>
        %245 = arith.mulf %230, %242 : vector<1x128xf32>
        %246 = arith.subf %244, %245 : vector<1x128xf32>
        %c1_82 = arith.constant 1 : index
        %c0_83 = arith.constant 0 : index
        %247 = vector.load %arg11[%c1_82, %c0_83] : memref<2x128xf32, #tpu.memory_space<vmem>>, vector<1x128xf32>
        tpu.vector_store %arg11[%c1_82, %c0_83], %246 {strides = array<i32>} : memref<2x128xf32, #tpu.memory_space<vmem>>, vector<1x128xf32>,
      } else {
      }
    } else {
    }
    return
  }
  func.func @transform_0(%arg0: i32, %arg1: i32) -> i32 {
    %c0_i32 = arith.constant 0 : i32
    %c0_i32_0 = arith.constant 0 : i32
    return %c0_i32 : i32
  }
  func.func @transform_1(%arg0: i32, %arg1: i32) -> i32 {
    %c0_i32 = arith.constant 0 : i32
    %c0_i32_0 = arith.constant 0 : i32
    return %c0_i32 : i32
  }
  func.func @transform_2(%arg0: i32, %arg1: i32) -> i32 {
    %c0_i32 = arith.constant 0 : i32
    %c0_i32_0 = arith.constant 0 : i32
    return %c0_i32 : i32
  }
  func.func @transform_3(%arg0: i32, %arg1: i32) -> i32 {
    %c0_i32 = arith.constant 0 : i32
    %c0_i32_0 = arith.constant 0 : i32
    return %c0_i32 : i32
  }
  func.func @transform_4(%arg0: i32, %arg1: i32) -> (i32, i32, i32) {
    %c0_i32 = arith.constant 0 : i32
    %c0_i32_0 = arith.constant 0 : i32
    %c0_i32_1 = arith.constant 0 : i32
    return %c0_i32, %arg1, %c0_i32_0 : i32, i32, i32
  }
  func.func @transform_5(%arg0: i32, %arg1: i32) -> (i32, i32) {
    %c0_i32 = arith.constant 0 : i32
    %c0_i32_0 = arith.constant 0 : i32
    %c0_i32_1 = arith.constant 0 : i32
    return %c0_i32, %c0_i32_0 : i32, i32
  }
  func.func @transform_6(%arg0: i32, %arg1: i32) -> (i32, i32) {
    %c0_i32 = arith.constant 0 : i32
    %c0_i32_0 = arith.constant 0 : i32
    %c0_i32_1 = arith.constant 0 : i32
    return %c0_i32, %c0_i32_0 : i32, i32
  }
  func.func @transform_7(%arg0: i32, %arg1: i32) -> (i32, i32) {
    %c0_i32 = arith.constant 0 : i32
    %c0_i32_0 = arith.constant 0 : i32
    %c0_i32_1 = arith.constant 0 : i32
    return %c0_i32, %c0_i32_0 : i32, i32
  }
  func.func @transform_8(%arg0: i32, %arg1: i32) -> (i32, i32) {
    %0 = arith.muli %arg0, %arg1 : i32
    %c0_i32 = arith.constant 0 : i32
    %c0_i32_0 = arith.constant 0 : i32
    return %0, %c0_i32 : i32, i32
  }
  func.func @transform_9(%arg0: i32, %arg1: i32) -> (i32, i32) {
    %c0_i32 = arith.constant 0 : i32
    %c0_i32_0 = arith.constant 0 : i32
    %c0_i32_1 = arith.constant 0 : i32
    return %c0_i32, %c0_i32_0 : i32, i32
  }
}

</mosaic_0001>

<llo_original>
// kernel: spectral_encoder_forward.3
$region0: #{spectral_encoder_forward.3}
  #allocation0 [shape = 'u32[]', space=smem, size = 0x4, offset = 0x4, fixed_abs, tag = 'smem constant byte address 0x4 - core index']
  #allocation1 [shape = 'u32[144,128]{1,0:T(1,128)}', space=vmem, size = 0x12000, scoped, tag = 'internal scratch']
  %s0 = inlined_call_operand.vmem [shape: f32[2,128], index: 0, kind: input, shape index: {}]
  %s1 = inlined_call_operand.vmem [shape: f32[144,128], index: 1, kind: input, shape index: {}]
  %s2 = inlined_call_operand.vmem [shape: f32[144,128], index: 2, kind: output, shape index: {}]
  %s3 = sld [smem:[#allocation0]]
  $region41: #{spectral_encoder_forward.3} parent=0
    _
  %s5 = ssub.s32 1, %s3
  %s6 = scalar_select 0, %s5, %s3
  loop: start=0, step=1, limit=5
  $region2: #{spectral_encoder_forward.3} parent=0 // loop_pre_header
    _
  $region3: #{spectral_encoder_forward.3} parent=0 // loop_header
    %s8 = sphi 0, %s12
    %p9 = scmp.ge.s32.totalorder %s8, 5
    %s16 = sphi 0, %s16
    %s18 = sphi 0, %s16
    %s19 = sphi 0, %s18
    %s33 = sphi 0, %s19
    %s39 = sphi 0, %s41
    %s42 = sphi 0, %s39
    %s43 = sphi 0, %s42
    %s59 = sphi 0, %s43
    %s65 = sphi 0, %s67
    %s68 = sphi 0, %s65
    %s69 = sphi 0, %s68
    %s85 = sphi 0, %s69
  $region4: #{spectral_encoder_forward.3} parent=0 // loop_header_branch
    %11 = sbr.rel (%p9) target = $region8
  $region5: #{spectral_encoder_forward.3} parent=0 // loop_body
    %s13 = ssub.s32 %s8, 1
    %s14 = ssub.s32 %s8, 2
    %s15 = sadd.s32 %s8, 1
    %s17 = sadd.s32 %s16, 1
    %p20 = scmp.eq.s32.totalorder %s8, 2
    %p21 = scmp.ne.s32.totalorder %s16, %s18
    %p22 = scmp.eq.s32.totalorder %s8, 0
    %p23 = por %p21, %p22
    %p24 = scmp.ne.s32.totalorder %s16, %s18
    %p25 = scmp.eq.s32.totalorder %s13, 2
    %p26 = por %p24, %p25
    %p27 = scmp.ne.s32.totalorder %s18, %s19
    %p28 = scmp.eq.s32.totalorder %s13, 0
    %p29 = por %p27, %p28
    %p30 = scmp.ne.s32.totalorder %s18, %s19
    %p31 = scmp.eq.s32.totalorder %s14, 2
    %p32 = por %p30, %p31
    %p34 = scmp.ne.s32.totalorder %s19, %s33
    %p35 = scmp.eq.s32.totalorder %s14, 0
    %p36 = por %p34, %p35
    %s37 = ssub.s32 %s8, %s15
    %p38 = scmp.eq.s32.totalorder %s37, 0
    %s40 = sadd.s32 %s39, 1
    %s41 = scalar_select %p38, %s39, %s40
    %p44 = pneg %p38
    %p45 = scmp.eq.s32.totalorder %s8, 2
    %p46 = por %p44, %p45
    %p47 = scmp.ne.s32.totalorder %s39, %s42
    %p48 = scmp.eq.s32.totalorder %s8, 0
    %p49 = por %p47, %p48
    %p50 = scmp.ne.s32.totalorder %s39, %s42
    %p51 = scmp.eq.s32.totalorder %s13, 2
    %p52 = por %p50, %p51
    %p53 = scmp.ne.s32.totalorder %s42, %s43
    %p54 = scmp.eq.s32.totalorder %s13, 0
    %p55 = por %p53, %p54
    %p56 = scmp.ne.s32.totalorder %s42, %s43
    %p57 = scmp.eq.s32.totalorder %s14, 2
    %p58 = por %p56, %p57
    %p60 = scmp.ne.s32.totalorder %s43, %s59
    %p61 = scmp.eq.s32.totalorder %s14, 0
    %p62 = por %p60, %p61
    %s63 = ssub.s32 %s8, %s15
    %p64 = scmp.eq.s32.totalorder %s63, 0
    %s66 = sadd.s32 %s65, 1
    %s67 = scalar_select %p64, %s65, %s66
    %p70 = pneg %p64
    %p71 = scmp.eq.s32.totalorder %s8, 2
    %p72 = por %p70, %p71
    %p73 = scmp.ne.s32.totalorder %s65, %s68
    %p74 = scmp.eq.s32.totalorder %s8, 0
    %p75 = por %p73, %p74
    %p76 = scmp.ne.s32.totalorder %s65, %s68
    %p77 = scmp.eq.s32.totalorder %s13, 2
    %p78 = por %p76, %p77
    %p79 = scmp.ne.s32.totalorder %s68, %s69
    %p80 = scmp.eq.s32.totalorder %s13, 0
    %p81 = por %p79, %p80
    %p82 = scmp.ne.s32.totalorder %s68, %s69
    %p83 = scmp.eq.s32.totalorder %s14, 2
    %p84 = por %p82, %p83
    %p86 = scmp.ne.s32.totalorder %s69, %s85
    %p87 = scmp.eq.s32.totalorder %s14, 0
    %p88 = por %p86, %p87
    %p89 = scmp.le.s32.totalorder 1, %s8
    %p90 = scmp.lt.s32.totalorder %s8, 4
    %p91 = pnand %p89, %p90
    %p92 = pneg %p91
    // Predicated region
    $region9: #{spectral_encoder_forward.3} parent=5 // pred_check
      _
    $region10: #{spectral_encoder_forward.3} parent=5 // pred_check_branch
      %94 = sbr.rel (%p91) target = $region12
    $region11: #{spectral_encoder_forward.3} parent=5 // pred_region
      %s95 = ssub.s32 %s8, 1
      // Predicated region
      $region13: #{spectral_encoder_forward.3} parent=11 // pred_check
        %p96 = pneg %p29
      $region14: #{spectral_encoder_forward.3} parent=11 // pred_check_branch
        %98 = sbr.rel (%p96) target = $region16
      $region15: #{spectral_encoder_forward.3} parent=11 // pred_region
        _
      $region16: #{spectral_encoder_forward.3} parent=11 // pred_fallthru
        _
    $region12: #{spectral_encoder_forward.3} parent=5 // pred_fallthru
      _
    %p99 = scmp.lt.s32.totalorder %s8, 3
    // Predicated region
    $region17: #{spectral_encoder_forward.3} parent=5 // pred_check
      %p100 = pneg %p99
    $region18: #{spectral_encoder_forward.3} parent=5 // pred_check_branch
      %102 = sbr.rel (%p100) target = $region20
    $region19: #{spectral_encoder_forward.3} parent=5 // pred_region
      // Predicated region
      $region21: #{spectral_encoder_forward.3} parent=19 // pred_check
        %p103 = pneg %p49
      $region22: #{spectral_encoder_forward.3} parent=19 // pred_check_branch
        %105 = sbr.rel (%p103) target = $region24
      $region23: #{spectral_encoder_forward.3} parent=19 // pred_region
        %s106 = smul.u32 6, %s8
        %p107 = scmp.lt.s32.totalorder %s106, 17
        %s108 = scalar_select %p107, %s106, 17
        %s109 = smul.addr %s108, 8
        %s110 = scalar_lea.vmem %s1, %s109
        %s111 = smul.u32 6, %s8
      $region24: #{spectral_encoder_forward.3} parent=19 // pred_fallthru
        _
    $region20: #{spectral_encoder_forward.3} parent=5 // pred_fallthru
      _
    %p112 = scmp.le.s32.totalorder 1, %s8
    %p113 = scmp.lt.s32.totalorder %s8, 4
    %p114 = pnand %p112, %p113
    %p115 = pneg %p114
    // Predicated region
    $region25: #{spectral_encoder_forward.3} parent=5 // pred_check
      _
    $region26: #{spectral_encoder_forward.3} parent=5 // pred_check_branch
      %117 = sbr.rel (%p114) target = $region28
    $region27: #{spectral_encoder_forward.3} parent=5 // pred_region
      %s118 = ssub.s32 %s8, 1
      %p119 = pneg %p29
      %p120 = pneg %p26
      %s121 = smul.u32 6, %s13
      %p122 = scmp.lt.s32.totalorder %s121, 17
      %s123 = scalar_select %p122, %s121, 17
      %s124 = smul.addr %s123, 8
      %s125 = scalar_lea.vmem %s1, %s124
      %p126 = pneg %p55
      %p127 = pneg %p52
      %p128 = pneg %p81
      %p129 = pneg %p78
      %s130 = smul.u32 6, %s13
      %p131 = scmp.lt.s32.totalorder %s130, 17
      %s132 = scalar_select %p131, %s130, 17
      %s133 = smul.addr %s132, 8
      %s134 = scalar_lea.vmem %s2, %s133
      %s135 = smul.u32 6, %s13
      %p136 = scmp.lt.s32.totalorder %s135, 17
      %s137 = scalar_select %p136, %s135, 17
      %s138 = smul.addr %s137, 8
      %s139 = scalar_lea.vmem %s1, %s138
      %s140 = smul.u32 6, %s13
      %s141 = smul.u32 6, %s13
      %p142 = scmp.lt.s32.totalorder %s141, 17
      %s143 = scalar_select %p142, %s141, 17
      %s144 = smul.addr %s143, 8
      %s145 = scalar_lea.vmem %s2, %s144
      %s146 = smul.u32 6, %s13
      %v147 = vld [vmem:[%s139] sm:$0xff]
      %v148 = vld [vmem:[%s139 + $0x8] sm:$0xff]
      %v149 = vld [vmem:[%s139 + $0x10] sm:$0xff]
      %v150 = vld [vmem:[%s139 + $0x18] sm:$0xff]
      %v151 = vld [vmem:[%s139 + $0x20] sm:$0xff]
      %v152 = vld [vmem:[%s139 + $0x28] sm:$0xff]
      %v153 = vld [vmem:[%s0] sm:$0x1]
      %v154 = vlaneseq
      %v155 = vshrl.u32 %v154, 7
      %v156 = vsub.s32 0, %v155
      %v157 = vrot.slane %v153, %v156
      %v158 = vmul.f32 %v147, %v157
      %v159 = vmul.f32 %v148, %v157
      %v160 = vmul.f32 %v149, %v157
      %v161 = vmul.f32 %v150, %v157
      %v162 = vmul.f32 %v151, %v157
      %v163 = vmul.f32 %v152, %v157
      %v164 = vld [vmem:[%s0 + $0x1] sm:$0x1]
      %v165 = vlaneseq
      %v166 = vshrl.u32 %v165, 7
      %v167 = vsub.s32 0, %v166
      %v168 = vrot.slane %v164, %v167
      %v169 = vadd.f32 %v158, %v168
      %v170 = vadd.f32 %v159, %v168
      %v171 = vadd.f32 %v160, %v168
      %v172 = vadd.f32 %v161, %v168
      %v173 = vadd.f32 %v162, %v168
      %v174 = vadd.f32 %v163, %v168
      %v175 = vmax.f32 %v169, 0.0
      %v176 = vmax.f32 %v170, 0.0
      %v177 = vmax.f32 %v171, 0.0
      %v178 = vmax.f32 %v172, 0.0
      %v179 = vmax.f32 %v173, 0.0
      %v180 = vmax.f32 %v174, 0.0
      %181 = vst [vmem:[%s145] sm:$0xff] %v175
      %182 = vst [vmem:[%s145 + $0x8] sm:$0xff] %v176
      %183 = vst [vmem:[%s145 + $0x10] sm:$0xff] %v177
      %184 = vst [vmem:[%s145 + $0x18] sm:$0xff] %v178
      %185 = vst [vmem:[%s145 + $0x20] sm:$0xff] %v179
      %186 = vst [vmem:[%s145 + $0x28] sm:$0xff] %v180
      %s187 = smul.u32 6, %s13
      %p188 = scmp.lt.s32.totalorder %s187, 17
      %s189 = scalar_select %p188, %s187, 17
      %s190 = smul.addr %s189, 8
      %s191 = scalar_lea.vmem %s2, %s190
      // Predicated region
      $region29: #{spectral_encoder_forward.3} parent=27 // pred_check
        %p192 = pneg %p78
      $region30: #{spectral_encoder_forward.3} parent=27 // pred_check_branch
        %194 = sbr.rel (%p192) target = $region32
      $region31: #{spectral_encoder_forward.3} parent=27 // pred_region
        %s195 = smul.u32 6, %s13
      $region32: #{spectral_encoder_forward.3} parent=27 // pred_fallthru
        _
    $region28: #{spectral_encoder_forward.3} parent=5 // pred_fallthru
      _
    %p196 = scmp.le.s32.totalorder 2, %s8
    // Predicated region
    $region33: #{spectral_encoder_forward.3} parent=5 // pred_check
      %p197 = pneg %p196
    $region34: #{spectral_encoder_forward.3} parent=5 // pred_check_branch
      %199 = sbr.rel (%p197) target = $region36
    $region35: #{spectral_encoder_forward.3} parent=5 // pred_region
      %s200 = ssub.s32 %s8, 2
      // Predicated region
      $region37: #{spectral_encoder_forward.3} parent=35 // pred_check
        %p201 = pneg %p84
      $region38: #{spectral_encoder_forward.3} parent=35 // pred_check_branch
        %203 = sbr.rel (%p201) target = $region40
      $region39: #{spectral_encoder_forward.3} parent=35 // pred_region
        %s204 = smul.u32 6, %s14
        %p205 = scmp.lt.s32.totalorder %s204, 17
        %s206 = scalar_select %p205, %s204, 17
        %s207 = smul.addr %s206, 8
        %s208 = scalar_lea.vmem %s2, %s207
      $region40: #{spectral_encoder_forward.3} parent=35 // pred_fallthru
        _
    $region36: #{spectral_encoder_forward.3} parent=5 // pred_fallthru
      _
  $region6: #{spectral_encoder_forward.3} parent=0 // loop_footer
    %s12 = sadd.s32 1, %s8
  $region7: #{spectral_encoder_forward.3} parent=0 // loop_footer_branch
    %7 = sbr.rel target = $region3
  $region8: #{spectral_encoder_forward.3} parent=0 // loop_exit
    _

// kernel: spectral_encoder_forward.2
$region0: #{spectral_encoder_forward.2}
  #allocation0 [shape = 'u32[]', space=smem, size = 0x4, offset = 0x4, fixed_abs, tag = 'smem constant byte address 0x4 - core index']
  #allocation1 [shape = 'u32[144,128]{1,0:T(1,128)}', space=vmem, size = 0x12000, scoped, tag = 'internal scratch']
  #allocation2 [shape = 'f32[2,128]{1,0:T(2,128)}', space=vmem, size = 0x400, scoped, tag = 'scratch operand']
  #allocation3 [shape = 'f32[2,128]{1,0:T(2,128)}', space=vmem, size = 0x400, scoped, tag = 'scratch operand']
  #allocation4 [shape = 'f32[4,128]{1,0:T(4,128)}', space=vmem, size = 0x800, scoped, tag = 'scratch operand']
  #allocation5 [shape = 'f32[2,128]{1,0:T(2,128)}', space=vmem, size = 0x400, scoped, tag = 'scratch operand']
  #allocation6 [shape = 'f32[1]{0:T(128)S(6)}', space=smem, size = 0x200, scoped, tag = 'scoped memory for spectral_encoder_forward.2']
  #allocation7 [shape = 'f32[1]{0:T(128)S(6)}', space=smem, size = 0x200, scoped, tag = 'scoped memory for spectral_encoder_forward.2']
  %s0 = inlined_call_operand.vmem [shape: f32[3], index: 0, kind: input, shape index: {}]
  %s1 = inlined_call_operand.<no memory space> [shape: f32[1], index: 1, kind: input, shape index: {}]
  %s2 = inlined_call_operand.vmem [shape: f32[5], index: 2, kind: input, shape index: {}]
  %s3 = inlined_call_operand.<no memory space> [shape: f32[1], index: 3, kind: input, shape index: {}]
  %s4 = inlined_call_operand.vmem [shape: f32[4,144,128], index: 4, kind: input, shape index: {}]
  %s5 = inlined_call_operand.vmem [shape: f32[4,128], index: 5, kind: input, shape index: {}]
  %s6 = inlined_call_operand.vmem [shape: f32[2,128], index: 6, kind: input, shape index: {}]
  %s7 = inlined_call_operand.vmem [shape: bf16[256,128], index: 7, kind: input, shape index: {}]
  %s8 = inlined_call_operand.vmem [shape: f32[144,128], index: 8, kind: output, shape index: {0}]
  %s9 = inlined_call_operand.vmem [shape: f32[2,128], index: 9, kind: output, shape index: {1}]
  %10 = xla_tuple %s8, %s9
  %s11 = sld [smem:[#allocation0]]
  $region143: #{spectral_encoder_forward.2} parent=0
    _
  %s13 = ssub.s32 1, %s11
  %s14 = scalar_select 0, %s13, %s11
  %15 = sst [smem:[#allocation6]] %s1
  %16 = sst [smem:[#allocation7]] %s3
  $region1: #{spectral_encoder_forward.2} parent=0
    #allocation8 [shape = 'u8[512]{0}', space=smem, size = 0x200, scoped, tag = 'input window, operand 0, single buffered']
    #allocation9 [shape = 's32[2]{0}', space=sflag, size = 0x8, scoped, tag = 'scoped memory for spectral_encoder_forward.2']
    #allocation10 [shape = 'u8[512]{0}', space=smem, size = 0x200, scoped, tag = 'input window, operand 2, single buffered']
    #allocation11 [shape = 's32[1]{0}', space=sflag, size = 0x4, scoped, tag = 'scoped memory for spectral_encoder_forward.2']
    #allocation12 [shape = 'u8[196608]{0}', space=vmem, size = 0x30000, scoped, tag = 'input window, operand 4']
    %17 = vsyncpa [#allocation9], 0
    %18 = vsyncpa [#allocation11], 0
    loop: start=0, step=1, limit=8
    $region2: #{spectral_encoder_forward.2} parent=1 // loop_pre_header
      _
    $region3: #{spectral_encoder_forward.2} parent=1 // loop_header
      %s20 = sphi 0, %s24
      %p21 = scmp.ge.s32.totalorder %s20, 8
      %s27 = sphi 0, %s39
      %s28 = sphi 0, %s35
      %s29 = sphi 0, %s27
      %s30 = sphi 0, %s28
      %s31 = sphi 0, %s29
      %s32 = sphi 0, %s30
      %s40 = sphi 0, %s40
      %s42 = sphi 0, %s40
      %s43 = sphi 0, %s42
      %s57 = sphi 0, %s43
      %s61 = sphi 0, %s61
      %s63 = sphi 0, %s61
      %s64 = sphi 0, %s63
      %s78 = sphi 0, %s64
      %s82 = sphi 0, %s82
      %s84 = sphi 0, %s82
      %s85 = sphi 0, %s84
      %s99 = sphi 0, %s85
      %s103 = sphi 0, %s103
      %s105 = sphi 0, %s103
      %s106 = sphi 0, %s105
      %s120 = sphi 0, %s106
      %s126 = sphi 0, %s128
      %s129 = sphi 0, %s126
      %s130 = sphi 0, %s129
      %s146 = sphi 0, %s130
      %s150 = sphi 0, %s150
      %s152 = sphi 0, %s150
      %s153 = sphi 0, %s152
      %s167 = sphi 0, %s153
      %s171 = sphi 0, %s171
      %s173 = sphi 0, %s171
      %s174 = sphi 0, %s173
      %s188 = sphi 0, %s174
      %s192 = sphi 0, %s192
      %s194 = sphi 0, %s192
      %s195 = sphi 0, %s194
      %s209 = sphi 0, %s195
      %s217 = sphi 0, %s219
      %s220 = sphi 0, %s217
      %s221 = sphi 0, %s220
      %s237 = sphi 0, %s221
      %s241 = sphi 0, %s241
      %s243 = sphi 0, %s241
      %s244 = sphi 0, %s243
      %s258 = sphi 0, %s244
    $region4: #{spectral_encoder_forward.2} parent=1 // loop_header_branch
      %23 = sbr.rel (%p21) target = $region8
    $region5: #{spectral_encoder_forward.2} parent=1 // loop_body
      %s25 = ssub.s32 %s20, 1
      %s26 = ssub.s32 %s20, 2
      %s33 = sadd.s32 1, %s28
      %p34 = scmp.ge.s32.totalorder %s33, 3
      %s35 = scalar_select %p34, 0, %s33
      %s36 = sadd.s32 1, %s27
      %s37 = scalar_select %p34, %s36, %s27
      %p38 = scmp.ge.s32.totalorder %s37, 2
      %s39 = scalar_select %p38, 0, %s37
      %s41 = sadd.s32 %s40, 1
      %p44 = scmp.eq.s32.totalorder %s20, 5
      %p45 = scmp.ne.s32.totalorder %s40, %s42
      %p46 = scmp.eq.s32.totalorder %s20, 0
      %p47 = por %p45, %p46
      %p48 = scmp.ne.s32.totalorder %s40, %s42
      %p49 = scmp.eq.s32.totalorder %s25, 5
      %p50 = por %p48, %p49
      %p51 = scmp.ne.s32.totalorder %s42, %s43
      %p52 = scmp.eq.s32.totalorder %s25, 0
      %p53 = por %p51, %p52
      %p54 = scmp.ne.s32.totalorder %s42, %s43
      %p55 = scmp.eq.s32.totalorder %s26, 5
      %p56 = por %p54, %p55
      %p58 = scmp.ne.s32.totalorder %s43, %s57
      %p59 = scmp.eq.s32.totalorder %s26, 0
      %p60 = por %p58, %p59
      %s62 = sadd.s32 %s61, 1
      %p65 = scmp.eq.s32.totalorder %s20, 5
      %p66 = scmp.ne.s32.totalorder %s61, %s63
      %p67 = scmp.eq.s32.totalorder %s20, 0
      %p68 = por %p66, %p67
      %p69 = scmp.ne.s32.totalorder %s61, %s63
      %p70 = scmp.eq.s32.totalorder %s25, 5
      %p71 = por %p69, %p70
      %p72 = scmp.ne.s32.totalorder %s63, %s64
      %p73 = scmp.eq.s32.totalorder %s25, 0
      %p74 = por %p72, %p73
      %p75 = scmp.ne.s32.totalorder %s63, %s64
      %p76 = scmp.eq.s32.totalorder %s26, 5
      %p77 = por %p75, %p76
      %p79 = scmp.ne.s32.totalorder %s64, %s78
      %p80 = scmp.eq.s32.totalorder %s26, 0
      %p81 = por %p79, %p80
      %s83 = sadd.s32 %s82, 1
      %p86 = scmp.eq.s32.totalorder %s20, 5
      %p87 = scmp.ne.s32.totalorder %s82, %s84
      %p88 = scmp.eq.s32.totalorder %s20, 0
      %p89 = por %p87, %p88
      %p90 = scmp.ne.s32.totalorder %s82, %s84
      %p91 = scmp.eq.s32.totalorder %s25, 5
      %p92 = por %p90, %p91
      %p93 = scmp.ne.s32.totalorder %s84, %s85
      %p94 = scmp.eq.s32.totalorder %s25, 0
      %p95 = por %p93, %p94
      %p96 = scmp.ne.s32.totalorder %s84, %s85
      %p97 = scmp.eq.s32.totalorder %s26, 5
      %p98 = por %p96, %p97
      %p100 = scmp.ne.s32.totalorder %s85, %s99
      %p101 = scmp.eq.s32.totalorder %s26, 0
      %p102 = por %p100, %p101
      %s104 = sadd.s32 %s103, 1
      %p107 = scmp.eq.s32.totalorder %s20, 5
      %p108 = scmp.ne.s32.totalorder %s103, %s105
      %p109 = scmp.eq.s32.totalorder %s20, 0
      %p110 = por %p108, %p109
      %p111 = scmp.ne.s32.totalorder %s103, %s105
      %p112 = scmp.eq.s32.totalorder %s25, 5
      %p113 = por %p111, %p112
      %p114 = scmp.ne.s32.totalorder %s105, %s106
      %p115 = scmp.eq.s32.totalorder %s25, 0
      %p116 = por %p114, %p115
      %p117 = scmp.ne.s32.totalorder %s105, %s106
      %p118 = scmp.eq.s32.totalorder %s26, 5
      %p119 = por %p117, %p118
      %p121 = scmp.ne.s32.totalorder %s106, %s120
      %p122 = scmp.eq.s32.totalorder %s26, 0
      %p123 = por %p121, %p122
      %s124 = ssub.s32 %s28, %s35
      %p125 = scmp.eq.s32.totalorder %s124, 0
      %s127 = sadd.s32 %s126, 1
      %s128 = scalar_select %p125, %s126, %s127
      %p131 = pneg %p125
      %p132 = scmp.eq.s32.totalorder %s20, 5
      %p133 = por %p131, %p132
      %p134 = scmp.ne.s32.totalorder %s126, %s129
      %p135 = scmp.eq.s32.totalorder %s20, 0
      %p136 = por %p134, %p135
      %p137 = scmp.ne.s32.totalorder %s126, %s129
      %p138 = scmp.eq.s32.totalorder %s25, 5
      %p139 = por %p137, %p138
      %p140 = scmp.ne.s32.totalorder %s129, %s130
      %p141 = scmp.eq.s32.totalorder %s25, 0
      %p142 = por %p140, %p141
      %p143 = scmp.ne.s32.totalorder %s129, %s130
      %p144 = scmp.eq.s32.totalorder %s26, 5
      %p145 = por %p143, %p144
      %p147 = scmp.ne.s32.totalorder %s130, %s146
      %p148 = scmp.eq.s32.totalorder %s26, 0
      %p149 = por %p147, %p148
      %s151 = sadd.s32 %s150, 1
      %p154 = scmp.eq.s32.totalorder %s20, 5
      %p155 = scmp.ne.s32.totalorder %s150, %s152
      %p156 = scmp.eq.s32.totalorder %s20, 0
      %p157 = por %p155, %p156
      %p158 = scmp.ne.s32.totalorder %s150, %s152
      %p159 = scmp.eq.s32.totalorder %s25, 5
      %p160 = por %p158, %p159
      %p161 = scmp.ne.s32.totalorder %s152, %s153
      %p162 = scmp.eq.s32.totalorder %s25, 0
      %p163 = por %p161, %p162
      %p164 = scmp.ne.s32.totalorder %s152, %s153
      %p165 = scmp.eq.s32.totalorder %s26, 5
      %p166 = por %p164, %p165
      %p168 = scmp.ne.s32.totalorder %s153, %s167
      %p169 = scmp.eq.s32.totalorder %s26, 0
      %p170 = por %p168, %p169
      %s172 = sadd.s32 %s171, 1
      %p175 = scmp.eq.s32.totalorder %s20, 5
      %p176 = scmp.ne.s32.totalorder %s171, %s173
      %p177 = scmp.eq.s32.totalorder %s20, 0
      %p178 = por %p176, %p177
      %p179 = scmp.ne.s32.totalorder %s171, %s173
      %p180 = scmp.eq.s32.totalorder %s25, 5
      %p181 = por %p179, %p180
      %p182 = scmp.ne.s32.totalorder %s173, %s174
      %p183 = scmp.eq.s32.totalorder %s25, 0
      %p184 = por %p182, %p183
      %p185 = scmp.ne.s32.totalorder %s173, %s174
      %p186 = scmp.eq.s32.totalorder %s26, 5
      %p187 = por %p185, %p186
      %p189 = scmp.ne.s32.totalorder %s174, %s188
      %p190 = scmp.eq.s32.totalorder %s26, 0
      %p191 = por %p189, %p190
      %s193 = sadd.s32 %s192, 1
      %p196 = scmp.eq.s32.totalorder %s20, 5
      %p197 = scmp.ne.s32.totalorder %s192, %s194
      %p198 = scmp.eq.s32.totalorder %s20, 0
      %p199 = por %p197, %p198
      %p200 = scmp.ne.s32.totalorder %s192, %s194
      %p201 = scmp.eq.s32.totalorder %s25, 5
      %p202 = por %p200, %p201
      %p203 = scmp.ne.s32.totalorder %s194, %s195
      %p204 = scmp.eq.s32.totalorder %s25, 0
      %p205 = por %p203, %p204
      %p206 = scmp.ne.s32.totalorder %s194, %s195
      %p207 = scmp.eq.s32.totalorder %s26, 5
      %p208 = por %p206, %p207
      %p210 = scmp.ne.s32.totalorder %s195, %s209
      %p211 = scmp.eq.s32.totalorder %s26, 0
      %p212 = por %p210, %p211
      %s213 = smul.u32 %s27, %s28
      %s214 = smul.u32 %s39, %s35
      %s215 = ssub.s32 %s213, %s214
      %p216 = scmp.eq.s32.totalorder %s215, 0
      %s218 = sadd.s32 %s217, 1
      %s219 = scalar_select %p216, %s217, %s218
      %p222 = pneg %p216
      %p223 = scmp.eq.s32.totalorder %s20, 5
      %p224 = por %p222, %p223
      %p225 = scmp.ne.s32.totalorder %s217, %s220
      %p226 = scmp.eq.s32.totalorder %s20, 0
      %p227 = por %p225, %p226
      %p228 = scmp.ne.s32.totalorder %s217, %s220
      %p229 = scmp.eq.s32.totalorder %s25, 5
      %p230 = por %p228, %p229
      %p231 = scmp.ne.s32.totalorder %s220, %s221
      %p232 = scmp.eq.s32.totalorder %s25, 0
      %p233 = por %p231, %p232
      %p234 = scmp.ne.s32.totalorder %s220, %s221
      %p235 = scmp.eq.s32.totalorder %s26, 5
      %p236 = por %p234, %p235
      %p238 = scmp.ne.s32.totalorder %s221, %s237
      %p239 = scmp.eq.s32.totalorder %s26, 0
      %p240 = por %p238, %p239
      %s242 = sadd.s32 %s241, 1
      %p245 = scmp.eq.s32.totalorder %s20, 5
      %p246 = scmp.ne.s32.totalorder %s241, %s243
      %p247 = scmp.eq.s32.totalorder %s20, 0
      %p248 = por %p246, %p247
      %p249 = scmp.ne.s32.totalorder %s241, %s243
      %p250 = scmp.eq.s32.totalorder %s25, 5
      %p251 = por %p249, %p250
      %p252 = scmp.ne.s32.totalorder %s243, %s244
      %p253 = scmp.eq.s32.totalorder %s25, 0
      %p254 = por %p252, %p253
      %p255 = scmp.ne.s32.totalorder %s243, %s244
      %p256 = scmp.eq.s32.totalorder %s26, 5
      %p257 = por %p255, %p256
      %p259 = scmp.ne.s32.totalorder %s244, %s258
      %p260 = scmp.eq.s32.totalorder %s26, 0
      %p261 = por %p259, %p260
      %p262 = scmp.le.s32.totalorder 1, %s20
      %p263 = scmp.lt.s32.totalorder %s20, 7
      %p264 = pnand %p262, %p263
      %p265 = pneg %p264
      // Predicated region
      $region9: #{spectral_encoder_forward.2} parent=5 // pred_check
        _
      $region10: #{spectral_encoder_forward.2} parent=5 // pred_check_branch
        %267 = sbr.rel (%p264) target = $region12
      $region11: #{spectral_encoder_forward.2} parent=5 // pred_region
        %s268 = ssub.s32 %s20, 1
        // Predicated region
        $region13: #{spectral_encoder_forward.2} parent=11 // pred_check
          %p269 = pneg %p53
        $region14: #{spectral_encoder_forward.2} parent=11 // pred_check_branch
          %271 = sbr.rel (%p269) target = $region16
        $region15: #{spectral_encoder_forward.2} parent=11 // pred_region
          %s273 = ssub.s32 16, 16
          %274 = vsyncadd [#allocation9], %s273
          %s276 = sshll.u32 %s0, 4
          %s277 = int_to_ptr.vmem [resolvable:$true] %s276
          %279 = dma.vmem_to_smem %s277, 16, [#allocation8], [#allocation9]
        $region16: #{spectral_encoder_forward.2} parent=11 // pred_fallthru
          _
        // Predicated region
        $region17: #{spectral_encoder_forward.2} parent=11 // pred_check
          %p280 = pneg %p74
        $region18: #{spectral_encoder_forward.2} parent=11 // pred_check_branch
          %282 = sbr.rel (%p280) target = $region20
        $region19: #{spectral_encoder_forward.2} parent=11 // pred_region
          _
        $region20: #{spectral_encoder_forward.2} parent=11 // pred_fallthru
          _
        // Predicated region
        $region21: #{spectral_encoder_forward.2} parent=11 // pred_check
          %p283 = pneg %p95
        $region22: #{spectral_encoder_forward.2} parent=11 // pred_check_branch
          %285 = sbr.rel (%p283) target = $region24
        $region23: #{spectral_encoder_forward.2} parent=11 // pred_region
          %s287 = ssub.s32 16, 16
          %288 = vsyncadd [#allocation11], %s287
          %s290 = sshll.u32 %s2, 4
          %s291 = int_to_ptr.vmem [resolvable:$true] %s290
          %293 = dma.vmem_to_smem %s291, 16, [#allocation10], [#allocation11]
        $region24: #{spectral_encoder_forward.2} parent=11 // pred_fallthru
          _
        // Predicated region
        $region25: #{spectral_encoder_forward.2} parent=11 // pred_check
          %p294 = pneg %p116
        $region26: #{spectral_encoder_forward.2} parent=11 // pred_check_branch
          %296 = sbr.rel (%p294) target = $region28
        $region27: #{spectral_encoder_forward.2} parent=11 // pred_region
          _
        $region28: #{spectral_encoder_forward.2} parent=11 // pred_fallthru
          _
        // Predicated region
        $region29: #{spectral_encoder_forward.2} parent=11 // pred_check
          %p297 = pneg %p163
        $region30: #{spectral_encoder_forward.2} parent=11 // pred_check_branch
          %299 = sbr.rel (%p297) target = $region32
        $region31: #{spectral_encoder_forward.2} parent=11 // pred_region
          _
        $region32: #{spectral_encoder_forward.2} parent=11 // pred_fallthru
          _
        // Predicated region
        $region33: #{spectral_encoder_forward.2} parent=11 // pred_check
          %p300 = pneg %p184
        $region34: #{spectral_encoder_forward.2} parent=11 // pred_check_branch
          %302 = sbr.rel (%p300) target = $region36
        $region35: #{spectral_encoder_forward.2} parent=11 // pred_region
          _
        $region36: #{spectral_encoder_forward.2} parent=11 // pred_fallthru
          _
        // Predicated region
        $region37: #{spectral_encoder_forward.2} parent=11 // pred_check
          %p303 = pneg %p205
        $region38: #{spectral_encoder_forward.2} parent=11 // pred_check_branch
          %305 = sbr.rel (%p303) target = $region40
        $region39: #{spectral_encoder_forward.2} parent=11 // pred_region
          _
        $region40: #{spectral_encoder_forward.2} parent=11 // pred_fallthru
          _
      $region12: #{spectral_encoder_forward.2} parent=5 // pred_fallthru
        _
      %p306 = scmp.lt.s32.totalorder %s20, 6
      // Predicated region
      $region41: #{spectral_encoder_forward.2} parent=5 // pred_check
        %p307 = pneg %p306
      $region42: #{spectral_encoder_forward.2} parent=5 // pred_check_branch
        %309 = sbr.rel (%p307) target = $region44
      $region43: #{spectral_encoder_forward.2} parent=5 // pred_region
        // Predicated region
        $region45: #{spectral_encoder_forward.2} parent=43 // pred_check
          %p310 = pneg %p136
        $region46: #{spectral_encoder_forward.2} parent=43 // pred_check_branch
          %312 = sbr.rel (%p310) target = $region48
        $region47: #{spectral_encoder_forward.2} parent=43 // pred_region
          %s313 = sand.u32 %s126, 1
          %s314 = sand.u32 %s126, 1
          %s315 = smul.addr %s314, 192
          %s316 = scalar_lea.vmem [#allocation12], %s315
          %s317 = smul.u32 6, %s28
          %s318 = smul.addr %s317, 8
          %s319 = scalar_lea.vmem %s4, %s318
          // Predicated region
          $region49: #{spectral_encoder_forward.2} parent=47 // pred_check
            _
          $region50: #{spectral_encoder_forward.2} parent=47 // pred_check_branch
            %321 = sbr.rel (0) target = $region52
          $region51: #{spectral_encoder_forward.2} parent=47 // pred_region
            // Predicated region
            $region53: #{spectral_encoder_forward.2} parent=51 // pred_check
              _
            $region54: #{spectral_encoder_forward.2} parent=51 // pred_check_branch
              %323 = sbr.rel (0) target = $region56
            $region55: #{spectral_encoder_forward.2} parent=51 // pred_region
              // Predicated region
              $region68: #{spectral_encoder_forward.2} parent=55 // pred_check
                _
              $region69: #{spectral_encoder_forward.2} parent=55 // pred_check_branch
                %385 = sbr.rel (0) target = $region71
              $region70: #{spectral_encoder_forward.2} parent=55 // pred_region
                loop: start=0, step=1, limit=1
                $region72: #{spectral_encoder_forward.2} parent=70 // loop_pre_header
                  _
                $region73: #{spectral_encoder_forward.2} parent=70 // loop_header
                  %s387 = sphi 0, %s391
                  %p388 = scmp.ge.s32.totalorder %s387, 1
                  %s392 = sphi %s319, %s319
                  %s393 = sphi %s316, %s316
                $region74: #{spectral_encoder_forward.2} parent=70 // loop_header_branch
                  %390 = sbr.rel (%p388) target = $region78
                $region75: #{spectral_encoder_forward.2} parent=70 // loop_body
                  %v394 = vld [vmem:[%s392] sm:$0xff]
                  %395 = vst [vmem:[%s393] sm:$0xff] %v394
                  %v396 = vld [vmem:[%s392 + $0x8] sm:$0xff]
                  %397 = vst [vmem:[%s393 + $0x8] sm:$0xff] %v396
                  %v398 = vld [vmem:[%s392 + $0x10] sm:$0xff]
                  %399 = vst [vmem:[%s393 + $0x10] sm:$0xff] %v398
                  %v400 = vld [vmem:[%s392 + $0x18] sm:$0xff]
                  %401 = vst [vmem:[%s393 + $0x18] sm:$0xff] %v400
                  %v402 = vld [vmem:[%s392 + $0x20] sm:$0xff]
                  %403 = vst [vmem:[%s393 + $0x20] sm:$0xff] %v402
                  %v404 = vld [vmem:[%s392 + $0x28] sm:$0xff]
                  %405 = vst [vmem:[%s393 + $0x28] sm:$0xff] %v404
                  %v406 = vld [vmem:[%s392 + $0x90] sm:$0xff]
                  %407 = vst [vmem:[%s393 + $0x30] sm:$0xff] %v406
                  %v408 = vld [vmem:[%s392 + $0x98] sm:$0xff]
                  %409 = vst [vmem:[%s393 + $0x38] sm:$0xff] %v408
                  %v410 = vld [vmem:[%s392 + $0xa0] sm:$0xff]
                  %411 = vst [vmem:[%s393 + $0x40] sm:$0xff] %v410
                  %v412 = vld [vmem:[%s392 + $0xa8] sm:$0xff]
                  %413 = vst [vmem:[%s393 + $0x48] sm:$0xff] %v412
                  %v414 = vld [vmem:[%s392 + $0xb0] sm:$0xff]
                  %415 = vst [vmem:[%s393 + $0x50] sm:$0xff] %v414
                  %v416 = vld [vmem:[%s392 + $0xb8] sm:$0xff]
                  %417 = vst [vmem:[%s393 + $0x58] sm:$0xff] %v416
                  %v418 = vld [vmem:[%s392 + $0x120] sm:$0xff]
                  %419 = vst [vmem:[%s393 + $0x60] sm:$0xff] %v418
                  %v420 = vld [vmem:[%s392 + $0x128] sm:$0xff]
                  %421 = vst [vmem:[%s393 + $0x68] sm:$0xff] %v420
                  %v422 = vld [vmem:[%s392 + $0x130] sm:$0xff]
                  %423 = vst [vmem:[%s393 + $0x70] sm:$0xff] %v422
                  %v424 = vld [vmem:[%s392 + $0x138] sm:$0xff]
                  %425 = vst [vmem:[%s393 + $0x78] sm:$0xff] %v424
                  %v426 = vld [vmem:[%s392 + $0x140] sm:$0xff]
                  %427 = vst [vmem:[%s393 + $0x80] sm:$0xff] %v426
                  %v428 = vld [vmem:[%s392 + $0x148] sm:$0xff]
                  %429 = vst [vmem:[%s393 + $0x88] sm:$0xff] %v428
                  %v430 = vld [vmem:[%s392 + $0x1b0] sm:$0xff]
                  %431 = vst [vmem:[%s393 + $0x90] sm:$0xff] %v430
                  %v432 = vld [vmem:[%s392 + $0x1b8] sm:$0xff]
                  %433 = vst [vmem:[%s393 + $0x98] sm:$0xff] %v432
                  %v434 = vld [vmem:[%s392 + $0x1c0] sm:$0xff]
                  %435 = vst [vmem:[%s393 + $0xa0] sm:$0xff] %v434
                  %v436 = vld [vmem:[%s392 + $0x1c8] sm:$0xff]
                  %437 = vst [vmem:[%s393 + $0xa8] sm:$0xff] %v436
                  %v438 = vld [vmem:[%s392 + $0x1d0] sm:$0xff]
                  %439 = vst [vmem:[%s393 + $0xb0] sm:$0xff] %v438
                  %v440 = vld [vmem:[%s392 + $0x1d8] sm:$0xff]
                  %441 = vst [vmem:[%s393 + $0xb8] sm:$0xff] %v440
                $region76: #{spectral_encoder_forward.2} parent=70 // loop_footer
                  %s391 = sadd.s32 1, %s387
                $region77: #{spectral_encoder_forward.2} parent=70 // loop_footer_branch
                  %386 = sbr.rel target = $region73
                $region78: #{spectral_encoder_forward.2} parent=70 // loop_exit
                  _
              $region71: #{spectral_encoder_forward.2} parent=55 // pred_fallthru
                _
              // Predicated region
              $region79: #{spectral_encoder_forward.2} parent=55 // pred_check
                _
              $region80: #{spectral_encoder_forward.2} parent=55 // pred_check_branch
                %443 = sbr.rel target = $region82
              $region81: #{spectral_encoder_forward.2} parent=55 // pred_region
                _
              $region82: #{spectral_encoder_forward.2} parent=55 // pred_fallthru
                _
            $region56: #{spectral_encoder_forward.2} parent=51 // pred_fallthru
              _
            // Predicated region
            $region57: #{spectral_encoder_forward.2} parent=51 // pred_check
              _
            $region58: #{spectral_encoder_forward.2} parent=51 // pred_check_branch
              %325 = sbr.rel target = $region60
            $region59: #{spectral_encoder_forward.2} parent=51 // pred_region
              %s327 = ssub.s32 256, 1
              loop: start=0, step=1, limit=1
              $region61: #{spectral_encoder_forward.2} parent=59 // loop_pre_header
                _
              $region62: #{spectral_encoder_forward.2} parent=59 // loop_header
                %s329 = sphi 0, %s333
                %p330 = scmp.ge.s32.totalorder %s329, 1
                %s334 = sphi %s319, %s319
                %s335 = sphi %s316, %s316
              $region63: #{spectral_encoder_forward.2} parent=59 // loop_header_branch
                %332 = sbr.rel (%p330) target = $region67
              $region64: #{spectral_encoder_forward.2} parent=59 // loop_body
                %v336 = vld [vmem:[%s334] sm:%s327]
                %337 = vst [vmem:[%s335] sm:%s327] %v336
                %v338 = vld [vmem:[%s334 + $0x8] sm:%s327]
                %339 = vst [vmem:[%s335 + $0x8] sm:%s327] %v338
                %v340 = vld [vmem:[%s334 + $0x10] sm:%s327]
                %341 = vst [vmem:[%s335 + $0x10] sm:%s327] %v340
                %v342 = vld [vmem:[%s334 + $0x18] sm:%s327]
                %343 = vst [vmem:[%s335 + $0x18] sm:%s327] %v342
                %v344 = vld [vmem:[%s334 + $0x20] sm:%s327]
                %345 = vst [vmem:[%s335 + $0x20] sm:%s327] %v344
                %v346 = vld [vmem:[%s334 + $0x28] sm:%s327]
                %347 = vst [vmem:[%s335 + $0x28] sm:%s327] %v346
                %v348 = vld [vmem:[%s334 + $0x90] sm:%s327]
                %349 = vst [vmem:[%s335 + $0x30] sm:%s327] %v348
                %v350 = vld [vmem:[%s334 + $0x98] sm:%s327]
                %351 = vst [vmem:[%s335 + $0x38] sm:%s327] %v350
                %v352 = vld [vmem:[%s334 + $0xa0] sm:%s327]
                %353 = vst [vmem:[%s335 + $0x40] sm:%s327] %v352
                %v354 = vld [vmem:[%s334 + $0xa8] sm:%s327]
                %355 = vst [vmem:[%s335 + $0x48] sm:%s327] %v354
                %v356 = vld [vmem:[%s334 + $0xb0] sm:%s327]
                %357 = vst [vmem:[%s335 + $0x50] sm:%s327] %v356
                %v358 = vld [vmem:[%s334 + $0xb8] sm:%s327]
                %359 = vst [vmem:[%s335 + $0x58] sm:%s327] %v358
                %v360 = vld [vmem:[%s334 + $0x120] sm:%s327]
                %361 = vst [vmem:[%s335 + $0x60] sm:%s327] %v360
                %v362 = vld [vmem:[%s334 + $0x128] sm:%s327]
                %363 = vst [vmem:[%s335 + $0x68] sm:%s327] %v362
                %v364 = vld [vmem:[%s334 + $0x130] sm:%s327]
                %365 = vst [vmem:[%s335 + $0x70] sm:%s327] %v364
                %v366 = vld [vmem:[%s334 + $0x138] sm:%s327]
                %367 = vst [vmem:[%s335 + $0x78] sm:%s327] %v366
                %v368 = vld [vmem:[%s334 + $0x140] sm:%s327]
                %369 = vst [vmem:[%s335 + $0x80] sm:%s327] %v368
                %v370 = vld [vmem:[%s334 + $0x148] sm:%s327]
                %371 = vst [vmem:[%s335 + $0x88] sm:%s327] %v370
                %v372 = vld [vmem:[%s334 + $0x1b0] sm:%s327]
                %373 = vst [vmem:[%s335 + $0x90] sm:%s327] %v372
                %v374 = vld [vmem:[%s334 + $0x1b8] sm:%s327]
                %375 = vst [vmem:[%s335 + $0x98] sm:%s327] %v374
                %v376 = vld [vmem:[%s334 + $0x1c0] sm:%s327]
                %377 = vst [vmem:[%s335 + $0xa0] sm:%s327] %v376
                %v378 = vld [vmem:[%s334 + $0x1c8] sm:%s327]
                %379 = vst [vmem:[%s335 + $0xa8] sm:%s327] %v378
                %v380 = vld [vmem:[%s334 + $0x1d0] sm:%s327]
                %381 = vst [vmem:[%s335 + $0xb0] sm:%s327] %v380
                %v382 = vld [vmem:[%s334 + $0x1d8] sm:%s327]
                %383 = vst [vmem:[%s335 + $0xb8] sm:%s327] %v382
              $region65: #{spectral_encoder_forward.2} parent=59 // loop_footer
                %s333 = sadd.s32 1, %s329
              $region66: #{spectral_encoder_forward.2} parent=59 // loop_footer_branch
                %328 = sbr.rel target = $region62
              $region67: #{spectral_encoder_forward.2} parent=59 // loop_exit
                _
            $region60: #{spectral_encoder_forward.2} parent=51 // pred_fallthru
              _
          $region52: #{spectral_encoder_forward.2} parent=47 // pred_fallthru
            _
          %444 = vnop
        $region48: #{spectral_encoder_forward.2} parent=43 // pred_fallthru
          _
      $region44: #{spectral_encoder_forward.2} parent=5 // pred_fallthru
        _
      %p445 = scmp.le.s32.totalorder 1, %s20
      %p446 = scmp.lt.s32.totalorder %s20, 7
      %p447 = pnand %p445, %p446
      %p448 = pneg %p447
      // Predicated region
      $region83: #{spectral_encoder_forward.2} parent=5 // pred_check
        _
      $region84: #{spectral_encoder_forward.2} parent=5 // pred_check_branch
        %450 = sbr.rel (%p447) target = $region86
      $region85: #{spectral_encoder_forward.2} parent=5 // pred_region
        %s451 = ssub.s32 %s20, 1
        // Predicated region
        $region87: #{spectral_encoder_forward.2} parent=85 // pred_check
          %p452 = pneg %p53
        $region88: #{spectral_encoder_forward.2} parent=85 // pred_check_branch
          %454 = sbr.rel (%p452) target = $region90
        $region89: #{spectral_encoder_forward.2} parent=85 // pred_region
          %455 = dma.done [#allocation9], 16
        $region90: #{spectral_encoder_forward.2} parent=85 // pred_fallthru
          _
        // Predicated region
        $region91: #{spectral_encoder_forward.2} parent=85 // pred_check
          %p456 = pneg %p95
        $region92: #{spectral_encoder_forward.2} parent=85 // pred_check_branch
          %458 = sbr.rel (%p456) target = $region94
        $region93: #{spectral_encoder_forward.2} parent=85 // pred_region
          %459 = dma.done [#allocation11], 16
        $region94: #{spectral_encoder_forward.2} parent=85 // pred_fallthru
          _
        %s460 = sand.u32 %s129, 1
        %s461 = sand.u32 %s129, 1
        %s462 = smul.addr %s461, 192
        %s463 = scalar_lea.vmem [#allocation12], %s462
        // Predicated region
        $region95: #{spectral_encoder_forward.2} parent=85 // pred_check
          %p464 = pneg %p142
        $region96: #{spectral_encoder_forward.2} parent=85 // pred_check_branch
          %466 = sbr.rel (%p464) target = $region98
        $region97: #{spectral_encoder_forward.2} parent=85 // pred_region
          _
        $region98: #{spectral_encoder_forward.2} parent=85 // pred_fallthru
          _
        %467 = sfence
        %p468 = pneg %p53
        %p469 = pneg %p50
        %p470 = pneg %p74
        %p471 = pneg %p71
        %p472 = pneg %p95
        %p473 = pneg %p92
        %p474 = pneg %p116
        %p475 = pneg %p113
        %s476 = sand.u32 %s129, 1
        %s477 = sand.u32 %s129, 1
        %s478 = smul.addr %s477, 192
        %s479 = scalar_lea.vmem [#allocation12], %s478
        %p480 = pneg %p142
        %p481 = pneg %p139
        %p482 = pneg %p163
        %p483 = pneg %p160
        %p484 = pneg %p184
        %p485 = pneg %p181
        %p486 = pneg %p205
        %p487 = pneg %p202
        %p488 = pneg %p233
        %p489 = pneg %p230
        %s490 = smul.u32 %s29, %s30
        %s491 = smul.u32 6, %s490
        %p492 = scmp.lt.s32.totalorder %s491, 17
        %s493 = scalar_select %p492, %s491, 17
        %s494 = smul.addr %s493, 8
        %s495 = scalar_lea.vmem %s8, %s494
        %p496 = pneg %p254
        %p497 = pneg %p251
        %s498 = smul.u32 6, %s30
        %s499 = smul.u32 %s29, %s30
        %s500 = smul.u32 6, %s499
        %p501 = scmp.lt.s32.totalorder %s500, 17
        %s502 = scalar_select %p501, %s500, 17
        %s503 = smul.addr %s502, 8
        %s504 = scalar_lea.vmem %s8, %s503
        %s505 = smul.u32 %s29, %s30
        %s506 = smul.u32 6, %s505
        %s508 = sld [smem:[#allocation8]]
        %s509 = sld [smem:[#allocation8 + $0x1]]
        %s510 = sld [smem:[#allocation8 + $0x2]]
        %s511 = sld [smem:[#allocation6]]
        %s512 = sld [smem:[#allocation10]]
        %s513 = sld [smem:[#allocation10 + $0x1]]
        %s514 = sld [smem:[#allocation10 + $0x2]]
        %s515 = sld [smem:[#allocation10 + $0x3]]
        %s516 = sld [smem:[#allocation10 + $0x4]]
        %s517 = sld [smem:[#allocation7]]
        %v518 = vlaneseq
        %v519 = vshrl.u32 %v518, 7
        %v520 = vadd.s32 %v519, 8
        %v521 = vadd.s32 %v519, 16
        %v522 = vadd.s32 %v519, 24
        %v523 = vadd.s32 %v519, 32
        %v524 = vadd.s32 %v519, 40
        %s525 = smul.u32 %s30, 48
        %s526 = ssub.s32 128, %s525
        %v527 = vstv %s526
        %vm528 = vcmp.lt.s32.totalorder %v519, %v527
        %vm529 = vcmp.lt.s32.totalorder %v520, %v527
        %vm530 = vcmp.lt.s32.totalorder %v521, %v527
        %vm531 = vcmp.lt.s32.totalorder %v522, %v527
        %vm532 = vcmp.lt.s32.totalorder %v523, %v527
        %vm533 = vcmp.lt.s32.totalorder %v524, %v527
        %v534 = vsel %vm528, 1, 0
        %v535 = vsel %vm529, 1, 0
        %v536 = vsel %vm530, 1, 0
        %v537 = vsel %vm531, 1, 0
        %v538 = vsel %vm532, 1, 0
        %v539 = vsel %vm533, 1, 0
        %v540 = vcvt.s32.f32 %v534
        %v541 = vcvt.s32.f32 %v535
        %v542 = vcvt.s32.f32 %v536
        %v543 = vcvt.s32.f32 %v537
        %v544 = vcvt.s32.f32 %v538
        %v545 = vcvt.s32.f32 %v539
        %p546 = scmp.eq.s32.totalorder %s29, 0
        // Predicated region
        $region99: #{spectral_encoder_forward.2} parent=85 // pred_check
          %p547 = pneg %p546
        $region100: #{spectral_encoder_forward.2} parent=85 // pred_check_branch
          %549 = sbr.rel (%p547) target = $region102
        $region101: #{spectral_encoder_forward.2} parent=85 // pred_region
          %p550 = scmp.eq.s32.totalorder %s30, 0
          // Predicated region
          $region103: #{spectral_encoder_forward.2} parent=101 // pred_check
            %p551 = pneg %p550
          $region104: #{spectral_encoder_forward.2} parent=101 // pred_check_branch
            %553 = sbr.rel (%p551) target = $region106
          $region105: #{spectral_encoder_forward.2} parent=101 // pred_region
            %554 = vst [vmem:[#allocation2] sm:$0x3] 0.0
            %555 = vst [vmem:[#allocation3] sm:$0x3] 0.0
          $region106: #{spectral_encoder_forward.2} parent=101 // pred_fallthru
            _
          %v556 = vld [vmem:[%s463] sm:$0xff]
          %v557 = vld [vmem:[%s463 + $0x8] sm:$0xff]
          %v558 = vld [vmem:[%s463 + $0x10] sm:$0xff]
          %v559 = vld [vmem:[%s463 + $0x18] sm:$0xff]
          %v560 = vld [vmem:[%s463 + $0x20] sm:$0xff]
          %v561 = vld [vmem:[%s463 + $0x28] sm:$0xff]
          %562 = vrot.lane.b32.xlu0 %v556, 1
          %v563 = vpop.permute.xlu0 %562
          %564 = vrot.lane.b32.xlu0 %v557, 1
          %v565 = vpop.permute.xlu0 %564
          %566 = vrot.lane.b32.xlu0 %v558, 1
          %v567 = vpop.permute.xlu0 %566
          %568 = vrot.lane.b32.xlu0 %v559, 1
          %v569 = vpop.permute.xlu0 %568
          %570 = vrot.lane.b32.xlu0 %v560, 1
          %v571 = vpop.permute.xlu0 %570
          %572 = vrot.lane.b32.xlu0 %v561, 1
          %v573 = vpop.permute.xlu0 %572
          %574 = vrot.lane.b32.xlu0 %v556, 127
          %v575 = vpop.permute.xlu0 %574
          %576 = vrot.lane.b32.xlu0 %v557, 127
          %v577 = vpop.permute.xlu0 %576
          %578 = vrot.lane.b32.xlu0 %v558, 127
          %v579 = vpop.permute.xlu0 %578
          %580 = vrot.lane.b32.xlu0 %v559, 127
          %v581 = vpop.permute.xlu0 %580
          %582 = vrot.lane.b32.xlu0 %v560, 127
          %v583 = vpop.permute.xlu0 %582
          %584 = vrot.lane.b32.xlu0 %v561, 127
          %v585 = vpop.permute.xlu0 %584
          %586 = vrot.lane.b32.xlu0 %v556, 2
          %v587 = vpop.permute.xlu0 %586
          %588 = vrot.lane.b32.xlu0 %v557, 2
          %v589 = vpop.permute.xlu0 %588
          %590 = vrot.lane.b32.xlu0 %v558, 2
          %v591 = vpop.permute.xlu0 %590
          %592 = vrot.lane.b32.xlu0 %v559, 2
          %v593 = vpop.permute.xlu0 %592
          %594 = vrot.lane.b32.xlu0 %v560, 2
          %v595 = vpop.permute.xlu0 %594
          %596 = vrot.lane.b32.xlu0 %v561, 2
          %v597 = vpop.permute.xlu0 %596
          %598 = vrot.lane.b32.xlu0 %v556, 126
          %v599 = vpop.permute.xlu0 %598
          %600 = vrot.lane.b32.xlu0 %v557, 126
          %v601 = vpop.permute.xlu0 %600
          %602 = vrot.lane.b32.xlu0 %v558, 126
          %v603 = vpop.permute.xlu0 %602
          %604 = vrot.lane.b32.xlu0 %v559, 126
          %v605 = vpop.permute.xlu0 %604
          %606 = vrot.lane.b32.xlu0 %v560, 126
          %v607 = vpop.permute.xlu0 %606
          %608 = vrot.lane.b32.xlu0 %v561, 126
          %v609 = vpop.permute.xlu0 %608
          %v610 = vstv %s508
          %v611 = vmul.f32 %v610, %v563
          %v612 = vmul.f32 %v610, %v565
          %v613 = vmul.f32 %v610, %v567
          %v614 = vmul.f32 %v610, %v569
          %v615 = vmul.f32 %v610, %v571
          %v616 = vmul.f32 %v610, %v573
          %v617 = vstv %s509
          %v618 = vmul.f32 %v617, %v556
          %v619 = vmul.f32 %v617, %v557
          %v620 = vmul.f32 %v617, %v558
          %v621 = vmul.f32 %v617, %v559
          %v622 = vmul.f32 %v617, %v560
          %v623 = vmul.f32 %v617, %v561
          %v624 = vadd.f32 %v611, %v618
          %v625 = vadd.f32 %v612, %v619
          %v626 = vadd.f32 %v613, %v620
          %v627 = vadd.f32 %v614, %v621
          %v628 = vadd.f32 %v615, %v622
          %v629 = vadd.f32 %v616, %v623
          %v630 = vstv %s510
          %v631 = vmul.f32 %v630, %v575
          %v632 = vmul.f32 %v630, %v577
          %v633 = vmul.f32 %v630, %v579
          %v634 = vmul.f32 %v630, %v581
          %v635 = vmul.f32 %v630, %v583
          %v636 = vmul.f32 %v630, %v585
          %v637 = vadd.f32 %v624, %v631
          %v638 = vadd.f32 %v625, %v632
          %v639 = vadd.f32 %v626, %v633
          %v640 = vadd.f32 %v627, %v634
          %v641 = vadd.f32 %v628, %v635
          %v642 = vadd.f32 %v629, %v636
          %v643 = vstv %s511
          %v644 = vadd.f32 %v637, %v643
          %v645 = vadd.f32 %v638, %v643
          %v646 = vadd.f32 %v639, %v643
          %v647 = vadd.f32 %v640, %v643
          %v648 = vadd.f32 %v641, %v643
          %v649 = vadd.f32 %v642, %v643
          %v650 = vmax.f32 %v644, 0.0
          %v651 = vmax.f32 %v645, 0.0
          %v652 = vmax.f32 %v646, 0.0
          %v653 = vmax.f32 %v647, 0.0
          %v654 = vmax.f32 %v648, 0.0
          %v655 = vmax.f32 %v649, 0.0
          %v656 = vstv %s512
          %v657 = vmul.f32 %v656, %v587
          %v658 = vmul.f32 %v656, %v589
          %v659 = vmul.f32 %v656, %v591
          %v660 = vmul.f32 %v656, %v593
          %v661 = vmul.f32 %v656, %v595
          %v662 = vmul.f32 %v656, %v597
          %v663 = vstv %s513
          %v664 = vmul.f32 %v663, %v563
          %v665 = vmul.f32 %v663, %v565
          %v666 = vmul.f32 %v663, %v567
          %v667 = vmul.f32 %v663, %v569
          %v668 = vmul.f32 %v663, %v571
          %v669 = vmul.f32 %v663, %v573
          %v670 = vadd.f32 %v657, %v664
          %v671 = vadd.f32 %v658, %v665
          %v672 = vadd.f32 %v659, %v666
          %v673 = vadd.f32 %v660, %v667
          %v674 = vadd.f32 %v661, %v668
          %v675 = vadd.f32 %v662, %v669
          %v676 = vstv %s514
          %v677 = vmul.f32 %v676, %v556
          %v678 = vmul.f32 %v676, %v557
          %v679 = vmul.f32 %v676, %v558
          %v680 = vmul.f32 %v676, %v559
          %v681 = vmul.f32 %v676, %v560
          %v682 = vmul.f32 %v676, %v561
          %v683 = vadd.f32 %v670, %v677
          %v684 = vadd.f32 %v671, %v678
          %v685 = vadd.f32 %v672, %v679
          %v686 = vadd.f32 %v673, %v680
          %v687 = vadd.f32 %v674, %v681
          %v688 = vadd.f32 %v675, %v682
          %v689 = vstv %s515
          %v690 = vmul.f32 %v689, %v575
          %v691 = vmul.f32 %v689, %v577
          %v692 = vmul.f32 %v689, %v579
          %v693 = vmul.f32 %v689, %v581
          %v694 = vmul.f32 %v689, %v583
          %v695 = vmul.f32 %v689, %v585
          %v696 = vadd.f32 %v683, %v690
          %v697 = vadd.f32 %v684, %v691
          %v698 = vadd.f32 %v685, %v692
          %v699 = vadd.f32 %v686, %v693
          %v700 = vadd.f32 %v687, %v694
          %v701 = vadd.f32 %v688, %v695
          %v702 = vstv %s516
          %v703 = vmul.f32 %v702, %v599
          %v704 = vmul.f32 %v702, %v601
          %v705 = vmul.f32 %v702, %v603
          %v706 = vmul.f32 %v702, %v605
          %v707 = vmul.f32 %v702, %v607
          %v708 = vmul.f32 %v702, %v609
          %v709 = vadd.f32 %v696, %v703
          %v710 = vadd.f32 %v697, %v704
          %v711 = vadd.f32 %v698, %v705
          %v712 = vadd.f32 %v699, %v706
          %v713 = vadd.f32 %v700, %v707
          %v714 = vadd.f32 %v701, %v708
          %v715 = vstv %s517
          %v716 = vadd.f32 %v709, %v715
          %v717 = vadd.f32 %v710, %v715
          %v718 = vadd.f32 %v711, %v715
          %v719 = vadd.f32 %v712, %v715
          %v720 = vadd.f32 %v713, %v715
          %v721 = vadd.f32 %v714, %v715
          %v722 = vmax.f32 %v716, 0.0
          %v723 = vmax.f32 %v717, 0.0
          %v724 = vmax.f32 %v718, 0.0
          %v725 = vmax.f32 %v719, 0.0
          %v726 = vmax.f32 %v720, 0.0
          %v727 = vmax.f32 %v721, 0.0
          %v728 = vmul.f32 %v650, %v540
          %v729 = vmul.f32 %v651, %v541
          %v730 = vmul.f32 %v652, %v542
          %v731 = vmul.f32 %v653, %v543
          %v732 = vmul.f32 %v654, %v544
          %v733 = vmul.f32 %v655, %v545
          %v734 = vmul.f32 %v722, %v540
          %v735 = vmul.f32 %v723, %v541
          %v736 = vmul.f32 %v724, %v542
          %v737 = vmul.f32 %v725, %v543
          %v738 = vmul.f32 %v726, %v544
          %v739 = vmul.f32 %v727, %v545
          %v740 = vld [vmem:[#allocation2] sm:$0x1]
          %v741 = vadd.f32 %v728, %v729
          %v742 = vadd.f32 %v741, %v730
          %v743 = vadd.f32 %v742, %v731
          %v744 = vadd.f32 %v743, %v732
          %v745 = vadd.f32 %v744, %v733
          %v746 = vrot.slane %v745, 4
          %v747 = vadd.f32 %v745, %v746
          %v748 = vrot.slane %v747, 2
          %v749 = vadd.f32 %v747, %v748
          %v750 = vrot.slane %v749, 1
          %v751 = vadd.f32 %v749, %v750
          %v752 = vadd.f32 %v740, %v751
          %753 = vst [vmem:[#allocation2] sm:$0x1] %v752
          %v754 = vld [vmem:[#allocation2 + $0x1] sm:$0x1]
          %v755 = vmul.f32 %v650, %v728
          %v756 = vmul.f32 %v651, %v729
          %v757 = vmul.f32 %v652, %v730
          %v758 = vmul.f32 %v653, %v731
          %v759 = vmul.f32 %v654, %v732
          %v760 = vmul.f32 %v655, %v733
          %v761 = vadd.f32 %v755, %v756
          %v762 = vadd.f32 %v761, %v757
          %v763 = vadd.f32 %v762, %v758
          %v764 = vadd.f32 %v763, %v759
          %v765 = vadd.f32 %v764, %v760
          %v766 = vrot.slane %v765, 4
          %v767 = vadd.f32 %v765, %v766
          %v768 = vrot.slane %v767, 2
          %v769 = vadd.f32 %v767, %v768
          %v770 = vrot.slane %v769, 1
          %v771 = vadd.f32 %v769, %v770
          %v772 = vadd.f32 %v754, %v771
          %773 = vst [vmem:[#allocation2 + $0x1] sm:$0x1] %v772
          %v774 = vld [vmem:[#allocation3] sm:$0x1]
          %v775 = vadd.f32 %v734, %v735
          %v776 = vadd.f32 %v775, %v736
          %v777 = vadd.f32 %v776, %v737
          %v778 = vadd.f32 %v777, %v738
          %v779 = vadd.f32 %v778, %v739
          %v780 = vrot.slane %v779, 4
          %v781 = vadd.f32 %v779, %v780
          %v782 = vrot.slane %v781, 2
          %v783 = vadd.f32 %v781, %v782
          %v784 = vrot.slane %v783, 1
          %v785 = vadd.f32 %v783, %v784
          %v786 = vadd.f32 %v774, %v785
          %787 = vst [vmem:[#allocation3] sm:$0x1] %v786
          %v788 = vld [vmem:[#allocation3 + $0x1] sm:$0x1]
          %v789 = vmul.f32 %v722, %v734
          %v790 = vmul.f32 %v723, %v735
          %v791 = vmul.f32 %v724, %v736
          %v792 = vmul.f32 %v725, %v737
          %v793 = vmul.f32 %v726, %v738
          %v794 = vmul.f32 %v727, %v739
          %v795 = vadd.f32 %v789, %v790
          %v796 = vadd.f32 %v795, %v791
          %v797 = vadd.f32 %v796, %v792
          %v798 = vadd.f32 %v797, %v793
          %v799 = vadd.f32 %v798, %v794
          %v800 = vrot.slane %v799, 4
          %v801 = vadd.f32 %v799, %v800
          %v802 = vrot.slane %v801, 2
          %v803 = vadd.f32 %v801, %v802
          %v804 = vrot.slane %v803, 1
          %v805 = vadd.f32 %v803, %v804
          %v806 = vadd.f32 %v788, %v805
          %807 = vst [vmem:[#allocation3 + $0x1] sm:$0x1] %v806
          %s808 = scalar_lea.vmem %s463, 48 [#allocation12]
          %v809 = vld [vmem:[%s808] sm:$0xff]
          %v810 = vld [vmem:[%s808 + $0x8] sm:$0xff]
          %v811 = vld [vmem:[%s808 + $0x10] sm:$0xff]
          %v812 = vld [vmem:[%s808 + $0x18] sm:$0xff]
          %v813 = vld [vmem:[%s808 + $0x20] sm:$0xff]
          %v814 = vld [vmem:[%s808 + $0x28] sm:$0xff]
          %815 = vrot.lane.b32.xlu0 %v809, 1
          %v816 = vpop.permute.xlu0 %815
          %817 = vrot.lane.b32.xlu0 %v810, 1
          %v818 = vpop.permute.xlu0 %817
          %819 = vrot.lane.b32.xlu0 %v811, 1
          %v820 = vpop.permute.xlu0 %819
          %821 = vrot.lane.b32.xlu0 %v812, 1
          %v822 = vpop.permute.xlu0 %821
          %823 = vrot.lane.b32.xlu0 %v813, 1
          %v824 = vpop.permute.xlu0 %823
          %825 = vrot.lane.b32.xlu0 %v814, 1
          %v826 = vpop.permute.xlu0 %825
          %827 = vrot.lane.b32.xlu0 %v809, 127
          %v828 = vpop.permute.xlu0 %827
          %829 = vrot.lane.b32.xlu0 %v810, 127
          %v830 = vpop.permute.xlu0 %829
          %831 = vrot.lane.b32.xlu0 %v811, 127
          %v832 = vpop.permute.xlu0 %831
          %833 = vrot.lane.b32.xlu0 %v812, 127
          %v834 = vpop.permute.xlu0 %833
          %835 = vrot.lane.b32.xlu0 %v813, 127
          %v836 = vpop.permute.xlu0 %835
          %837 = vrot.lane.b32.xlu0 %v814, 127
          %v838 = vpop.permute.xlu0 %837
          %839 = vrot.lane.b32.xlu0 %v809, 2
          %v840 = vpop.permute.xlu0 %839
          %841 = vrot.lane.b32.xlu0 %v810, 2
          %v842 = vpop.permute.xlu0 %841
          %843 = vrot.lane.b32.xlu0 %v811, 2
          %v844 = vpop.permute.xlu0 %843
          %845 = vrot.lane.b32.xlu0 %v812, 2
          %v846 = vpop.permute.xlu0 %845
          %847 = vrot.lane.b32.xlu0 %v813, 2
          %v848 = vpop.permute.xlu0 %847
          %849 = vrot.lane.b32.xlu0 %v814, 2
          %v850 = vpop.permute.xlu0 %849
          %851 = vrot.lane.b32.xlu0 %v809, 126
          %v852 = vpop.permute.xlu0 %851
          %853 = vrot.lane.b32.xlu0 %v810, 126
          %v854 = vpop.permute.xlu0 %853
          %855 = vrot.lane.b32.xlu0 %v811, 126
          %v856 = vpop.permute.xlu0 %855
          %857 = vrot.lane.b32.xlu0 %v812, 126
          %v858 = vpop.permute.xlu0 %857
          %859 = vrot.lane.b32.xlu0 %v813, 126
          %v860 = vpop.permute.xlu0 %859
          %861 = vrot.lane.b32.xlu0 %v814, 126
          %v862 = vpop.permute.xlu0 %861
          %v863 = vmul.f32 %v610, %v816
          %v864 = vmul.f32 %v610, %v818
          %v865 = vmul.f32 %v610, %v820
          %v866 = vmul.f32 %v610, %v822
          %v867 = vmul.f32 %v610, %v824
          %v868 = vmul.f32 %v610, %v826
          %v869 = vmul.f32 %v617, %v809
          %v870 = vmul.f32 %v617, %v810
          %v871 = vmul.f32 %v617, %v811
          %v872 = vmul.f32 %v617, %v812
          %v873 = vmul.f32 %v617, %v813
          %v874 = vmul.f32 %v617, %v814
          %v875 = vadd.f32 %v863, %v869
          %v876 = vadd.f32 %v864, %v870
          %v877 = vadd.f32 %v865, %v871
          %v878 = vadd.f32 %v866, %v872
          %v879 = vadd.f32 %v867, %v873
          %v880 = vadd.f32 %v868, %v874
          %v881 = vmul.f32 %v630, %v828
          %v882 = vmul.f32 %v630, %v830
          %v883 = vmul.f32 %v630, %v832
          %v884 = vmul.f32 %v630, %v834
          %v885 = vmul.f32 %v630, %v836
          %v886 = vmul.f32 %v630, %v838
          %v887 = vadd.f32 %v875, %v881
          %v888 = vadd.f32 %v876, %v882
          %v889 = vadd.f32 %v877, %v883
          %v890 = vadd.f32 %v878, %v884
          %v891 = vadd.f32 %v879, %v885
          %v892 = vadd.f32 %v880, %v886
          %v893 = vadd.f32 %v887, %v643
          %v894 = vadd.f32 %v888, %v643
          %v895 = vadd.f32 %v889, %v643
          %v896 = vadd.f32 %v890, %v643
          %v897 = vadd.f32 %v891, %v643
          %v898 = vadd.f32 %v892, %v643
          %v899 = vmax.f32 %v893, 0.0
          %v900 = vmax.f32 %v894, 0.0
          %v901 = vmax.f32 %v895, 0.0
          %v902 = vmax.f32 %v896, 0.0
          %v903 = vmax.f32 %v897, 0.0
          %v904 = vmax.f32 %v898, 0.0
          %v905 = vmul.f32 %v656, %v840
          %v906 = vmul.f32 %v656, %v842
          %v907 = vmul.f32 %v656, %v844
          %v908 = vmul.f32 %v656, %v846
          %v909 = vmul.f32 %v656, %v848
          %v910 = vmul.f32 %v656, %v850
          %v911 = vmul.f32 %v663, %v816
          %v912 = vmul.f32 %v663, %v818
          %v913 = vmul.f32 %v663, %v820
          %v914 = vmul.f32 %v663, %v822
          %v915 = vmul.f32 %v663, %v824
          %v916 = vmul.f32 %v663, %v826
          %v917 = vadd.f32 %v905, %v911
          %v918 = vadd.f32 %v906, %v912
          %v919 = vadd.f32 %v907, %v913
          %v920 = vadd.f32 %v908, %v914
          %v921 = vadd.f32 %v909, %v915
          %v922 = vadd.f32 %v910, %v916
          %v923 = vmul.f32 %v676, %v809
          %v924 = vmul.f32 %v676, %v810
          %v925 = vmul.f32 %v676, %v811
          %v926 = vmul.f32 %v676, %v812
          %v927 = vmul.f32 %v676, %v813
          %v928 = vmul.f32 %v676, %v814
          %v929 = vadd.f32 %v917, %v923
          %v930 = vadd.f32 %v918, %v924
          %v931 = vadd.f32 %v919, %v925
          %v932 = vadd.f32 %v920, %v926
          %v933 = vadd.f32 %v921, %v927
          %v934 = vadd.f32 %v922, %v928
          %v935 = vmul.f32 %v689, %v828
          %v936 = vmul.f32 %v689, %v830
          %v937 = vmul.f32 %v689, %v832
          %v938 = vmul.f32 %v689, %v834
          %v939 = vmul.f32 %v689, %v836
          %v940 = vmul.f32 %v689, %v838
          %v941 = vadd.f32 %v929, %v935
          %v942 = vadd.f32 %v930, %v936
          %v943 = vadd.f32 %v931, %v937
          %v944 = vadd.f32 %v932, %v938
          %v945 = vadd.f32 %v933, %v939
          %v946 = vadd.f32 %v934, %v940
          %v947 = vmul.f32 %v702, %v852
          %v948 = vmul.f32 %v702, %v854
          %v949 = vmul.f32 %v702, %v856
          %v950 = vmul.f32 %v702, %v858
          %v951 = vmul.f32 %v702, %v860
          %v952 = vmul.f32 %v702, %v862
          %v953 = vadd.f32 %v941, %v947
          %v954 = vadd.f32 %v942, %v948
          %v955 = vadd.f32 %v943, %v949
          %v956 = vadd.f32 %v944, %v950
          %v957 = vadd.f32 %v945, %v951
          %v958 = vadd.f32 %v946, %v952
          %v959 = vadd.f32 %v953, %v715
          %v960 = vadd.f32 %v954, %v715
          %v961 = vadd.f32 %v955, %v715
          %v962 = vadd.f32 %v956, %v715
          %v963 = vadd.f32 %v957, %v715
          %v964 = vadd.f32 %v958, %v715
          %v965 = vmax.f32 %v959, 0.0
          %v966 = vmax.f32 %v960, 0.0
          %v967 = vmax.f32 %v961, 0.0
          %v968 = vmax.f32 %v962, 0.0
          %v969 = vmax.f32 %v963, 0.0
          %v970 = vmax.f32 %v964, 0.0
          %v971 = vmul.f32 %v899, %v540
          %v972 = vmul.f32 %v900, %v541
          %v973 = vmul.f32 %v901, %v542
          %v974 = vmul.f32 %v902, %v543
          %v975 = vmul.f32 %v903, %v544
          %v976 = vmul.f32 %v904, %v545
          %v977 = vmul.f32 %v965, %v540
          %v978 = vmul.f32 %v966, %v541
          %v979 = vmul.f32 %v967, %v542
          %v980 = vmul.f32 %v968, %v543
          %v981 = vmul.f32 %v969, %v544
          %v982 = vmul.f32 %v970, %v545
          %v983 = vld [vmem:[#allocation2] sm:$0x1]
          %v984 = vadd.f32 %v971, %v972
          %v985 = vadd.f32 %v984, %v973
          %v986 = vadd.f32 %v985, %v974
          %v987 = vadd.f32 %v986, %v975
          %v988 = vadd.f32 %v987, %v976
          %v989 = vrot.slane %v988, 4
          %v990 = vadd.f32 %v988, %v989
          %v991 = vrot.slane %v990, 2
          %v992 = vadd.f32 %v990, %v991
          %v993 = vrot.slane %v992, 1
          %v994 = vadd.f32 %v992, %v993
          %v995 = vadd.f32 %v983, %v994
          %996 = vst [vmem:[#allocation2] sm:$0x1] %v995
          %v997 = vld [vmem:[#allocation2 + $0x1] sm:$0x1]
          %v998 = vmul.f32 %v899, %v971
          %v999 = vmul.f32 %v900, %v972
          %v1000 = vmul.f32 %v901, %v973
          %v1001 = vmul.f32 %v902, %v974
          %v1002 = vmul.f32 %v903, %v975
          %v1003 = vmul.f32 %v904, %v976
          %v1004 = vadd.f32 %v998, %v999
          %v1005 = vadd.f32 %v1004, %v1000
          %v1006 = vadd.f32 %v1005, %v1001
          %v1007 = vadd.f32 %v1006, %v1002
          %v1008 = vadd.f32 %v1007, %v1003
          %v1009 = vrot.slane %v1008, 4
          %v1010 = vadd.f32 %v1008, %v1009
          %v1011 = vrot.slane %v1010, 2
          %v1012 = vadd.f32 %v1010, %v1011
          %v1013 = vrot.slane %v1012, 1
          %v1014 = vadd.f32 %v1012, %v1013
          %v1015 = vadd.f32 %v997, %v1014
          %1016 = vst [vmem:[#allocation2 + $0x1] sm:$0x1] %v1015
          %v1017 = vld [vmem:[#allocation3] sm:$0x1]
          %v1018 = vadd.f32 %v977, %v978
          %v1019 = vadd.f32 %v1018, %v979
          %v1020 = vadd.f32 %v1019, %v980
          %v1021 = vadd.f32 %v1020, %v981
          %v1022 = vadd.f32 %v1021, %v982
          %v1023 = vrot.slane %v1022, 4
          %v1024 = vadd.f32 %v1022, %v1023
          %v1025 = vrot.slane %v1024, 2
          %v1026 = vadd.f32 %v1024, %v1025
          %v1027 = vrot.slane %v1026, 1
          %v1028 = vadd.f32 %v1026, %v1027
          %v1029 = vadd.f32 %v1017, %v1028
          %1030 = vst [vmem:[#allocation3] sm:$0x1] %v1029
          %v1031 = vld [vmem:[#allocation3 + $0x1] sm:$0x1]
          %v1032 = vmul.f32 %v965, %v977
          %v1033 = vmul.f32 %v966, %v978
          %v1034 = vmul.f32 %v967, %v979
          %v1035 = vmul.f32 %v968, %v980
          %v1036 = vmul.f32 %v969, %v981
          %v1037 = vmul.f32 %v970, %v982
          %v1038 = vadd.f32 %v1032, %v1033
          %v1039 = vadd.f32 %v1038, %v1034
          %v1040 = vadd.f32 %v1039, %v1035
          %v1041 = vadd.f32 %v1040, %v1036
          %v1042 = vadd.f32 %v1041, %v1037
          %v1043 = vrot.slane %v1042, 4
          %v1044 = vadd.f32 %v1042, %v1043
          %v1045 = vrot.slane %v1044, 2
          %v1046 = vadd.f32 %v1044, %v1045
          %v1047 = vrot.slane %v1046, 1
          %v1048 = vadd.f32 %v1046, %v1047
          %v1049 = vadd.f32 %v1031, %v1048
          %1050 = vst [vmem:[#allocation3 + $0x1] sm:$0x1] %v1049
          %s1051 = scalar_lea.vmem %s463, 96 [#allocation12]
          %v1052 = vld [vmem:[%s1051] sm:$0xff]
          %v1053 = vld [vmem:[%s1051 + $0x8] sm:$0xff]
          %v1054 = vld [vmem:[%s1051 + $0x10] sm:$0xff]
          %v1055 = vld [vmem:[%s1051 + $0x18] sm:$0xff]
          %v1056 = vld [vmem:[%s1051 + $0x20] sm:$0xff]
          %v1057 = vld [vmem:[%s1051 + $0x28] sm:$0xff]
          %1058 = vrot.lane.b32.xlu0 %v1052, 1
          %v1059 = vpop.permute.xlu0 %1058
          %1060 = vrot.lane.b32.xlu0 %v1053, 1
          %v1061 = vpop.permute.xlu0 %1060
          %1062 = vrot.lane.b32.xlu0 %v1054, 1
          %v1063 = vpop.permute.xlu0 %1062
          %1064 = vrot.lane.b32.xlu0 %v1055, 1
          %v1065 = vpop.permute.xlu0 %1064
          %1066 = vrot.lane.b32.xlu0 %v1056, 1
          %v1067 = vpop.permute.xlu0 %1066
          %1068 = vrot.lane.b32.xlu0 %v1057, 1
          %v1069 = vpop.permute.xlu0 %1068
          %1070 = vrot.lane.b32.xlu0 %v1052, 127
          %v1071 = vpop.permute.xlu0 %1070
          %1072 = vrot.lane.b32.xlu0 %v1053, 127
          %v1073 = vpop.permute.xlu0 %1072
          %1074 = vrot.lane.b32.xlu0 %v1054, 127
          %v1075 = vpop.permute.xlu0 %1074
          %1076 = vrot.lane.b32.xlu0 %v1055, 127
          %v1077 = vpop.permute.xlu0 %1076
          %1078 = vrot.lane.b32.xlu0 %v1056, 127
          %v1079 = vpop.permute.xlu0 %1078
          %1080 = vrot.lane.b32.xlu0 %v1057, 127
          %v1081 = vpop.permute.xlu0 %1080
          %1082 = vrot.lane.b32.xlu0 %v1052, 2
          %v1083 = vpop.permute.xlu0 %1082
          %1084 = vrot.lane.b32.xlu0 %v1053, 2
          %v1085 = vpop.permute.xlu0 %1084
          %1086 = vrot.lane.b32.xlu0 %v1054, 2
          %v1087 = vpop.permute.xlu0 %1086
          %1088 = vrot.lane.b32.xlu0 %v1055, 2
          %v1089 = vpop.permute.xlu0 %1088
          %1090 = vrot.lane.b32.xlu0 %v1056, 2
          %v1091 = vpop.permute.xlu0 %1090
          %1092 = vrot.lane.b32.xlu0 %v1057, 2
          %v1093 = vpop.permute.xlu0 %1092
          %1094 = vrot.lane.b32.xlu0 %v1052, 126
          %v1095 = vpop.permute.xlu0 %1094
          %1096 = vrot.lane.b32.xlu0 %v1053, 126
          %v1097 = vpop.permute.xlu0 %1096
          %1098 = vrot.lane.b32.xlu0 %v1054, 126
          %v1099 = vpop.permute.xlu0 %1098
          %1100 = vrot.lane.b32.xlu0 %v1055, 126
          %v1101 = vpop.permute.xlu0 %1100
          %1102 = vrot.lane.b32.xlu0 %v1056, 126
          %v1103 = vpop.permute.xlu0 %1102
          %1104 = vrot.lane.b32.xlu0 %v1057, 126
          %v1105 = vpop.permute.xlu0 %1104
          %v1106 = vmul.f32 %v610, %v1059
          %v1107 = vmul.f32 %v610, %v1061
          %v1108 = vmul.f32 %v610, %v1063
          %v1109 = vmul.f32 %v610, %v1065
          %v1110 = vmul.f32 %v610, %v1067
          %v1111 = vmul.f32 %v610, %v1069
          %v1112 = vmul.f32 %v617, %v1052
          %v1113 = vmul.f32 %v617, %v1053
          %v1114 = vmul.f32 %v617, %v1054
          %v1115 = vmul.f32 %v617, %v1055
          %v1116 = vmul.f32 %v617, %v1056
          %v1117 = vmul.f32 %v617, %v1057
          %v1118 = vadd.f32 %v1106, %v1112
          %v1119 = vadd.f32 %v1107, %v1113
          %v1120 = vadd.f32 %v1108, %v1114
          %v1121 = vadd.f32 %v1109, %v1115
          %v1122 = vadd.f32 %v1110, %v1116
          %v1123 = vadd.f32 %v1111, %v1117
          %v1124 = vmul.f32 %v630, %v1071
          %v1125 = vmul.f32 %v630, %v1073
          %v1126 = vmul.f32 %v630, %v1075
          %v1127 = vmul.f32 %v630, %v1077
          %v1128 = vmul.f32 %v630, %v1079
          %v1129 = vmul.f32 %v630, %v1081
          %v1130 = vadd.f32 %v1118, %v1124
          %v1131 = vadd.f32 %v1119, %v1125
          %v1132 = vadd.f32 %v1120, %v1126
          %v1133 = vadd.f32 %v1121, %v1127
          %v1134 = vadd.f32 %v1122, %v1128
          %v1135 = vadd.f32 %v1123, %v1129
          %v1136 = vadd.f32 %v1130, %v643
          %v1137 = vadd.f32 %v1131, %v643
          %v1138 = vadd.f32 %v1132, %v643
          %v1139 = vadd.f32 %v1133, %v643
          %v1140 = vadd.f32 %v1134, %v643
          %v1141 = vadd.f32 %v1135, %v643
          %v1142 = vmax.f32 %v1136, 0.0
          %v1143 = vmax.f32 %v1137, 0.0
          %v1144 = vmax.f32 %v1138, 0.0
          %v1145 = vmax.f32 %v1139, 0.0
          %v1146 = vmax.f32 %v1140, 0.0
          %v1147 = vmax.f32 %v1141, 0.0
          %v1148 = vmul.f32 %v656, %v1083
          %v1149 = vmul.f32 %v656, %v1085
          %v1150 = vmul.f32 %v656, %v1087
          %v1151 = vmul.f32 %v656, %v1089
          %v1152 = vmul.f32 %v656, %v1091
          %v1153 = vmul.f32 %v656, %v1093
          %v1154 = vmul.f32 %v663, %v1059
          %v1155 = vmul.f32 %v663, %v1061
          %v1156 = vmul.f32 %v663, %v1063
          %v1157 = vmul.f32 %v663, %v1065
          %v1158 = vmul.f32 %v663, %v1067
          %v1159 = vmul.f32 %v663, %v1069
          %v1160 = vadd.f32 %v1148, %v1154
          %v1161 = vadd.f32 %v1149, %v1155
          %v1162 = vadd.f32 %v1150, %v1156
          %v1163 = vadd.f32 %v1151, %v1157
          %v1164 = vadd.f32 %v1152, %v1158
          %v1165 = vadd.f32 %v1153, %v1159
          %v1166 = vmul.f32 %v676, %v1052
          %v1167 = vmul.f32 %v676, %v1053
          %v1168 = vmul.f32 %v676, %v1054
          %v1169 = vmul.f32 %v676, %v1055
          %v1170 = vmul.f32 %v676, %v1056
          %v1171 = vmul.f32 %v676, %v1057
          %v1172 = vadd.f32 %v1160, %v1166
          %v1173 = vadd.f32 %v1161, %v1167
          %v1174 = vadd.f32 %v1162, %v1168
          %v1175 = vadd.f32 %v1163, %v1169
          %v1176 = vadd.f32 %v1164, %v1170
          %v1177 = vadd.f32 %v1165, %v1171
          %v1178 = vmul.f32 %v689, %v1071
          %v1179 = vmul.f32 %v689, %v1073
          %v1180 = vmul.f32 %v689, %v1075
          %v1181 = vmul.f32 %v689, %v1077
          %v1182 = vmul.f32 %v689, %v1079
          %v1183 = vmul.f32 %v689, %v1081
          %v1184 = vadd.f32 %v1172, %v1178
          %v1185 = vadd.f32 %v1173, %v1179
          %v1186 = vadd.f32 %v1174, %v1180
          %v1187 = vadd.f32 %v1175, %v1181
          %v1188 = vadd.f32 %v1176, %v1182
          %v1189 = vadd.f32 %v1177, %v1183
          %v1190 = vmul.f32 %v702, %v1095
          %v1191 = vmul.f32 %v702, %v1097
          %v1192 = vmul.f32 %v702, %v1099
          %v1193 = vmul.f32 %v702, %v1101
          %v1194 = vmul.f32 %v702, %v1103
          %v1195 = vmul.f32 %v702, %v1105
          %v1196 = vadd.f32 %v1184, %v1190
          %v1197 = vadd.f32 %v1185, %v1191
          %v1198 = vadd.f32 %v1186, %v1192
          %v1199 = vadd.f32 %v1187, %v1193
          %v1200 = vadd.f32 %v1188, %v1194
          %v1201 = vadd.f32 %v1189, %v1195
          %v1202 = vadd.f32 %v1196, %v715
          %v1203 = vadd.f32 %v1197, %v715
          %v1204 = vadd.f32 %v1198, %v715
          %v1205 = vadd.f32 %v1199, %v715
          %v1206 = vadd.f32 %v1200, %v715
          %v1207 = vadd.f32 %v1201, %v715
          %v1208 = vmax.f32 %v1202, 0.0
          %v1209 = vmax.f32 %v1203, 0.0
          %v1210 = vmax.f32 %v1204, 0.0
          %v1211 = vmax.f32 %v1205, 0.0
          %v1212 = vmax.f32 %v1206, 0.0
          %v1213 = vmax.f32 %v1207, 0.0
          %v1214 = vmul.f32 %v1142, %v540
          %v1215 = vmul.f32 %v1143, %v541
          %v1216 = vmul.f32 %v1144, %v542
          %v1217 = vmul.f32 %v1145, %v543
          %v1218 = vmul.f32 %v1146, %v544
          %v1219 = vmul.f32 %v1147, %v545
          %v1220 = vmul.f32 %v1208, %v540
          %v1221 = vmul.f32 %v1209, %v541
          %v1222 = vmul.f32 %v1210, %v542
          %v1223 = vmul.f32 %v1211, %v543
          %v1224 = vmul.f32 %v1212, %v544
          %v1225 = vmul.f32 %v1213, %v545
          %v1226 = vld [vmem:[#allocation2] sm:$0x1]
          %v1227 = vadd.f32 %v1214, %v1215
          %v1228 = vadd.f32 %v1227, %v1216
          %v1229 = vadd.f32 %v1228, %v1217
          %v1230 = vadd.f32 %v1229, %v1218
          %v1231 = vadd.f32 %v1230, %v1219
          %v1232 = vrot.slane %v1231, 4
          %v1233 = vadd.f32 %v1231, %v1232
          %v1234 = vrot.slane %v1233, 2
          %v1235 = vadd.f32 %v1233, %v1234
          %v1236 = vrot.slane %v1235, 1
          %v1237 = vadd.f32 %v1235, %v1236
          %v1238 = vadd.f32 %v1226, %v1237
          %1239 = vst [vmem:[#allocation2] sm:$0x1] %v1238
          %v1240 = vld [vmem:[#allocation2 + $0x1] sm:$0x1]
          %v1241 = vmul.f32 %v1142, %v1214
          %v1242 = vmul.f32 %v1143, %v1215
          %v1243 = vmul.f32 %v1144, %v1216
          %v1244 = vmul.f32 %v1145, %v1217
          %v1245 = vmul.f32 %v1146, %v1218
          %v1246 = vmul.f32 %v1147, %v1219
          %v1247 = vadd.f32 %v1241, %v1242
          %v1248 = vadd.f32 %v1247, %v1243
          %v1249 = vadd.f32 %v1248, %v1244
          %v1250 = vadd.f32 %v1249, %v1245
          %v1251 = vadd.f32 %v1250, %v1246
          %v1252 = vrot.slane %v1251, 4
          %v1253 = vadd.f32 %v1251, %v1252
          %v1254 = vrot.slane %v1253, 2
          %v1255 = vadd.f32 %v1253, %v1254
          %v1256 = vrot.slane %v1255, 1
          %v1257 = vadd.f32 %v1255, %v1256
          %v1258 = vadd.f32 %v1240, %v1257
          %1259 = vst [vmem:[#allocation2 + $0x1] sm:$0x1] %v1258
          %v1260 = vld [vmem:[#allocation3] sm:$0x1]
          %v1261 = vadd.f32 %v1220, %v1221
          %v1262 = vadd.f32 %v1261, %v1222
          %v1263 = vadd.f32 %v1262, %v1223
          %v1264 = vadd.f32 %v1263, %v1224
          %v1265 = vadd.f32 %v1264, %v1225
          %v1266 = vrot.slane %v1265, 4
          %v1267 = vadd.f32 %v1265, %v1266
          %v1268 = vrot.slane %v1267, 2
          %v1269 = vadd.f32 %v1267, %v1268
          %v1270 = vrot.slane %v1269, 1
          %v1271 = vadd.f32 %v1269, %v1270
          %v1272 = vadd.f32 %v1260, %v1271
          %1273 = vst [vmem:[#allocation3] sm:$0x1] %v1272
          %v1274 = vld [vmem:[#allocation3 + $0x1] sm:$0x1]
          %v1275 = vmul.f32 %v1208, %v1220
          %v1276 = vmul.f32 %v1209, %v1221
          %v1277 = vmul.f32 %v1210, %v1222
          %v1278 = vmul.f32 %v1211, %v1223
          %v1279 = vmul.f32 %v1212, %v1224
          %v1280 = vmul.f32 %v1213, %v1225
          %v1281 = vadd.f32 %v1275, %v1276
          %v1282 = vadd.f32 %v1281, %v1277
          %v1283 = vadd.f32 %v1282, %v1278
          %v1284 = vadd.f32 %v1283, %v1279
          %v1285 = vadd.f32 %v1284, %v1280
          %v1286 = vrot.slane %v1285, 4
          %v1287 = vadd.f32 %v1285, %v1286
          %v1288 = vrot.slane %v1287, 2
          %v1289 = vadd.f32 %v1287, %v1288
          %v1290 = vrot.slane %v1289, 1
          %v1291 = vadd.f32 %v1289, %v1290
          %v1292 = vadd.f32 %v1274, %v1291
          %1293 = vst [vmem:[#allocation3 + $0x1] sm:$0x1] %v1292
          %s1294 = scalar_lea.vmem %s463, 144 [#allocation12]
          %v1295 = vld [vmem:[%s1294] sm:$0xff]
          %v1296 = vld [vmem:[%s1294 + $0x8] sm:$0xff]
          %v1297 = vld [vmem:[%s1294 + $0x10] sm:$0xff]
          %v1298 = vld [vmem:[%s1294 + $0x18] sm:$0xff]
          %v1299 = vld [vmem:[%s1294 + $0x20] sm:$0xff]
          %v1300 = vld [vmem:[%s1294 + $0x28] sm:$0xff]
          %1301 = vrot.lane.b32.xlu0 %v1295, 1
          %v1302 = vpop.permute.xlu0 %1301
          %1303 = vrot.lane.b32.xlu0 %v1296, 1
          %v1304 = vpop.permute.xlu0 %1303
          %1305 = vrot.lane.b32.xlu0 %v1297, 1
          %v1306 = vpop.permute.xlu0 %1305
          %1307 = vrot.lane.b32.xlu0 %v1298, 1
          %v1308 = vpop.permute.xlu0 %1307
          %1309 = vrot.lane.b32.xlu0 %v1299, 1
          %v1310 = vpop.permute.xlu0 %1309
          %1311 = vrot.lane.b32.xlu0 %v1300, 1
          %v1312 = vpop.permute.xlu0 %1311
          %1313 = vrot.lane.b32.xlu0 %v1295, 127
          %v1314 = vpop.permute.xlu0 %1313
          %1315 = vrot.lane.b32.xlu0 %v1296, 127
          %v1316 = vpop.permute.xlu0 %1315
          %1317 = vrot.lane.b32.xlu0 %v1297, 127
          %v1318 = vpop.permute.xlu0 %1317
          %1319 = vrot.lane.b32.xlu0 %v1298, 127
          %v1320 = vpop.permute.xlu0 %1319
          %1321 = vrot.lane.b32.xlu0 %v1299, 127
          %v1322 = vpop.permute.xlu0 %1321
          %1323 = vrot.lane.b32.xlu0 %v1300, 127
          %v1324 = vpop.permute.xlu0 %1323
          %1325 = vrot.lane.b32.xlu0 %v1295, 2
          %v1326 = vpop.permute.xlu0 %1325
          %1327 = vrot.lane.b32.xlu0 %v1296, 2
          %v1328 = vpop.permute.xlu0 %1327
          %1329 = vrot.lane.b32.xlu0 %v1297, 2
          %v1330 = vpop.permute.xlu0 %1329
          %1331 = vrot.lane.b32.xlu0 %v1298, 2
          %v1332 = vpop.permute.xlu0 %1331
          %1333 = vrot.lane.b32.xlu0 %v1299, 2
          %v1334 = vpop.permute.xlu0 %1333
          %1335 = vrot.lane.b32.xlu0 %v1300, 2
          %v1336 = vpop.permute.xlu0 %1335
          %1337 = vrot.lane.b32.xlu0 %v1295, 126
          %v1338 = vpop.permute.xlu0 %1337
          %1339 = vrot.lane.b32.xlu0 %v1296, 126
          %v1340 = vpop.permute.xlu0 %1339
          %1341 = vrot.lane.b32.xlu0 %v1297, 126
          %v1342 = vpop.permute.xlu0 %1341
          %1343 = vrot.lane.b32.xlu0 %v1298, 126
          %v1344 = vpop.permute.xlu0 %1343
          %1345 = vrot.lane.b32.xlu0 %v1299, 126
          %v1346 = vpop.permute.xlu0 %1345
          %1347 = vrot.lane.b32.xlu0 %v1300, 126
          %v1348 = vpop.permute.xlu0 %1347
          %v1349 = vmul.f32 %v610, %v1302
          %v1350 = vmul.f32 %v610, %v1304
          %v1351 = vmul.f32 %v610, %v1306
          %v1352 = vmul.f32 %v610, %v1308
          %v1353 = vmul.f32 %v610, %v1310
          %v1354 = vmul.f32 %v610, %v1312
          %v1355 = vmul.f32 %v617, %v1295
          %v1356 = vmul.f32 %v617, %v1296
          %v1357 = vmul.f32 %v617, %v1297
          %v1358 = vmul.f32 %v617, %v1298
          %v1359 = vmul.f32 %v617, %v1299
          %v1360 = vmul.f32 %v617, %v1300
          %v1361 = vadd.f32 %v1349, %v1355
          %v1362 = vadd.f32 %v1350, %v1356
          %v1363 = vadd.f32 %v1351, %v1357
          %v1364 = vadd.f32 %v1352, %v1358
          %v1365 = vadd.f32 %v1353, %v1359
          %v1366 = vadd.f32 %v1354, %v1360
          %v1367 = vmul.f32 %v630, %v1314
          %v1368 = vmul.f32 %v630, %v1316
          %v1369 = vmul.f32 %v630, %v1318
          %v1370 = vmul.f32 %v630, %v1320
          %v1371 = vmul.f32 %v630, %v1322
          %v1372 = vmul.f32 %v630, %v1324
          %v1373 = vadd.f32 %v1361, %v1367
          %v1374 = vadd.f32 %v1362, %v1368
          %v1375 = vadd.f32 %v1363, %v1369
          %v1376 = vadd.f32 %v1364, %v1370
          %v1377 = vadd.f32 %v1365, %v1371
          %v1378 = vadd.f32 %v1366, %v1372
          %v1379 = vadd.f32 %v1373, %v643
          %v1380 = vadd.f32 %v1374, %v643
          %v1381 = vadd.f32 %v1375, %v643
          %v1382 = vadd.f32 %v1376, %v643
          %v1383 = vadd.f32 %v1377, %v643
          %v1384 = vadd.f32 %v1378, %v643
          %v1385 = vmax.f32 %v1379, 0.0
          %v1386 = vmax.f32 %v1380, 0.0
          %v1387 = vmax.f32 %v1381, 0.0
          %v1388 = vmax.f32 %v1382, 0.0
          %v1389 = vmax.f32 %v1383, 0.0
          %v1390 = vmax.f32 %v1384, 0.0
          %v1391 = vmul.f32 %v656, %v1326
          %v1392 = vmul.f32 %v656, %v1328
          %v1393 = vmul.f32 %v656, %v1330
          %v1394 = vmul.f32 %v656, %v1332
          %v1395 = vmul.f32 %v656, %v1334
          %v1396 = vmul.f32 %v656, %v1336
          %v1397 = vmul.f32 %v663, %v1302
          %v1398 = vmul.f32 %v663, %v1304
          %v1399 = vmul.f32 %v663, %v1306
          %v1400 = vmul.f32 %v663, %v1308
          %v1401 = vmul.f32 %v663, %v1310
          %v1402 = vmul.f32 %v663, %v1312
          %v1403 = vadd.f32 %v1391, %v1397
          %v1404 = vadd.f32 %v1392, %v1398
          %v1405 = vadd.f32 %v1393, %v1399
          %v1406 = vadd.f32 %v1394, %v1400
          %v1407 = vadd.f32 %v1395, %v1401
          %v1408 = vadd.f32 %v1396, %v1402
          %v1409 = vmul.f32 %v676, %v1295
          %v1410 = vmul.f32 %v676, %v1296
          %v1411 = vmul.f32 %v676, %v1297
          %v1412 = vmul.f32 %v676, %v1298
          %v1413 = vmul.f32 %v676, %v1299
          %v1414 = vmul.f32 %v676, %v1300
          %v1415 = vadd.f32 %v1403, %v1409
          %v1416 = vadd.f32 %v1404, %v1410
          %v1417 = vadd.f32 %v1405, %v1411
          %v1418 = vadd.f32 %v1406, %v1412
          %v1419 = vadd.f32 %v1407, %v1413
          %v1420 = vadd.f32 %v1408, %v1414
          %v1421 = vmul.f32 %v689, %v1314
          %v1422 = vmul.f32 %v689, %v1316
          %v1423 = vmul.f32 %v689, %v1318
          %v1424 = vmul.f32 %v689, %v1320
          %v1425 = vmul.f32 %v689, %v1322
          %v1426 = vmul.f32 %v689, %v1324
          %v1427 = vadd.f32 %v1415, %v1421
          %v1428 = vadd.f32 %v1416, %v1422
          %v1429 = vadd.f32 %v1417, %v1423
          %v1430 = vadd.f32 %v1418, %v1424
          %v1431 = vadd.f32 %v1419, %v1425
          %v1432 = vadd.f32 %v1420, %v1426
          %v1433 = vmul.f32 %v702, %v1338
          %v1434 = vmul.f32 %v702, %v1340
          %v1435 = vmul.f32 %v702, %v1342
          %v1436 = vmul.f32 %v702, %v1344
          %v1437 = vmul.f32 %v702, %v1346
          %v1438 = vmul.f32 %v702, %v1348
          %v1439 = vadd.f32 %v1427, %v1433
          %v1440 = vadd.f32 %v1428, %v1434
          %v1441 = vadd.f32 %v1429, %v1435
          %v1442 = vadd.f32 %v1430, %v1436
          %v1443 = vadd.f32 %v1431, %v1437
          %v1444 = vadd.f32 %v1432, %v1438
          %v1445 = vadd.f32 %v1439, %v715
          %v1446 = vadd.f32 %v1440, %v715
          %v1447 = vadd.f32 %v1441, %v715
          %v1448 = vadd.f32 %v1442, %v715
          %v1449 = vadd.f32 %v1443, %v715
          %v1450 = vadd.f32 %v1444, %v715
          %v1451 = vmax.f32 %v1445, 0.0
          %v1452 = vmax.f32 %v1446, 0.0
          %v1453 = vmax.f32 %v1447, 0.0
          %v1454 = vmax.f32 %v1448, 0.0
          %v1455 = vmax.f32 %v1449, 0.0
          %v1456 = vmax.f32 %v1450, 0.0
          %v1457 = vmul.f32 %v1385, %v540
          %v1458 = vmul.f32 %v1386, %v541
          %v1459 = vmul.f32 %v1387, %v542
          %v1460 = vmul.f32 %v1388, %v543
          %v1461 = vmul.f32 %v1389, %v544
          %v1462 = vmul.f32 %v1390, %v545
          %v1463 = vmul.f32 %v1451, %v540
          %v1464 = vmul.f32 %v1452, %v541
          %v1465 = vmul.f32 %v1453, %v542
          %v1466 = vmul.f32 %v1454, %v543
          %v1467 = vmul.f32 %v1455, %v544
          %v1468 = vmul.f32 %v1456, %v545
          %v1469 = vld [vmem:[#allocation2] sm:$0x1]
          %v1470 = vadd.f32 %v1457, %v1458
          %v1471 = vadd.f32 %v1470, %v1459
          %v1472 = vadd.f32 %v1471, %v1460
          %v1473 = vadd.f32 %v1472, %v1461
          %v1474 = vadd.f32 %v1473, %v1462
          %v1475 = vrot.slane %v1474, 4
          %v1476 = vadd.f32 %v1474, %v1475
          %v1477 = vrot.slane %v1476, 2
          %v1478 = vadd.f32 %v1476, %v1477
          %v1479 = vrot.slane %v1478, 1
          %v1480 = vadd.f32 %v1478, %v1479
          %v1481 = vadd.f32 %v1469, %v1480
          %1482 = vst [vmem:[#allocation2] sm:$0x1] %v1481
          %v1483 = vld [vmem:[#allocation2 + $0x1] sm:$0x1]
          %v1484 = vmul.f32 %v1385, %v1457
          %v1485 = vmul.f32 %v1386, %v1458
          %v1486 = vmul.f32 %v1387, %v1459
          %v1487 = vmul.f32 %v1388, %v1460
          %v1488 = vmul.f32 %v1389, %v1461
          %v1489 = vmul.f32 %v1390, %v1462
          %v1490 = vadd.f32 %v1484, %v1485
          %v1491 = vadd.f32 %v1490, %v1486
          %v1492 = vadd.f32 %v1491, %v1487
          %v1493 = vadd.f32 %v1492, %v1488
          %v1494 = vadd.f32 %v1493, %v1489
          %v1495 = vrot.slane %v1494, 4
          %v1496 = vadd.f32 %v1494, %v1495
          %v1497 = vrot.slane %v1496, 2
          %v1498 = vadd.f32 %v1496, %v1497
          %v1499 = vrot.slane %v1498, 1
          %v1500 = vadd.f32 %v1498, %v1499
          %v1501 = vadd.f32 %v1483, %v1500
          %1502 = vst [vmem:[#allocation2 + $0x1] sm:$0x1] %v1501
          %v1503 = vld [vmem:[#allocation3] sm:$0x1]
          %v1504 = vadd.f32 %v1463, %v1464
          %v1505 = vadd.f32 %v1504, %v1465
          %v1506 = vadd.f32 %v1505, %v1466
          %v1507 = vadd.f32 %v1506, %v1467
          %v1508 = vadd.f32 %v1507, %v1468
          %v1509 = vrot.slane %v1508, 4
          %v1510 = vadd.f32 %v1508, %v1509
          %v1511 = vrot.slane %v1510, 2
          %v1512 = vadd.f32 %v1510, %v1511
          %v1513 = vrot.slane %v1512, 1
          %v1514 = vadd.f32 %v1512, %v1513
          %v1515 = vadd.f32 %v1503, %v1514
          %1516 = vst [vmem:[#allocation3] sm:$0x1] %v1515
          %v1517 = vld [vmem:[#allocation3 + $0x1] sm:$0x1]
          %v1518 = vmul.f32 %v1451, %v1463
          %v1519 = vmul.f32 %v1452, %v1464
          %v1520 = vmul.f32 %v1453, %v1465
          %v1521 = vmul.f32 %v1454, %v1466
          %v1522 = vmul.f32 %v1455, %v1467
          %v1523 = vmul.f32 %v1456, %v1468
          %v1524 = vadd.f32 %v1518, %v1519
          %v1525 = vadd.f32 %v1524, %v1520
          %v1526 = vadd.f32 %v1525, %v1521
          %v1527 = vadd.f32 %v1526, %v1522
          %v1528 = vadd.f32 %v1527, %v1523
          %v1529 = vrot.slane %v1528, 4
          %v1530 = vadd.f32 %v1528, %v1529
          %v1531 = vrot.slane %v1530, 2
          %v1532 = vadd.f32 %v1530, %v1531
          %v1533 = vrot.slane %v1532, 1
          %v1534 = vadd.f32 %v1532, %v1533
          %v1535 = vadd.f32 %v1517, %v1534
          %1536 = vst [vmem:[#allocation3 + $0x1] sm:$0x1] %v1535
          %p1537 = scmp.eq.s32.totalorder %s30, 2
          // Predicated region
          $region107: #{spectral_encoder_forward.2} parent=101 // pred_check
            %p1538 = pneg %p1537
          $region108: #{spectral_encoder_forward.2} parent=101 // pred_check_branch
            %1540 = sbr.rel (%p1538) target = $region110
          $region109: #{spectral_encoder_forward.2} parent=101 // pred_region
            %v1541 = vld [vmem:[#allocation2] sm:$0x1]
            %v1542 = vmul.f32 %v1541, 0.001953125
            %v1543 = vld [vmem:[#allocation2 + $0x1] sm:$0x1]
            %v1544 = vmul.f32 %v1543, 0.001953125
            %v1545 = vmul.f32 %v1542, %v1542
            %v1546 = vsub.f32 %v1544, %v1545
            %v1547 = vmax.f32 %v1546, 0.0
            %v1548 = vld [vmem:[%s5] sm:$0x1]
            %v1549 = vadd.f32 %v1547, 1e-05
            %v1550 = vrsqrt.pop %v1549
            %v1551 = vmul.f32 %v1548, %v1550
            %1552 = vst [vmem:[#allocation4] sm:$0x1] %v1551
            %v1553 = vld [vmem:[%s5 + $0x1] sm:$0x1]
            %v1554 = vmul.f32 %v1542, %v1551
            %v1555 = vsub.f32 %v1553, %v1554
            %1556 = vst [vmem:[#allocation4 + $0x1] sm:$0x1] %v1555
            %v1557 = vld [vmem:[#allocation3] sm:$0x1]
            %v1558 = vmul.f32 %v1557, 0.001953125
            %v1559 = vld [vmem:[#allocation3 + $0x1] sm:$0x1]
            %v1560 = vmul.f32 %v1559, 0.001953125
            %v1561 = vmul.f32 %v1558, %v1558
            %v1562 = vsub.f32 %v1560, %v1561
            %v1563 = vmax.f32 %v1562, 0.0
            %v1564 = vld [vmem:[%s5 + $0x2] sm:$0x1]
            %v1565 = vadd.f32 %v1563, 1e-05
            %v1566 = vrsqrt.pop %v1565
            %v1567 = vmul.f32 %v1564, %v1566
            %1568 = vst [vmem:[#allocation4 + $0x2] sm:$0x1] %v1567
            %v1569 = vld [vmem:[%s5 + $0x3] sm:$0x1]
            %v1570 = vmul.f32 %v1558, %v1567
            %v1571 = vsub.f32 %v1569, %v1570
            %1572 = vst [vmem:[#allocation4 + $0x3] sm:$0x1] %v1571
          $region110: #{spectral_encoder_forward.2} parent=101 // pred_fallthru
            _
        $region102: #{spectral_encoder_forward.2} parent=85 // pred_fallthru
          _
        %p1573 = scmp.eq.s32.totalorder %s29, 1
        // Predicated region
        $region111: #{spectral_encoder_forward.2} parent=85 // pred_check
          %p1574 = pneg %p1573
        $region112: #{spectral_encoder_forward.2} parent=85 // pred_check_branch
          %1576 = sbr.rel (%p1574) target = $region114
        $region113: #{spectral_encoder_forward.2} parent=85 // pred_region
          %p1577 = scmp.eq.s32.totalorder %s30, 0
          // Predicated region
          $region115: #{spectral_encoder_forward.2} parent=113 // pred_check
            %p1578 = pneg %p1577
          $region116: #{spectral_encoder_forward.2} parent=113 // pred_check_branch
            %1580 = sbr.rel (%p1578) target = $region118
          $region117: #{spectral_encoder_forward.2} parent=113 // pred_region
            %1581 = vst [vmem:[#allocation5] sm:$0x3] 0.0
          $region118: #{spectral_encoder_forward.2} parent=113 // pred_fallthru
            _
          %v1582 = vld [vmem:[%s463] sm:$0xff]
          %v1583 = vld [vmem:[%s463 + $0x8] sm:$0xff]
          %v1584 = vld [vmem:[%s463 + $0x10] sm:$0xff]
          %v1585 = vld [vmem:[%s463 + $0x18] sm:$0xff]
          %v1586 = vld [vmem:[%s463 + $0x20] sm:$0xff]
          %v1587 = vld [vmem:[%s463 + $0x28] sm:$0xff]
          %1588 = vrot.lane.b32.xlu0 %v1582, 1
          %v1589 = vpop.permute.xlu0 %1588
          %1590 = vrot.lane.b32.xlu0 %v1583, 1
          %v1591 = vpop.permute.xlu0 %1590
          %1592 = vrot.lane.b32.xlu0 %v1584, 1
          %v1593 = vpop.permute.xlu0 %1592
          %1594 = vrot.lane.b32.xlu0 %v1585, 1
          %v1595 = vpop.permute.xlu0 %1594
          %1596 = vrot.lane.b32.xlu0 %v1586, 1
          %v1597 = vpop.permute.xlu0 %1596
          %1598 = vrot.lane.b32.xlu0 %v1587, 1
          %v1599 = vpop.permute.xlu0 %1598
          %1600 = vrot.lane.b32.xlu0 %v1582, 127
          %v1601 = vpop.permute.xlu0 %1600
          %1602 = vrot.lane.b32.xlu0 %v1583, 127
          %v1603 = vpop.permute.xlu0 %1602
          %1604 = vrot.lane.b32.xlu0 %v1584, 127
          %v1605 = vpop.permute.xlu0 %1604
          %1606 = vrot.lane.b32.xlu0 %v1585, 127
          %v1607 = vpop.permute.xlu0 %1606
          %1608 = vrot.lane.b32.xlu0 %v1586, 127
          %v1609 = vpop.permute.xlu0 %1608
          %1610 = vrot.lane.b32.xlu0 %v1587, 127
          %v1611 = vpop.permute.xlu0 %1610
          %1612 = vrot.lane.b32.xlu0 %v1582, 2
          %v1613 = vpop.permute.xlu0 %1612
          %1614 = vrot.lane.b32.xlu0 %v1583, 2
          %v1615 = vpop.permute.xlu0 %1614
          %1616 = vrot.lane.b32.xlu0 %v1584, 2
          %v1617 = vpop.permute.xlu0 %1616
          %1618 = vrot.lane.b32.xlu0 %v1585, 2
          %v1619 = vpop.permute.xlu0 %1618
          %1620 = vrot.lane.b32.xlu0 %v1586, 2
          %v1621 = vpop.permute.xlu0 %1620
          %1622 = vrot.lane.b32.xlu0 %v1587, 2
          %v1623 = vpop.permute.xlu0 %1622
          %1624 = vrot.lane.b32.xlu0 %v1582, 126
          %v1625 = vpop.permute.xlu0 %1624
          %1626 = vrot.lane.b32.xlu0 %v1583, 126
          %v1627 = vpop.permute.xlu0 %1626
          %1628 = vrot.lane.b32.xlu0 %v1584, 126
          %v1629 = vpop.permute.xlu0 %1628
          %1630 = vrot.lane.b32.xlu0 %v1585, 126
          %v1631 = vpop.permute.xlu0 %1630
          %1632 = vrot.lane.b32.xlu0 %v1586, 126
          %v1633 = vpop.permute.xlu0 %1632
          %1634 = vrot.lane.b32.xlu0 %v1587, 126
          %v1635 = vpop.permute.xlu0 %1634
          %v1636 = vstv %s508
          %v1637 = vmul.f32 %v1636, %v1589
          %v1638 = vmul.f32 %v1636, %v1591
          %v1639 = vmul.f32 %v1636, %v1593
          %v1640 = vmul.f32 %v1636, %v1595
          %v1641 = vmul.f32 %v1636, %v1597
          %v1642 = vmul.f32 %v1636, %v1599
          %v1643 = vstv %s509
          %v1644 = vmul.f32 %v1643, %v1582
          %v1645 = vmul.f32 %v1643, %v1583
          %v1646 = vmul.f32 %v1643, %v1584
          %v1647 = vmul.f32 %v1643, %v1585
          %v1648 = vmul.f32 %v1643, %v1586
          %v1649 = vmul.f32 %v1643, %v1587
          %v1650 = vadd.f32 %v1637, %v1644
          %v1651 = vadd.f32 %v1638, %v1645
          %v1652 = vadd.f32 %v1639, %v1646
          %v1653 = vadd.f32 %v1640, %v1647
          %v1654 = vadd.f32 %v1641, %v1648
          %v1655 = vadd.f32 %v1642, %v1649
          %v1656 = vstv %s510
          %v1657 = vmul.f32 %v1656, %v1601
          %v1658 = vmul.f32 %v1656, %v1603
          %v1659 = vmul.f32 %v1656, %v1605
          %v1660 = vmul.f32 %v1656, %v1607
          %v1661 = vmul.f32 %v1656, %v1609
          %v1662 = vmul.f32 %v1656, %v1611
          %v1663 = vadd.f32 %v1650, %v1657
          %v1664 = vadd.f32 %v1651, %v1658
          %v1665 = vadd.f32 %v1652, %v1659
          %v1666 = vadd.f32 %v1653, %v1660
          %v1667 = vadd.f32 %v1654, %v1661
          %v1668 = vadd.f32 %v1655, %v1662
          %v1669 = vstv %s511
          %v1670 = vadd.f32 %v1663, %v1669
          %v1671 = vadd.f32 %v1664, %v1669
          %v1672 = vadd.f32 %v1665, %v1669
          %v1673 = vadd.f32 %v1666, %v1669
          %v1674 = vadd.f32 %v1667, %v1669
          %v1675 = vadd.f32 %v1668, %v1669
          %v1676 = vmax.f32 %v1670, 0.0
          %v1677 = vmax.f32 %v1671, 0.0
          %v1678 = vmax.f32 %v1672, 0.0
          %v1679 = vmax.f32 %v1673, 0.0
          %v1680 = vmax.f32 %v1674, 0.0
          %v1681 = vmax.f32 %v1675, 0.0
          %v1682 = vstv %s512
          %v1683 = vmul.f32 %v1682, %v1613
          %v1684 = vmul.f32 %v1682, %v1615
          %v1685 = vmul.f32 %v1682, %v1617
          %v1686 = vmul.f32 %v1682, %v1619
          %v1687 = vmul.f32 %v1682, %v1621
          %v1688 = vmul.f32 %v1682, %v1623
          %v1689 = vstv %s513
          %v1690 = vmul.f32 %v1689, %v1589
          %v1691 = vmul.f32 %v1689, %v1591
          %v1692 = vmul.f32 %v1689, %v1593
          %v1693 = vmul.f32 %v1689, %v1595
          %v1694 = vmul.f32 %v1689, %v1597
          %v1695 = vmul.f32 %v1689, %v1599
          %v1696 = vadd.f32 %v1683, %v1690
          %v1697 = vadd.f32 %v1684, %v1691
          %v1698 = vadd.f32 %v1685, %v1692
          %v1699 = vadd.f32 %v1686, %v1693
          %v1700 = vadd.f32 %v1687, %v1694
          %v1701 = vadd.f32 %v1688, %v1695
          %v1702 = vstv %s514
          %v1703 = vmul.f32 %v1702, %v1582
          %v1704 = vmul.f32 %v1702, %v1583
          %v1705 = vmul.f32 %v1702, %v1584
          %v1706 = vmul.f32 %v1702, %v1585
          %v1707 = vmul.f32 %v1702, %v1586
          %v1708 = vmul.f32 %v1702, %v1587
          %v1709 = vadd.f32 %v1696, %v1703
          %v1710 = vadd.f32 %v1697, %v1704
          %v1711 = vadd.f32 %v1698, %v1705
          %v1712 = vadd.f32 %v1699, %v1706
          %v1713 = vadd.f32 %v1700, %v1707
          %v1714 = vadd.f32 %v1701, %v1708
          %v1715 = vstv %s515
          %v1716 = vmul.f32 %v1715, %v1601
          %v1717 = vmul.f32 %v1715, %v1603
          %v1718 = vmul.f32 %v1715, %v1605
          %v1719 = vmul.f32 %v1715, %v1607
          %v1720 = vmul.f32 %v1715, %v1609
          %v1721 = vmul.f32 %v1715, %v1611
          %v1722 = vadd.f32 %v1709, %v1716
          %v1723 = vadd.f32 %v1710, %v1717
          %v1724 = vadd.f32 %v1711, %v1718
          %v1725 = vadd.f32 %v1712, %v1719
          %v1726 = vadd.f32 %v1713, %v1720
          %v1727 = vadd.f32 %v1714, %v1721
          %v1728 = vstv %s516
          %v1729 = vmul.f32 %v1728, %v1625
          %v1730 = vmul.f32 %v1728, %v1627
          %v1731 = vmul.f32 %v1728, %v1629
          %v1732 = vmul.f32 %v1728, %v1631
          %v1733 = vmul.f32 %v1728, %v1633
          %v1734 = vmul.f32 %v1728, %v1635
          %v1735 = vadd.f32 %v1722, %v1729
          %v1736 = vadd.f32 %v1723, %v1730
          %v1737 = vadd.f32 %v1724, %v1731
          %v1738 = vadd.f32 %v1725, %v1732
          %v1739 = vadd.f32 %v1726, %v1733
          %v1740 = vadd.f32 %v1727, %v1734
          %v1741 = vstv %s517
          %v1742 = vadd.f32 %v1735, %v1741
          %v1743 = vadd.f32 %v1736, %v1741
          %v1744 = vadd.f32 %v1737, %v1741
          %v1745 = vadd.f32 %v1738, %v1741
          %v1746 = vadd.f32 %v1739, %v1741
          %v1747 = vadd.f32 %v1740, %v1741
          %v1748 = vmax.f32 %v1742, 0.0
          %v1749 = vmax.f32 %v1743, 0.0
          %v1750 = vmax.f32 %v1744, 0.0
          %v1751 = vmax.f32 %v1745, 0.0
          %v1752 = vmax.f32 %v1746, 0.0
          %v1753 = vmax.f32 %v1747, 0.0
          %s1754 = scalar_lea.vmem %s463, 48 [#allocation12]
          %v1755 = vld [vmem:[%s1754] sm:$0xff]
          %v1756 = vld [vmem:[%s1754 + $0x8] sm:$0xff]
          %v1757 = vld [vmem:[%s1754 + $0x10] sm:$0xff]
          %v1758 = vld [vmem:[%s1754 + $0x18] sm:$0xff]
          %v1759 = vld [vmem:[%s1754 + $0x20] sm:$0xff]
          %v1760 = vld [vmem:[%s1754 + $0x28] sm:$0xff]
          %1761 = vrot.lane.b32.xlu0 %v1755, 1
          %v1762 = vpop.permute.xlu0 %1761
          %1763 = vrot.lane.b32.xlu0 %v1756, 1
          %v1764 = vpop.permute.xlu0 %1763
          %1765 = vrot.lane.b32.xlu0 %v1757, 1
          %v1766 = vpop.permute.xlu0 %1765
          %1767 = vrot.lane.b32.xlu0 %v1758, 1
          %v1768 = vpop.permute.xlu0 %1767
          %1769 = vrot.lane.b32.xlu0 %v1759, 1
          %v1770 = vpop.permute.xlu0 %1769
          %1771 = vrot.lane.b32.xlu0 %v1760, 1
          %v1772 = vpop.permute.xlu0 %1771
          %1773 = vrot.lane.b32.xlu0 %v1755, 127
          %v1774 = vpop.permute.xlu0 %1773
          %1775 = vrot.lane.b32.xlu0 %v1756, 127
          %v1776 = vpop.permute.xlu0 %1775
          %1777 = vrot.lane.b32.xlu0 %v1757, 127
          %v1778 = vpop.permute.xlu0 %1777
          %1779 = vrot.lane.b32.xlu0 %v1758, 127
          %v1780 = vpop.permute.xlu0 %1779
          %1781 = vrot.lane.b32.xlu0 %v1759, 127
          %v1782 = vpop.permute.xlu0 %1781
          %1783 = vrot.lane.b32.xlu0 %v1760, 127
          %v1784 = vpop.permute.xlu0 %1783
          %1785 = vrot.lane.b32.xlu0 %v1755, 2
          %v1786 = vpop.permute.xlu0 %1785
          %1787 = vrot.lane.b32.xlu0 %v1756, 2
          %v1788 = vpop.permute.xlu0 %1787
          %1789 = vrot.lane.b32.xlu0 %v1757, 2
          %v1790 = vpop.permute.xlu0 %1789
          %1791 = vrot.lane.b32.xlu0 %v1758, 2
          %v1792 = vpop.permute.xlu0 %1791
          %1793 = vrot.lane.b32.xlu0 %v1759, 2
          %v1794 = vpop.permute.xlu0 %1793
          %1795 = vrot.lane.b32.xlu0 %v1760, 2
          %v1796 = vpop.permute.xlu0 %1795
          %1797 = vrot.lane.b32.xlu0 %v1755, 126
          %v1798 = vpop.permute.xlu0 %1797
          %1799 = vrot.lane.b32.xlu0 %v1756, 126
          %v1800 = vpop.permute.xlu0 %1799
          %1801 = vrot.lane.b32.xlu0 %v1757, 126
          %v1802 = vpop.permute.xlu0 %1801
          %1803 = vrot.lane.b32.xlu0 %v1758, 126
          %v1804 = vpop.permute.xlu0 %1803
          %1805 = vrot.lane.b32.xlu0 %v1759, 126
          %v1806 = vpop.permute.xlu0 %1805
          %1807 = vrot.lane.b32.xlu0 %v1760, 126
          %v1808 = vpop.permute.xlu0 %1807
          %v1809 = vmul.f32 %v1636, %v1762
          %v1810 = vmul.f32 %v1636, %v1764
          %v1811 = vmul.f32 %v1636, %v1766
          %v1812 = vmul.f32 %v1636, %v1768
          %v1813 = vmul.f32 %v1636, %v1770
          %v1814 = vmul.f32 %v1636, %v1772
          %v1815 = vmul.f32 %v1643, %v1755
          %v1816 = vmul.f32 %v1643, %v1756
          %v1817 = vmul.f32 %v1643, %v1757
          %v1818 = vmul.f32 %v1643, %v1758
          %v1819 = vmul.f32 %v1643, %v1759
          %v1820 = vmul.f32 %v1643, %v1760
          %v1821 = vadd.f32 %v1809, %v1815
          %v1822 = vadd.f32 %v1810, %v1816
          %v1823 = vadd.f32 %v1811, %v1817
          %v1824 = vadd.f32 %v1812, %v1818
          %v1825 = vadd.f32 %v1813, %v1819
          %v1826 = vadd.f32 %v1814, %v1820
          %v1827 = vmul.f32 %v1656, %v1774
          %v1828 = vmul.f32 %v1656, %v1776
          %v1829 = vmul.f32 %v1656, %v1778
          %v1830 = vmul.f32 %v1656, %v1780
          %v1831 = vmul.f32 %v1656, %v1782
          %v1832 = vmul.f32 %v1656, %v1784
          %v1833 = vadd.f32 %v1821, %v1827
          %v1834 = vadd.f32 %v1822, %v1828
          %v1835 = vadd.f32 %v1823, %v1829
          %v1836 = vadd.f32 %v1824, %v1830
          %v1837 = vadd.f32 %v1825, %v1831
          %v1838 = vadd.f32 %v1826, %v1832
          %v1839 = vadd.f32 %v1833, %v1669
          %v1840 = vadd.f32 %v1834, %v1669
          %v1841 = vadd.f32 %v1835, %v1669
          %v1842 = vadd.f32 %v1836, %v1669
          %v1843 = vadd.f32 %v1837, %v1669
          %v1844 = vadd.f32 %v1838, %v1669
          %v1845 = vmax.f32 %v1839, 0.0
          %v1846 = vmax.f32 %v1840, 0.0
          %v1847 = vmax.f32 %v1841, 0.0
          %v1848 = vmax.f32 %v1842, 0.0
          %v1849 = vmax.f32 %v1843, 0.0
          %v1850 = vmax.f32 %v1844, 0.0
          %v1851 = vmul.f32 %v1682, %v1786
          %v1852 = vmul.f32 %v1682, %v1788
          %v1853 = vmul.f32 %v1682, %v1790
          %v1854 = vmul.f32 %v1682, %v1792
          %v1855 = vmul.f32 %v1682, %v1794
          %v1856 = vmul.f32 %v1682, %v1796
          %v1857 = vmul.f32 %v1689, %v1762
          %v1858 = vmul.f32 %v1689, %v1764
          %v1859 = vmul.f32 %v1689, %v1766
          %v1860 = vmul.f32 %v1689, %v1768
          %v1861 = vmul.f32 %v1689, %v1770
          %v1862 = vmul.f32 %v1689, %v1772
          %v1863 = vadd.f32 %v1851, %v1857
          %v1864 = vadd.f32 %v1852, %v1858
          %v1865 = vadd.f32 %v1853, %v1859
          %v1866 = vadd.f32 %v1854, %v1860
          %v1867 = vadd.f32 %v1855, %v1861
          %v1868 = vadd.f32 %v1856, %v1862
          %v1869 = vmul.f32 %v1702, %v1755
          %v1870 = vmul.f32 %v1702, %v1756
          %v1871 = vmul.f32 %v1702, %v1757
          %v1872 = vmul.f32 %v1702, %v1758
          %v1873 = vmul.f32 %v1702, %v1759
          %v1874 = vmul.f32 %v1702, %v1760
          %v1875 = vadd.f32 %v1863, %v1869
          %v1876 = vadd.f32 %v1864, %v1870
          %v1877 = vadd.f32 %v1865, %v1871
          %v1878 = vadd.f32 %v1866, %v1872
          %v1879 = vadd.f32 %v1867, %v1873
          %v1880 = vadd.f32 %v1868, %v1874
          %v1881 = vmul.f32 %v1715, %v1774
          %v1882 = vmul.f32 %v1715, %v1776
          %v1883 = vmul.f32 %v1715, %v1778
          %v1884 = vmul.f32 %v1715, %v1780
          %v1885 = vmul.f32 %v1715, %v1782
          %v1886 = vmul.f32 %v1715, %v1784
          %v1887 = vadd.f32 %v1875, %v1881
          %v1888 = vadd.f32 %v1876, %v1882
          %v1889 = vadd.f32 %v1877, %v1883
          %v1890 = vadd.f32 %v1878, %v1884
          %v1891 = vadd.f32 %v1879, %v1885
          %v1892 = vadd.f32 %v1880, %v1886
          %v1893 = vmul.f32 %v1728, %v1798
          %v1894 = vmul.f32 %v1728, %v1800
          %v1895 = vmul.f32 %v1728, %v1802
          %v1896 = vmul.f32 %v1728, %v1804
          %v1897 = vmul.f32 %v1728, %v1806
          %v1898 = vmul.f32 %v1728, %v1808
          %v1899 = vadd.f32 %v1887, %v1893
          %v1900 = vadd.f32 %v1888, %v1894
          %v1901 = vadd.f32 %v1889, %v1895
          %v1902 = vadd.f32 %v1890, %v1896
          %v1903 = vadd.f32 %v1891, %v1897
          %v1904 = vadd.f32 %v1892, %v1898
          %v1905 = vadd.f32 %v1899, %v1741
          %v1906 = vadd.f32 %v1900, %v1741
          %v1907 = vadd.f32 %v1901, %v1741
          %v1908 = vadd.f32 %v1902, %v1741
          %v1909 = vadd.f32 %v1903, %v1741
          %v1910 = vadd.f32 %v1904, %v1741
          %v1911 = vmax.f32 %v1905, 0.0
          %v1912 = vmax.f32 %v1906, 0.0
          %v1913 = vmax.f32 %v1907, 0.0
          %v1914 = vmax.f32 %v1908, 0.0
          %v1915 = vmax.f32 %v1909, 0.0
          %v1916 = vmax.f32 %v1910, 0.0
          %v1917 = vmax.f32 %v1676, %v1845
          %v1918 = vmax.f32 %v1677, %v1846
          %v1919 = vmax.f32 %v1678, %v1847
          %v1920 = vmax.f32 %v1679, %v1848
          %v1921 = vmax.f32 %v1680, %v1849
          %v1922 = vmax.f32 %v1681, %v1850
          %v1923 = vmin.f32 %v1676, %v1845
          %v1924 = vmin.f32 %v1677, %v1846
          %v1925 = vmin.f32 %v1678, %v1847
          %v1926 = vmin.f32 %v1679, %v1848
          %v1927 = vmin.f32 %v1680, %v1849
          %v1928 = vmin.f32 %v1681, %v1850
          %v1929 = vmax.f32 %v1748, %v1911
          %v1930 = vmax.f32 %v1749, %v1912
          %v1931 = vmax.f32 %v1750, %v1913
          %v1932 = vmax.f32 %v1751, %v1914
          %v1933 = vmax.f32 %v1752, %v1915
          %v1934 = vmax.f32 %v1753, %v1916
          %v1935 = vmin.f32 %v1748, %v1911
          %v1936 = vmin.f32 %v1749, %v1912
          %v1937 = vmin.f32 %v1750, %v1913
          %v1938 = vmin.f32 %v1751, %v1914
          %v1939 = vmin.f32 %v1752, %v1915
          %v1940 = vmin.f32 %v1753, %v1916
          %s1941 = scalar_lea.vmem %s463, 96 [#allocation12]
          %v1942 = vld [vmem:[%s1941] sm:$0xff]
          %v1943 = vld [vmem:[%s1941 + $0x8] sm:$0xff]
          %v1944 = vld [vmem:[%s1941 + $0x10] sm:$0xff]
          %v1945 = vld [vmem:[%s1941 + $0x18] sm:$0xff]
          %v1946 = vld [vmem:[%s1941 + $0x20] sm:$0xff]
          %v1947 = vld [vmem:[%s1941 + $0x28] sm:$0xff]
          %1948 = vrot.lane.b32.xlu0 %v1942, 1
          %v1949 = vpop.permute.xlu0 %1948
          %1950 = vrot.lane.b32.xlu0 %v1943, 1
          %v1951 = vpop.permute.xlu0 %1950
          %1952 = vrot.lane.b32.xlu0 %v1944, 1
          %v1953 = vpop.permute.xlu0 %1952
          %1954 = vrot.lane.b32.xlu0 %v1945, 1
          %v1955 = vpop.permute.xlu0 %1954
          %1956 = vrot.lane.b32.xlu0 %v1946, 1
          %v1957 = vpop.permute.xlu0 %1956
          %1958 = vrot.lane.b32.xlu0 %v1947, 1
          %v1959 = vpop.permute.xlu0 %1958
          %1960 = vrot.lane.b32.xlu0 %v1942, 127
          %v1961 = vpop.permute.xlu0 %1960
          %1962 = vrot.lane.b32.xlu0 %v1943, 127
          %v1963 = vpop.permute.xlu0 %1962
          %1964 = vrot.lane.b32.xlu0 %v1944, 127
          %v1965 = vpop.permute.xlu0 %1964
          %1966 = vrot.lane.b32.xlu0 %v1945, 127
          %v1967 = vpop.permute.xlu0 %1966
          %1968 = vrot.lane.b32.xlu0 %v1946, 127
          %v1969 = vpop.permute.xlu0 %1968
          %1970 = vrot.lane.b32.xlu0 %v1947, 127
          %v1971 = vpop.permute.xlu0 %1970
          %1972 = vrot.lane.b32.xlu0 %v1942, 2
          %v1973 = vpop.permute.xlu0 %1972
          %1974 = vrot.lane.b32.xlu0 %v1943, 2
          %v1975 = vpop.permute.xlu0 %1974
          %1976 = vrot.lane.b32.xlu0 %v1944, 2
          %v1977 = vpop.permute.xlu0 %1976
          %1978 = vrot.lane.b32.xlu0 %v1945, 2
          %v1979 = vpop.permute.xlu0 %1978
          %1980 = vrot.lane.b32.xlu0 %v1946, 2
          %v1981 = vpop.permute.xlu0 %1980
          %1982 = vrot.lane.b32.xlu0 %v1947, 2
          %v1983 = vpop.permute.xlu0 %1982
          %1984 = vrot.lane.b32.xlu0 %v1942, 126
          %v1985 = vpop.permute.xlu0 %1984
          %1986 = vrot.lane.b32.xlu0 %v1943, 126
          %v1987 = vpop.permute.xlu0 %1986
          %1988 = vrot.lane.b32.xlu0 %v1944, 126
          %v1989 = vpop.permute.xlu0 %1988
          %1990 = vrot.lane.b32.xlu0 %v1945, 126
          %v1991 = vpop.permute.xlu0 %1990
          %1992 = vrot.lane.b32.xlu0 %v1946, 126
          %v1993 = vpop.permute.xlu0 %1992
          %1994 = vrot.lane.b32.xlu0 %v1947, 126
          %v1995 = vpop.permute.xlu0 %1994
          %v1996 = vmul.f32 %v1636, %v1949
          %v1997 = vmul.f32 %v1636, %v1951
          %v1998 = vmul.f32 %v1636, %v1953
          %v1999 = vmul.f32 %v1636, %v1955
          %v2000 = vmul.f32 %v1636, %v1957
          %v2001 = vmul.f32 %v1636, %v1959
          %v2002 = vmul.f32 %v1643, %v1942
          %v2003 = vmul.f32 %v1643, %v1943
          %v2004 = vmul.f32 %v1643, %v1944
          %v2005 = vmul.f32 %v1643, %v1945
          %v2006 = vmul.f32 %v1643, %v1946
          %v2007 = vmul.f32 %v1643, %v1947
          %v2008 = vadd.f32 %v1996, %v2002
          %v2009 = vadd.f32 %v1997, %v2003
          %v2010 = vadd.f32 %v1998, %v2004
          %v2011 = vadd.f32 %v1999, %v2005
          %v2012 = vadd.f32 %v2000, %v2006
          %v2013 = vadd.f32 %v2001, %v2007
          %v2014 = vmul.f32 %v1656, %v1961
          %v2015 = vmul.f32 %v1656, %v1963
          %v2016 = vmul.f32 %v1656, %v1965
          %v2017 = vmul.f32 %v1656, %v1967
          %v2018 = vmul.f32 %v1656, %v1969
          %v2019 = vmul.f32 %v1656, %v1971
          %v2020 = vadd.f32 %v2008, %v2014
          %v2021 = vadd.f32 %v2009, %v2015
          %v2022 = vadd.f32 %v2010, %v2016
          %v2023 = vadd.f32 %v2011, %v2017
          %v2024 = vadd.f32 %v2012, %v2018
          %v2025 = vadd.f32 %v2013, %v2019
          %v2026 = vadd.f32 %v2020, %v1669
          %v2027 = vadd.f32 %v2021, %v1669
          %v2028 = vadd.f32 %v2022, %v1669
          %v2029 = vadd.f32 %v2023, %v1669
          %v2030 = vadd.f32 %v2024, %v1669
          %v2031 = vadd.f32 %v2025, %v1669
          %v2032 = vmax.f32 %v2026, 0.0
          %v2033 = vmax.f32 %v2027, 0.0
          %v2034 = vmax.f32 %v2028, 0.0
          %v2035 = vmax.f32 %v2029, 0.0
          %v2036 = vmax.f32 %v2030, 0.0
          %v2037 = vmax.f32 %v2031, 0.0
          %v2038 = vmul.f32 %v1682, %v1973
          %v2039 = vmul.f32 %v1682, %v1975
          %v2040 = vmul.f32 %v1682, %v1977
          %v2041 = vmul.f32 %v1682, %v1979
          %v2042 = vmul.f32 %v1682, %v1981
          %v2043 = vmul.f32 %v1682, %v1983
          %v2044 = vmul.f32 %v1689, %v1949
          %v2045 = vmul.f32 %v1689, %v1951
          %v2046 = vmul.f32 %v1689, %v1953
          %v2047 = vmul.f32 %v1689, %v1955
          %v2048 = vmul.f32 %v1689, %v1957
          %v2049 = vmul.f32 %v1689, %v1959
          %v2050 = vadd.f32 %v2038, %v2044
          %v2051 = vadd.f32 %v2039, %v2045
          %v2052 = vadd.f32 %v2040, %v2046
          %v2053 = vadd.f32 %v2041, %v2047
          %v2054 = vadd.f32 %v2042, %v2048
          %v2055 = vadd.f32 %v2043, %v2049
          %v2056 = vmul.f32 %v1702, %v1942
          %v2057 = vmul.f32 %v1702, %v1943
          %v2058 = vmul.f32 %v1702, %v1944
          %v2059 = vmul.f32 %v1702, %v1945
          %v2060 = vmul.f32 %v1702, %v1946
          %v2061 = vmul.f32 %v1702, %v1947
          %v2062 = vadd.f32 %v2050, %v2056
          %v2063 = vadd.f32 %v2051, %v2057
          %v2064 = vadd.f32 %v2052, %v2058
          %v2065 = vadd.f32 %v2053, %v2059
          %v2066 = vadd.f32 %v2054, %v2060
          %v2067 = vadd.f32 %v2055, %v2061
          %v2068 = vmul.f32 %v1715, %v1961
          %v2069 = vmul.f32 %v1715, %v1963
          %v2070 = vmul.f32 %v1715, %v1965
          %v2071 = vmul.f32 %v1715, %v1967
          %v2072 = vmul.f32 %v1715, %v1969
          %v2073 = vmul.f32 %v1715, %v1971
          %v2074 = vadd.f32 %v2062, %v2068
          %v2075 = vadd.f32 %v2063, %v2069
          %v2076 = vadd.f32 %v2064, %v2070
          %v2077 = vadd.f32 %v2065, %v2071
          %v2078 = vadd.f32 %v2066, %v2072
          %v2079 = vadd.f32 %v2067, %v2073
          %v2080 = vmul.f32 %v1728, %v1985
          %v2081 = vmul.f32 %v1728, %v1987
          %v2082 = vmul.f32 %v1728, %v1989
          %v2083 = vmul.f32 %v1728, %v1991
          %v2084 = vmul.f32 %v1728, %v1993
          %v2085 = vmul.f32 %v1728, %v1995
          %v2086 = vadd.f32 %v2074, %v2080
          %v2087 = vadd.f32 %v2075, %v2081
          %v2088 = vadd.f32 %v2076, %v2082
          %v2089 = vadd.f32 %v2077, %v2083
          %v2090 = vadd.f32 %v2078, %v2084
          %v2091 = vadd.f32 %v2079, %v2085
          %v2092 = vadd.f32 %v2086, %v1741
          %v2093 = vadd.f32 %v2087, %v1741
          %v2094 = vadd.f32 %v2088, %v1741
          %v2095 = vadd.f32 %v2089, %v1741
          %v2096 = vadd.f32 %v2090, %v1741
          %v2097 = vadd.f32 %v2091, %v1741
          %v2098 = vmax.f32 %v2092, 0.0
          %v2099 = vmax.f32 %v2093, 0.0
          %v2100 = vmax.f32 %v2094, 0.0
          %v2101 = vmax.f32 %v2095, 0.0
          %v2102 = vmax.f32 %v2096, 0.0
          %v2103 = vmax.f32 %v2097, 0.0
          %v2104 = vmax.f32 %v1917, %v2032
          %v2105 = vmax.f32 %v1918, %v2033
          %v2106 = vmax.f32 %v1919, %v2034
          %v2107 = vmax.f32 %v1920, %v2035
          %v2108 = vmax.f32 %v1921, %v2036
          %v2109 = vmax.f32 %v1922, %v2037
          %v2110 = vmin.f32 %v1923, %v2032
          %v2111 = vmin.f32 %v1924, %v2033
          %v2112 = vmin.f32 %v1925, %v2034
          %v2113 = vmin.f32 %v1926, %v2035
          %v2114 = vmin.f32 %v1927, %v2036
          %v2115 = vmin.f32 %v1928, %v2037
          %v2116 = vmax.f32 %v1929, %v2098
          %v2117 = vmax.f32 %v1930, %v2099
          %v2118 = vmax.f32 %v1931, %v2100
          %v2119 = vmax.f32 %v1932, %v2101
          %v2120 = vmax.f32 %v1933, %v2102
          %v2121 = vmax.f32 %v1934, %v2103
          %v2122 = vmin.f32 %v1935, %v2098
          %v2123 = vmin.f32 %v1936, %v2099
          %v2124 = vmin.f32 %v1937, %v2100
          %v2125 = vmin.f32 %v1938, %v2101
          %v2126 = vmin.f32 %v1939, %v2102
          %v2127 = vmin.f32 %v1940, %v2103
          %s2128 = scalar_lea.vmem %s463, 144 [#allocation12]
          %v2129 = vld [vmem:[%s2128] sm:$0xff]
          %v2130 = vld [vmem:[%s2128 + $0x8] sm:$0xff]
          %v2131 = vld [vmem:[%s2128 + $0x10] sm:$0xff]
          %v2132 = vld [vmem:[%s2128 + $0x18] sm:$0xff]
          %v2133 = vld [vmem:[%s2128 + $0x20] sm:$0xff]
          %v2134 = vld [vmem:[%s2128 + $0x28] sm:$0xff]
          %2135 = vrot.lane.b32.xlu0 %v2129, 1
          %v2136 = vpop.permute.xlu0 %2135
          %2137 = vrot.lane.b32.xlu0 %v2130, 1
          %v2138 = vpop.permute.xlu0 %2137
          %2139 = vrot.lane.b32.xlu0 %v2131, 1
          %v2140 = vpop.permute.xlu0 %2139
          %2141 = vrot.lane.b32.xlu0 %v2132, 1
          %v2142 = vpop.permute.xlu0 %2141
          %2143 = vrot.lane.b32.xlu0 %v2133, 1
          %v2144 = vpop.permute.xlu0 %2143
          %2145 = vrot.lane.b32.xlu0 %v2134, 1
          %v2146 = vpop.permute.xlu0 %2145
          %2147 = vrot.lane.b32.xlu0 %v2129, 127
          %v2148 = vpop.permute.xlu0 %2147
          %2149 = vrot.lane.b32.xlu0 %v2130, 127
          %v2150 = vpop.permute.xlu0 %2149
          %2151 = vrot.lane.b32.xlu0 %v2131, 127
          %v2152 = vpop.permute.xlu0 %2151
          %2153 = vrot.lane.b32.xlu0 %v2132, 127
          %v2154 = vpop.permute.xlu0 %2153
          %2155 = vrot.lane.b32.xlu0 %v2133, 127
          %v2156 = vpop.permute.xlu0 %2155
          %2157 = vrot.lane.b32.xlu0 %v2134, 127
          %v2158 = vpop.permute.xlu0 %2157
          %2159 = vrot.lane.b32.xlu0 %v2129, 2
          %v2160 = vpop.permute.xlu0 %2159
          %2161 = vrot.lane.b32.xlu0 %v2130, 2
          %v2162 = vpop.permute.xlu0 %2161
          %2163 = vrot.lane.b32.xlu0 %v2131, 2
          %v2164 = vpop.permute.xlu0 %2163
          %2165 = vrot.lane.b32.xlu0 %v2132, 2
          %v2166 = vpop.permute.xlu0 %2165
          %2167 = vrot.lane.b32.xlu0 %v2133, 2
          %v2168 = vpop.permute.xlu0 %2167
          %2169 = vrot.lane.b32.xlu0 %v2134, 2
          %v2170 = vpop.permute.xlu0 %2169
          %2171 = vrot.lane.b32.xlu0 %v2129, 126
          %v2172 = vpop.permute.xlu0 %2171
          %2173 = vrot.lane.b32.xlu0 %v2130, 126
          %v2174 = vpop.permute.xlu0 %2173
          %2175 = vrot.lane.b32.xlu0 %v2131, 126
          %v2176 = vpop.permute.xlu0 %2175
          %2177 = vrot.lane.b32.xlu0 %v2132, 126
          %v2178 = vpop.permute.xlu0 %2177
          %2179 = vrot.lane.b32.xlu0 %v2133, 126
          %v2180 = vpop.permute.xlu0 %2179
          %2181 = vrot.lane.b32.xlu0 %v2134, 126
          %v2182 = vpop.permute.xlu0 %2181
          %v2183 = vmul.f32 %v1636, %v2136
          %v2184 = vmul.f32 %v1636, %v2138
          %v2185 = vmul.f32 %v1636, %v2140
          %v2186 = vmul.f32 %v1636, %v2142
          %v2187 = vmul.f32 %v1636, %v2144
          %v2188 = vmul.f32 %v1636, %v2146
          %v2189 = vmul.f32 %v1643, %v2129
          %v2190 = vmul.f32 %v1643, %v2130
          %v2191 = vmul.f32 %v1643, %v2131
          %v2192 = vmul.f32 %v1643, %v2132
          %v2193 = vmul.f32 %v1643, %v2133
          %v2194 = vmul.f32 %v1643, %v2134
          %v2195 = vadd.f32 %v2183, %v2189
          %v2196 = vadd.f32 %v2184, %v2190
          %v2197 = vadd.f32 %v2185, %v2191
          %v2198 = vadd.f32 %v2186, %v2192
          %v2199 = vadd.f32 %v2187, %v2193
          %v2200 = vadd.f32 %v2188, %v2194
          %v2201 = vmul.f32 %v1656, %v2148
          %v2202 = vmul.f32 %v1656, %v2150
          %v2203 = vmul.f32 %v1656, %v2152
          %v2204 = vmul.f32 %v1656, %v2154
          %v2205 = vmul.f32 %v1656, %v2156
          %v2206 = vmul.f32 %v1656, %v2158
          %v2207 = vadd.f32 %v2195, %v2201
          %v2208 = vadd.f32 %v2196, %v2202
          %v2209 = vadd.f32 %v2197, %v2203
          %v2210 = vadd.f32 %v2198, %v2204
          %v2211 = vadd.f32 %v2199, %v2205
          %v2212 = vadd.f32 %v2200, %v2206
          %v2213 = vadd.f32 %v2207, %v1669
          %v2214 = vadd.f32 %v2208, %v1669
          %v2215 = vadd.f32 %v2209, %v1669
          %v2216 = vadd.f32 %v2210, %v1669
          %v2217 = vadd.f32 %v2211, %v1669
          %v2218 = vadd.f32 %v2212, %v1669
          %v2219 = vmax.f32 %v2213, 0.0
          %v2220 = vmax.f32 %v2214, 0.0
          %v2221 = vmax.f32 %v2215, 0.0
          %v2222 = vmax.f32 %v2216, 0.0
          %v2223 = vmax.f32 %v2217, 0.0
          %v2224 = vmax.f32 %v2218, 0.0
          %v2225 = vmul.f32 %v1682, %v2160
          %v2226 = vmul.f32 %v1682, %v2162
          %v2227 = vmul.f32 %v1682, %v2164
          %v2228 = vmul.f32 %v1682, %v2166
          %v2229 = vmul.f32 %v1682, %v2168
          %v2230 = vmul.f32 %v1682, %v2170
          %v2231 = vmul.f32 %v1689, %v2136
          %v2232 = vmul.f32 %v1689, %v2138
          %v2233 = vmul.f32 %v1689, %v2140
          %v2234 = vmul.f32 %v1689, %v2142
          %v2235 = vmul.f32 %v1689, %v2144
          %v2236 = vmul.f32 %v1689, %v2146
          %v2237 = vadd.f32 %v2225, %v2231
          %v2238 = vadd.f32 %v2226, %v2232
          %v2239 = vadd.f32 %v2227, %v2233
          %v2240 = vadd.f32 %v2228, %v2234
          %v2241 = vadd.f32 %v2229, %v2235
          %v2242 = vadd.f32 %v2230, %v2236
          %v2243 = vmul.f32 %v1702, %v2129
          %v2244 = vmul.f32 %v1702, %v2130
          %v2245 = vmul.f32 %v1702, %v2131
          %v2246 = vmul.f32 %v1702, %v2132
          %v2247 = vmul.f32 %v1702, %v2133
          %v2248 = vmul.f32 %v1702, %v2134
          %v2249 = vadd.f32 %v2237, %v2243
          %v2250 = vadd.f32 %v2238, %v2244
          %v2251 = vadd.f32 %v2239, %v2245
          %v2252 = vadd.f32 %v2240, %v2246
          %v2253 = vadd.f32 %v2241, %v2247
          %v2254 = vadd.f32 %v2242, %v2248
          %v2255 = vmul.f32 %v1715, %v2148
          %v2256 = vmul.f32 %v1715, %v2150
          %v2257 = vmul.f32 %v1715, %v2152
          %v2258 = vmul.f32 %v1715, %v2154
          %v2259 = vmul.f32 %v1715, %v2156
          %v2260 = vmul.f32 %v1715, %v2158
          %v2261 = vadd.f32 %v2249, %v2255
          %v2262 = vadd.f32 %v2250, %v2256
          %v2263 = vadd.f32 %v2251, %v2257
          %v2264 = vadd.f32 %v2252, %v2258
          %v2265 = vadd.f32 %v2253, %v2259
          %v2266 = vadd.f32 %v2254, %v2260
          %v2267 = vmul.f32 %v1728, %v2172
          %v2268 = vmul.f32 %v1728, %v2174
          %v2269 = vmul.f32 %v1728, %v2176
          %v2270 = vmul.f32 %v1728, %v2178
          %v2271 = vmul.f32 %v1728, %v2180
          %v2272 = vmul.f32 %v1728, %v2182
          %v2273 = vadd.f32 %v2261, %v2267
          %v2274 = vadd.f32 %v2262, %v2268
          %v2275 = vadd.f32 %v2263, %v2269
          %v2276 = vadd.f32 %v2264, %v2270
          %v2277 = vadd.f32 %v2265, %v2271
          %v2278 = vadd.f32 %v2266, %v2272
          %v2279 = vadd.f32 %v2273, %v1741
          %v2280 = vadd.f32 %v2274, %v1741
          %v2281 = vadd.f32 %v2275, %v1741
          %v2282 = vadd.f32 %v2276, %v1741
          %v2283 = vadd.f32 %v2277, %v1741
          %v2284 = vadd.f32 %v2278, %v1741
          %v2285 = vmax.f32 %v2279, 0.0
          %v2286 = vmax.f32 %v2280, 0.0
          %v2287 = vmax.f32 %v2281, 0.0
          %v2288 = vmax.f32 %v2282, 0.0
          %v2289 = vmax.f32 %v2283, 0.0
          %v2290 = vmax.f32 %v2284, 0.0
          %v2291 = vmax.f32 %v2104, %v2219
          %v2292 = vmax.f32 %v2105, %v2220
          %v2293 = vmax.f32 %v2106, %v2221
          %v2294 = vmax.f32 %v2107, %v2222
          %v2295 = vmax.f32 %v2108, %v2223
          %v2296 = vmax.f32 %v2109, %v2224
          %v2297 = vmin.f32 %v2110, %v2219
          %v2298 = vmin.f32 %v2111, %v2220
          %v2299 = vmin.f32 %v2112, %v2221
          %v2300 = vmin.f32 %v2113, %v2222
          %v2301 = vmin.f32 %v2114, %v2223
          %v2302 = vmin.f32 %v2115, %v2224
          %v2303 = vmax.f32 %v2116, %v2285
          %v2304 = vmax.f32 %v2117, %v2286
          %v2305 = vmax.f32 %v2118, %v2287
          %v2306 = vmax.f32 %v2119, %v2288
          %v2307 = vmax.f32 %v2120, %v2289
          %v2308 = vmax.f32 %v2121, %v2290
          %v2309 = vmin.f32 %v2122, %v2285
          %v2310 = vmin.f32 %v2123, %v2286
          %v2311 = vmin.f32 %v2124, %v2287
          %v2312 = vmin.f32 %v2125, %v2288
          %v2313 = vmin.f32 %v2126, %v2289
          %v2314 = vmin.f32 %v2127, %v2290
          %v2315 = vld [vmem:[#allocation4] sm:$0x1]
          %v2316 = vld [vmem:[#allocation4 + $0x1] sm:$0x1]
          %v2317 = vld [vmem:[#allocation4 + $0x2] sm:$0x1]
          %v2318 = vld [vmem:[#allocation4 + $0x3] sm:$0x1]
          %vm2319 = vcmp.ge.f32.partialorder %v2315, 0.0
          %v2320 = vsel %vm2319, 1, 0
          %v2321 = vlaneseq
          %v2322 = vshrl.u32 %v2321, 7
          %v2323 = vsub.s32 0, %v2322
          %v2324 = vrot.slane %v2320, %v2323
          %vm2325 = vcmp.eq.s32.totalorder %v2324, 1
          %v2326 = vsel %vm2325, %v2291, %v2297
          %v2327 = vsel %vm2325, %v2292, %v2298
          %v2328 = vsel %vm2325, %v2293, %v2299
          %v2329 = vsel %vm2325, %v2294, %v2300
          %v2330 = vsel %vm2325, %v2295, %v2301
          %v2331 = vsel %vm2325, %v2296, %v2302
          %v2332 = vlaneseq
          %v2333 = vshrl.u32 %v2332, 7
          %v2334 = vsub.s32 0, %v2333
          %v2335 = vrot.slane %v2315, %v2334
          %v2336 = vmul.f32 %v2326, %v2335
          %v2337 = vmul.f32 %v2327, %v2335
          %v2338 = vmul.f32 %v2328, %v2335
          %v2339 = vmul.f32 %v2329, %v2335
          %v2340 = vmul.f32 %v2330, %v2335
          %v2341 = vmul.f32 %v2331, %v2335
          %v2342 = vlaneseq
          %v2343 = vshrl.u32 %v2342, 7
          %v2344 = vsub.s32 0, %v2343
          %v2345 = vrot.slane %v2316, %v2344
          %v2346 = vadd.f32 %v2336, %v2345
          %v2347 = vadd.f32 %v2337, %v2345
          %v2348 = vadd.f32 %v2338, %v2345
          %v2349 = vadd.f32 %v2339, %v2345
          %v2350 = vadd.f32 %v2340, %v2345
          %v2351 = vadd.f32 %v2341, %v2345
          %vm2352 = vcmp.ge.f32.partialorder %v2317, 0.0
          %v2353 = vsel %vm2352, 1, 0
          %v2354 = vlaneseq
          %v2355 = vshrl.u32 %v2354, 7
          %v2356 = vsub.s32 0, %v2355
          %v2357 = vrot.slane %v2353, %v2356
          %vm2358 = vcmp.eq.s32.totalorder %v2357, 1
          %v2359 = vsel %vm2358, %v2303, %v2309
          %v2360 = vsel %vm2358, %v2304, %v2310
          %v2361 = vsel %vm2358, %v2305, %v2311
          %v2362 = vsel %vm2358, %v2306, %v2312
          %v2363 = vsel %vm2358, %v2307, %v2313
          %v2364 = vsel %vm2358, %v2308, %v2314
          %v2365 = vlaneseq
          %v2366 = vshrl.u32 %v2365, 7
          %v2367 = vsub.s32 0, %v2366
          %v2368 = vrot.slane %v2317, %v2367
          %v2369 = vmul.f32 %v2359, %v2368
          %v2370 = vmul.f32 %v2360, %v2368
          %v2371 = vmul.f32 %v2361, %v2368
          %v2372 = vmul.f32 %v2362, %v2368
          %v2373 = vmul.f32 %v2363, %v2368
          %v2374 = vmul.f32 %v2364, %v2368
          %v2375 = vlaneseq
          %v2376 = vshrl.u32 %v2375, 7
          %v2377 = vsub.s32 0, %v2376
          %v2378 = vrot.slane %v2318, %v2377
          %v2379 = vadd.f32 %v2369, %v2378
          %v2380 = vadd.f32 %v2370, %v2378
          %v2381 = vadd.f32 %v2371, %v2378
          %v2382 = vadd.f32 %v2372, %v2378
          %v2383 = vadd.f32 %v2373, %v2378
          %v2384 = vadd.f32 %v2374, %v2378
          %v2385 = vpack.c.bf16 %v2347, %v2346
          %v2386 = vpack.c.bf16 %v2380, %v2379
          %v2387 = vpack.c.bf16 %v2349, %v2348
          %v2388 = vpack.c.bf16 %v2382, %v2381
          %v2389 = vpack.c.bf16 %v2351, %v2350
          %v2390 = vpack.c.bf16 %v2384, %v2383
          %v2391 = vld [vmem:[%s7] sm:$0xf]
          %v2392 = vld [vmem:[%s7 + $0x4] sm:$0xf]
          %v2393 = vld [vmem:[%s7 + $0x8] sm:$0xf]
          %v2394 = vld [vmem:[%s7 + $0xc] sm:$0xf]
          %v2395 = vld [vmem:[%s7 + $0x10] sm:$0xf]
          %v2396 = vld [vmem:[%s7 + $0x14] sm:$0xf]
          %v2397 = vld [vmem:[%s7 + $0x18] sm:$0xf]
          %v2398 = vld [vmem:[%s7 + $0x1c] sm:$0xf]
          %v2399 = vld [vmem:[%s7 + $0x20] sm:$0xf]
          %v2400 = vld [vmem:[%s7 + $0x24] sm:$0xf]
          %v2401 = vld [vmem:[%s7 + $0x28] sm:$0xf]
          %v2402 = vld [vmem:[%s7 + $0x2c] sm:$0xf]
          %v2403 = vld [vmem:[%s7 + $0x30] sm:$0xf]
          %v2404 = vld [vmem:[%s7 + $0x34] sm:$0xf]
          %v2405 = vld [vmem:[%s7 + $0x38] sm:$0xf]
          %v2406 = vld [vmem:[%s7 + $0x3c] sm:$0xf]
          %v2407 = vld [vmem:[%s7 + $0x40] sm:$0xf]
          %v2408 = vld [vmem:[%s7 + $0x44] sm:$0xf]
          %v2409 = vld [vmem:[%s7 + $0x48] sm:$0xf]
          %v2410 = vld [vmem:[%s7 + $0x4c] sm:$0xf]
          %v2411 = vld [vmem:[%s7 + $0x50] sm:$0xf]
          %v2412 = vld [vmem:[%s7 + $0x54] sm:$0xf]
          %v2413 = vld [vmem:[%s7 + $0x58] sm:$0xf]
          %v2414 = vld [vmem:[%s7 + $0x5c] sm:$0xf]
          %v2415 = vld [vmem:[%s7 + $0x60] sm:$0xf]
          %v2416 = vld [vmem:[%s7 + $0x64] sm:$0xf]
          %v2417 = vld [vmem:[%s7 + $0x68] sm:$0xf]
          %v2418 = vld [vmem:[%s7 + $0x6c] sm:$0xf]
          %v2419 = vld [vmem:[%s7 + $0x70] sm:$0xf]
          %v2420 = vld [vmem:[%s7 + $0x74] sm:$0xf]
          %v2421 = vld [vmem:[%s7 + $0x78] sm:$0xf]
          %v2422 = vld [vmem:[%s7 + $0x7c] sm:$0xf]
          %v2455 = vunpack.c.l.b16 %v2391
          %v2456 = vunpack.c.l.b16 %v2392
          %v2457 = vunpack.c.l.b16 %v2393
          %v2458 = vunpack.c.l.b16 %v2394
          %v2459 = vunpack.c.l.b16 %v2395
          %v2460 = vunpack.c.l.b16 %v2396
          %v2461 = vunpack.c.l.b16 %v2397
          %v2462 = vunpack.c.l.b16 %v2398
          %v2463 = vunpack.c.l.b16 %v2399
          %v2464 = vunpack.c.l.b16 %v2400
          %v2465 = vunpack.c.l.b16 %v2401
          %v2466 = vunpack.c.l.b16 %v2402
          %v2467 = vunpack.c.l.b16 %v2403
          %v2468 = vunpack.c.l.b16 %v2404
          %v2469 = vunpack.c.l.b16 %v2405
          %v2470 = vunpack.c.l.b16 %v2406
          %v2471 = vunpack.c.l.b16 %v2407
          %v2472 = vunpack.c.l.b16 %v2408
          %v2473 = vunpack.c.l.b16 %v2409
          %v2474 = vunpack.c.l.b16 %v2410
          %v2475 = vunpack.c.l.b16 %v2411
          %v2476 = vunpack.c.l.b16 %v2412
          %v2477 = vunpack.c.l.b16 %v2413
          %v2478 = vunpack.c.l.b16 %v2414
          %v2479 = vunpack.c.l.b16 %v2415
          %v2480 = vunpack.c.l.b16 %v2416
          %v2481 = vunpack.c.l.b16 %v2417
          %v2482 = vunpack.c.l.b16 %v2418
          %v2483 = vunpack.c.l.b16 %v2419
          %v2484 = vunpack.c.l.b16 %v2420
          %v2485 = vunpack.c.l.b16 %v2421
          %v2486 = vunpack.c.l.b16 %v2422
          %v2487 = vpack.c.b16 %v2456, %v2455
          %v2488 = vpack.c.b16 %v2458, %v2457
          %v2489 = vpack.c.b16 %v2460, %v2459
          %v2490 = vpack.c.b16 %v2462, %v2461
          %v2491 = vpack.c.b16 %v2464, %v2463
          %v2492 = vpack.c.b16 %v2466, %v2465
          %v2493 = vpack.c.b16 %v2468, %v2467
          %v2494 = vpack.c.b16 %v2470, %v2469
          %v2495 = vpack.c.b16 %v2472, %v2471
          %v2496 = vpack.c.b16 %v2474, %v2473
          %v2497 = vpack.c.b16 %v2476, %v2475
          %v2498 = vpack.c.b16 %v2478, %v2477
          %v2499 = vpack.c.b16 %v2480, %v2479
          %v2500 = vpack.c.b16 %v2482, %v2481
          %v2501 = vpack.c.b16 %v2484, %v2483
          %v2502 = vpack.c.b16 %v2486, %v2485
          %2519 = vmatprep.subr.bf16.mxu0 0
          %2520 = vmatpush1.bf16.msra.mxu0 %v2494
          %2521 = vmatprep.subr.bf16.mxu0 0
          %2522 = vmatpush1.bf16.msra.mxu0 %v2493
          %2523 = vmatprep.subr.bf16.mxu0 0
          %2524 = vmatpush1.bf16.msra.mxu0 %v2492
          %2525 = vmatprep.subr.bf16.mxu0 0
          %2526 = vmatpush1.bf16.msra.mxu0 %v2491
          %2527 = vmatprep.subr.bf16.mxu0 0
          %2528 = vmatpush1.bf16.msra.mxu0 %v2490
          %2529 = vmatprep.subr.bf16.mxu0 0
          %2530 = vmatpush1.bf16.msra.mxu0 %v2489
          %2531 = vmatprep.subr.bf16.mxu0 0
          %2532 = vmatpush1.bf16.msra.mxu0 %v2488
          %2533 = vmatprep.subr.bf16.mxu0 0
          %2534 = vmatpush1.bf16.msra.mxu0 %v2487
          %2535 = vmatprep.subr.bf16.mxu0 0
          %2536 = vmatpush2.bf16.msra.mxu0 %v2502
          %2537 = vmatprep.subr.bf16.mxu0 0
          %2538 = vmatpush2.bf16.msra.mxu0 %v2501
          %2539 = vmatprep.subr.bf16.mxu0 0
          %2540 = vmatpush2.bf16.msra.mxu0 %v2500
          %2541 = vmatprep.subr.bf16.mxu0 0
          %2542 = vmatpush2.bf16.msra.mxu0 %v2499
          %2543 = vmatprep.subr.bf16.mxu0 0
          %2544 = vmatpush2.bf16.msra.mxu0 %v2498
          %2545 = vmatprep.subr.bf16.mxu0 0
          %2546 = vmatpush2.bf16.msra.mxu0 %v2497
          %2547 = vmatprep.subr.bf16.mxu0 0
          %2548 = vmatpush2.bf16.msra.mxu0 %v2496
          %2549 = vmatprep.subr.bf16.mxu0 0
          %2550 = vmatpush2.bf16.msra.mxu0 %v2495
          %2551 = vmatprep.mubr.bf16.mxu0 %v2386
          %2552 = vmatmul.mubr.bf16.gmra.mxu0 %v2385
          %v2553 = vpop.f32.mrf.mxu0
          %v2554 = vadd.f32 0.0, %v2553
          %v2555 = vpop.f32.mrf.mxu0
          %v2556 = vpop.f32.mrf.mxu0
          %v2557 = vadd.f32 0.0, %v2556
          %v2558 = vpop.f32.mrf.mxu0
          %2559 = vmatprep.mubr.bf16.mxu0 %v2388
          %2560 = vmatmul.mubr.bf16.gmra.mxu0 %v2387
          %v2561 = vpop.f32.mrf.mxu0
          %v2562 = vadd.f32 0.0, %v2561
          %v2563 = vpop.f32.mrf.mxu0
          %v2564 = vpop.f32.mrf.mxu0
          %v2565 = vadd.f32 0.0, %v2564
          %v2566 = vpop.f32.mrf.mxu0
          %2567 = vmatprep.mubr.bf16.mxu0 %v2390
          %2568 = vmatmul.mubr.bf16.gmra.mxu0 %v2389
          %v2569 = vpop.f32.mrf.mxu0
          %v2570 = vadd.f32 0.0, %v2569
          %v2571 = vpop.f32.mrf.mxu0
          %v2572 = vpop.f32.mrf.mxu0
          %v2573 = vadd.f32 0.0, %v2572
          %v2574 = vpop.f32.mrf.mxu0
          %2575 = vdwg.mxu0
          %2576 = vst [vmem:[%s504] sm:$0xff] %v2554
          %2577 = vst [vmem:[%s504 + $0x8] sm:$0xff] %v2557
          %2578 = vst [vmem:[%s504 + $0x10] sm:$0xff] %v2562
          %2579 = vst [vmem:[%s504 + $0x18] sm:$0xff] %v2565
          %2580 = vst [vmem:[%s504 + $0x20] sm:$0xff] %v2570
          %2581 = vst [vmem:[%s504 + $0x28] sm:$0xff] %v2573
          %v2582 = vmul.f32 %v2554, %v540
          %v2583 = vmul.f32 %v2557, %v541
          %v2584 = vmul.f32 %v2562, %v542
          %v2585 = vmul.f32 %v2565, %v543
          %v2586 = vmul.f32 %v2570, %v544
          %v2587 = vmul.f32 %v2573, %v545
          %v2588 = vld [vmem:[#allocation5] sm:$0x1]
          %v2589 = vadd.f32 %v2582, %v2583
          %v2590 = vadd.f32 %v2589, %v2584
          %v2591 = vadd.f32 %v2590, %v2585
          %v2592 = vadd.f32 %v2591, %v2586
          %v2593 = vadd.f32 %v2592, %v2587
          %v2594 = vrot.slane %v2593, 4
          %v2595 = vadd.f32 %v2593, %v2594
          %v2596 = vrot.slane %v2595, 2
          %v2597 = vadd.f32 %v2595, %v2596
          %v2598 = vrot.slane %v2597, 1
          %v2599 = vadd.f32 %v2597, %v2598
          %v2600 = vadd.f32 %v2588, %v2599
          %2601 = vst [vmem:[#allocation5] sm:$0x1] %v2600
          %v2602 = vld [vmem:[#allocation5 + $0x1] sm:$0x1]
          %v2603 = vmul.f32 %v2554, %v2582
          %v2604 = vmul.f32 %v2557, %v2583
          %v2605 = vmul.f32 %v2562, %v2584
          %v2606 = vmul.f32 %v2565, %v2585
          %v2607 = vmul.f32 %v2570, %v2586
          %v2608 = vmul.f32 %v2573, %v2587
          %v2609 = vadd.f32 %v2603, %v2604
          %v2610 = vadd.f32 %v2609, %v2605
          %v2611 = vadd.f32 %v2610, %v2606
          %v2612 = vadd.f32 %v2611, %v2607
          %v2613 = vadd.f32 %v2612, %v2608
          %v2614 = vrot.slane %v2613, 4
          %v2615 = vadd.f32 %v2613, %v2614
          %v2616 = vrot.slane %v2615, 2
          %v2617 = vadd.f32 %v2615, %v2616
          %v2618 = vrot.slane %v2617, 1
          %v2619 = vadd.f32 %v2617, %v2618
          %v2620 = vadd.f32 %v2602, %v2619
          %2621 = vst [vmem:[#allocation5 + $0x1] sm:$0x1] %v2620
          %p2622 = scmp.eq.s32.totalorder %s30, 2
          // Predicated region
          $region119: #{spectral_encoder_forward.2} parent=113 // pred_check
            %p2623 = pneg %p2622
          $region120: #{spectral_encoder_forward.2} parent=113 // pred_check_branch
            %2625 = sbr.rel (%p2623) target = $region122
          $region121: #{spectral_encoder_forward.2} parent=113 // pred_region
            %v2626 = vld [vmem:[#allocation5] sm:$0x1]
            %v2627 = vmul.f32 %v2626, 0.0078125
            %v2628 = vld [vmem:[#allocation5 + $0x1] sm:$0x1]
            %v2629 = vmul.f32 %v2628, 0.0078125
            %v2630 = vmul.f32 %v2627, %v2627
            %v2631 = vsub.f32 %v2629, %v2630
            %v2632 = vmax.f32 %v2631, 0.0
            %v2633 = vld [vmem:[%s6] sm:$0x1]
            %v2634 = vadd.f32 %v2632, 1e-05
            %v2635 = vrsqrt.pop %v2634
            %v2636 = vmul.f32 %v2633, %v2635
            %2637 = vst [vmem:[%s9] sm:$0x1] %v2636
            %v2638 = vld [vmem:[%s6 + $0x1] sm:$0x1]
            %v2639 = vmul.f32 %v2627, %v2636
            %v2640 = vsub.f32 %v2638, %v2639
            %2641 = vst [vmem:[%s9 + $0x1] sm:$0x1] %v2640
          $region122: #{spectral_encoder_forward.2} parent=113 // pred_fallthru
            _
        $region114: #{spectral_encoder_forward.2} parent=85 // pred_fallthru
          _
        %s2642 = smul.u32 %s29, %s30
        %s2643 = smul.u32 6, %s2642
        %p2644 = scmp.lt.s32.totalorder %s2643, 17
        %s2645 = scalar_select %p2644, %s2643, 17
        %s2646 = smul.addr %s2645, 8
        %s2647 = scalar_lea.vmem %s8, %s2646
        // Predicated region
        $region123: #{spectral_encoder_forward.2} parent=85 // pred_check
          %p2648 = pneg %p230
        $region124: #{spectral_encoder_forward.2} parent=85 // pred_check_branch
          %2650 = sbr.rel (%p2648) target = $region126
        $region125: #{spectral_encoder_forward.2} parent=85 // pred_region
          %s2651 = smul.u32 %s29, %s30
          %s2652 = smul.u32 6, %s2651
        $region126: #{spectral_encoder_forward.2} parent=85 // pred_fallthru
          _
        // Predicated region
        $region127: #{spectral_encoder_forward.2} parent=85 // pred_check
          %p2653 = pneg %p251
        $region128: #{spectral_encoder_forward.2} parent=85 // pred_check_branch
          %2655 = sbr.rel (%p2653) target = $region130
        $region129: #{spectral_encoder_forward.2} parent=85 // pred_region
          _
        $region130: #{spectral_encoder_forward.2} parent=85 // pred_fallthru
          _
        // Predicated region
        $region131: #{spectral_encoder_forward.2} parent=85 // pred_check
          %p2656 = pneg %p251
        $region132: #{spectral_encoder_forward.2} parent=85 // pred_check_branch
          %2658 = sbr.rel (%p2656) target = $region134
        $region133: #{spectral_encoder_forward.2} parent=85 // pred_region
          _
        $region134: #{spectral_encoder_forward.2} parent=85 // pred_fallthru
          _
      $region86: #{spectral_encoder_forward.2} parent=5 // pred_fallthru
        _
      %p2659 = scmp.le.s32.totalorder 2, %s20
      // Predicated region
      $region135: #{spectral_encoder_forward.2} parent=5 // pred_check
        %p2660 = pneg %p2659
      $region136: #{spectral_encoder_forward.2} parent=5 // pred_check_branch
        %2662 = sbr.rel (%p2660) target = $region138
      $region137: #{spectral_encoder_forward.2} parent=5 // pred_region
        %s2663 = ssub.s32 %s20, 2
        // Predicated region
        $region139: #{spectral_encoder_forward.2} parent=137 // pred_check
          %p2664 = pneg %p236
        $region140: #{spectral_encoder_forward.2} parent=137 // pred_check_branch
          %2666 = sbr.rel (%p2664) target = $region142
        $region141: #{spectral_encoder_forward.2} parent=137 // pred_region
          %s2667 = smul.u32 %s31, %s32
          %s2668 = smul.u32 6, %s2667
          %p2669 = scmp.lt.s32.totalorder %s2668, 17
          %s2670 = scalar_select %p2669, %s2668, 17
          %s2671 = smul.addr %s2670, 8
          %s2672 = scalar_lea.vmem %s8, %s2671
        $region142: #{spectral_encoder_forward.2} parent=137 // pred_fallthru
          _
      $region138: #{spectral_encoder_forward.2} parent=5 // pred_fallthru
        _
    $region6: #{spectral_encoder_forward.2} parent=1 // loop_footer
      %s24 = sadd.s32 1, %s20
    $region7: #{spectral_encoder_forward.2} parent=1 // loop_footer_branch
      %19 = sbr.rel target = $region3
    $region8: #{spectral_encoder_forward.2} parent=1 // loop_exit
      _
    %2673 = vsyncpa [#allocation9], 1
    %s2674 = scalar_lea.sflag [#allocation9], 1
    %2675 = vsyncpa %s2674, 1
    %2676 = vsyncpa [#allocation11], 1

</llo_original>
